<compile_context>
chip_gen: v6e
topology: v6e:2x2x1
jax: 0.10.0
libtpu: 0.0.40
codegen_flags: <defaults>
</compile_context>

<pallas_src>
import functools
import math

import jax
import jax.numpy as jnp
from jax import lax
from jax.experimental import pallas as pl
from jax.experimental.pallas import tpu as pltpu

_EPS = 1e-5
_BF16 = jnp.bfloat16


def _round_up(n, m):
    return ((n + m - 1) // m) * m


def _vmem_capacity_bytes():
    # Generation-aware VMEM budget: 128 MiB on v5e/v6e, 64 MiB per TC on v7x.
    try:
        return int(pltpu.get_tpu_info().vmem_capacity_bytes)
    except Exception:
        return 64 * 1024 * 1024  # conservative fallback (v7x per-core size)


def _choose_token_tile(n):
    # Small N: one tile (pallas_call / grid-step overhead dominates).
    # Medium N: ~4 grid steps (keeps both v7x TensorCores busy).
    # Large N: 512-token tiles (past the measured HBM-roofline knee).
    if n <= 512:
        return _round_up(max(n, 8), 8)
    if n < 2048:
        return _round_up((n + 3) // 4, 8)
    return 512


def _layernorm_f32(x, g, b):
    mu = jnp.mean(x, axis=-1, keepdims=True)
    xc = x - mu
    var = jnp.mean(xc * xc, axis=-1, keepdims=True)
    return xc * lax.rsqrt(var + _EPS) * g + b


# ----------------------------------------------------------------------------
# Fused kernels
# ----------------------------------------------------------------------------
def fused_feat_encoder(x, w1, b1, w2, b2, tile, cc):
    """relu(x @ w1 + b1) @ w2 + b2, tiled over tokens."""
    n, din = x.shape
    dh = w1.shape[1]
    dout = w2.shape[1]

    def kernel(x_ref, w1_ref, b1_ref, w2_ref, b2_ref, o_ref):
        h = jnp.dot(x_ref[...].astype(_BF16), w1_ref[...],
                    preferred_element_type=jnp.float32) + b1_ref[...]
        h = jnp.maximum(h, 0.0)
        y = jnp.dot(h.astype(_BF16), w2_ref[...],
                    preferred_element_type=jnp.float32) + b2_ref[...]
        o_ref[...] = y.astype(o_ref.dtype)

    return pl.pallas_call(
        kernel,
        grid=(n // tile,),
        in_specs=[
            pl.BlockSpec((tile, din), lambda i: (i, 0)),
            pl.BlockSpec((din, dh), lambda i: (0, 0)),
            pl.BlockSpec((1, dh), lambda i: (0, 0)),
            pl.BlockSpec((dh, dout), lambda i: (0, 0)),
            pl.BlockSpec((1, dout), lambda i: (0, 0)),
        ],
        out_specs=pl.BlockSpec((tile, dout), lambda i: (i, 0)),
        out_shape=jax.ShapeDtypeStruct((n, dout), jnp.float32),
        compiler_params=cc,
    )(x, w1, b1, w2, b2)


def fused_ln_kv(x, g, b, w_kv, tile, cc):
    """LayerNorm(x) @ [Wk|Wv] -> (k, v) in bf16, [N, H*D] lane-dense."""
    n, d = x.shape
    hd2 = w_kv.shape[1]
    hd = hd2 // 2

    def kernel(x_ref, g_ref, b_ref, w_ref, k_ref, v_ref):
        xn = _layernorm_f32(x_ref[...].astype(jnp.float32), g_ref[...], b_ref[...])
        kv = jnp.dot(xn.astype(_BF16), w_ref[...],
                     preferred_element_type=jnp.float32)
        k_ref[...] = kv[:, :hd].astype(k_ref.dtype)
        v_ref[...] = kv[:, hd:].astype(v_ref.dtype)

    sd = jax.ShapeDtypeStruct((n, hd), _BF16)
    return pl.pallas_call(
        kernel,
        grid=(n // tile,),
        in_specs=[
            pl.BlockSpec((tile, d), lambda i: (i, 0)),
            pl.BlockSpec((1, d), lambda i: (0, 0)),
            pl.BlockSpec((1, d), lambda i: (0, 0)),
            pl.BlockSpec((d, hd2), lambda i: (0, 0)),
        ],
        out_specs=[pl.BlockSpec((tile, hd), lambda i: (i, 0))] * 2,
        out_shape=[sd, sd],
        compiler_params=cc,
    )(x, g, b, w_kv)


def fused_attention_layer(x, k, v, *, n1_g, n1_b, wq, wo, n2_g, n2_b,
                          ffw1, ffb1, ffw2, ffb2, num_heads, tile_q,
                          kv_block, tile_kv, n_valid, compiler_params):
    """One full transformer layer (minus the K/V projection), fused:

        q   = LN1(x) @ Wq                      (computed in-kernel at j == 0)
        att = softmax(q k^T / sqrt(dh)) v      (online softmax over kv slices)
        y   = x + att @ Wo                     (residual 1)
        out = y + FFN(LN2(y))                  (residual 2, written at j == last)

    grid = (q tiles [parallel], kv blocks [arbitrary]).  When kv_block == N the
    K/V index_map is constant, so K and V are DMA'd into VMEM once and stay
    resident for every q tile; otherwise they stream block-by-block (fallback
    for very large N that does not fit the VMEM budget).
    """
    n, d = x.shape
    hd = k.shape[1]
    dh = hd // num_heads
    assert dh * num_heads == hd
    scale = 1.0 / math.sqrt(dh)
    n_inner = kv_block // tile_kv
    need_mask = n_valid < n  # padded key tokens must not be attended to

    def kernel(x_ref, n1g_ref, n1b_ref, wq_ref, k_ref, v_ref, wo_ref,
               n2g_ref, n2b_ref, w1_ref, b1_ref, w2_ref, b2_ref,
               o_ref, q_sc, m_sc, l_sc, acc_sc):
        j = pl.program_id(1)

        @pl.when(j == 0)
        def _():
            # Init online-softmax state and compute the (scaled) queries once
            # per q tile; they persist in VMEM scratch across all kv blocks.
            m_sc[...] = jnp.full(m_sc.shape, -jnp.inf, m_sc.dtype)
            l_sc[...] = jnp.zeros(l_sc.shape, l_sc.dtype)
            acc_sc[...] = jnp.zeros(acc_sc.shape, acc_sc.dtype)
            xn1 = _layernorm_f32(x_ref[...].astype(jnp.float32),
                                 n1g_ref[...], n1b_ref[...])
            q = jnp.dot(xn1.astype(_BF16), wq_ref[...],
                        preferred_element_type=jnp.float32)
            q_sc[...] = (q * scale).astype(q_sc.dtype)  # fold 1/sqrt(dh) into q

        def kv_step(start):
            k_blk = k_ref[pl.ds(start, tile_kv), :]   # [tkv, H*D] bf16
            v_blk = v_ref[pl.ds(start, tile_kv), :]
            if need_mask:
                kpos = (lax.broadcasted_iota(jnp.int32, (1, tile_kv), 1)
                        + j * kv_block + start)
                kmask = kpos < n_valid                 # [1, tkv]
            for h in range(num_heads):
                cols = slice(h * dh, (h + 1) * dh)
                s = lax.dot_general(q_sc[:, cols], k_blk[:, cols],
                                    (((1,), (1,)), ((), ())),
                                    preferred_element_type=jnp.float32)
                if need_mask:
                    s = jnp.where(kmask, s, -1e30)
                m_prev = m_sc[:, h:h + 1]
                m_new = jnp.maximum(m_prev, jnp.max(s, axis=-1, keepdims=True))
                alpha = jnp.exp(m_prev - m_new)
                p = jnp.exp(s - m_new)
                l_sc[:, h:h + 1] = alpha * l_sc[:, h:h + 1] + jnp.sum(
                    p, axis=-1, keepdims=True)
                acc_sc[:, cols] = alpha * acc_sc[:, cols] + jnp.dot(
                    p.astype(_BF16), v_blk[:, cols],
                    preferred_element_type=jnp.float32)
                m_sc[:, h:h + 1] = m_new

        if n_inner == 1:
            kv_step(0)                     # fully static slicing
        else:
            @pl.loop(0, n_inner)
            def _(t):
                kv_step(pl.multiple_of(t * tile_kv, tile_kv))

        @pl.when(j == pl.num_programs(1) - 1)
        def _():
            # Normalize (exact divide), one lane-dense [tq,H*D]@[H*D,d] output
            # projection, attention residual, then LN2 + FFN + residual -- all
            # before the single HBM store of the new residual stream.
            xv = x_ref[...].astype(jnp.float32)
            for h in range(num_heads):
                cols = slice(h * dh, (h + 1) * dh)
                acc_sc[:, cols] = acc_sc[:, cols] / l_sc[:, h:h + 1]
            att = acc_sc[...].astype(_BF16)
            y = xv + jnp.dot(att, wo_ref[...], preferred_element_type=jnp.float32)
            xn2 = _layernorm_f32(y, n2g_ref[...], n2b_ref[...])
            f = jnp.dot(xn2.astype(_BF16), w1_ref[...],
                        preferred_element_type=jnp.float32) + b1_ref[...]
            f = jnp.maximum(f, 0.0)
            f = jnp.dot(f.astype(_BF16), w2_ref[...],
                        preferred_element_type=jnp.float32) + b2_ref[...]
            o_ref[...] = (y + f).astype(o_ref.dtype)

    return pl.pallas_call(
        kernel,
        grid=(n // tile_q, n // kv_block),
        in_specs=[
            pl.BlockSpec((tile_q, d), lambda i, j: (i, 0)),     # residual stream x
            pl.BlockSpec((1, d), lambda i, j: (0, 0)),          # LN1 gamma
            pl.BlockSpec((1, d), lambda i, j: (0, 0)),          # LN1 beta
            pl.BlockSpec((d, hd), lambda i, j: (0, 0)),         # Wq
            pl.BlockSpec((kv_block, hd), lambda i, j: (j, 0)),  # K (resident if 1 block)
            pl.BlockSpec((kv_block, hd), lambda i, j: (j, 0)),  # V
            pl.BlockSpec((hd, d), lambda i, j: (0, 0)),         # Wo
            pl.BlockSpec((1, d), lambda i, j: (0, 0)),          # LN2 gamma
            pl.BlockSpec((1, d), lambda i, j: (0, 0)),          # LN2 beta
            pl.BlockSpec((d, d), lambda i, j: (0, 0)),          # FFN W1
            pl.BlockSpec((1, d), lambda i, j: (0, 0)),          # FFN b1
            pl.BlockSpec((d, d), lambda i, j: (0, 0)),          # FFN W2
            pl.BlockSpec((1, d), lambda i, j: (0, 0)),          # FFN b2
        ],
        out_specs=pl.BlockSpec((tile_q, d), lambda i, j: (i, 0)),
        out_shape=jax.ShapeDtypeStruct((n, d), jnp.float32),
        scratch_shapes=[
            pltpu.VMEM((tile_q, hd), _BF16),               # scaled q (persists over kv)
            pltpu.VMEM((tile_q, num_heads), jnp.float32),  # running max per head
            pltpu.VMEM((tile_q, num_heads), jnp.float32),  # running sum per head
            pltpu.VMEM((tile_q, hd), jnp.float32),         # lane-dense accumulator
        ],
        compiler_params=compiler_params,
    )(x, n1_g, n1_b, wq, k, v, wo, n2_g, n2_b, ffw1, ffb1, ffw2, ffb2)


def fused_output_head(xs, w_cat, mlp, tile, cc):
    """enc = cat(xs, -1) @ W done as one K=(L+1)*h matmul (xs packed lane-dense
    into VMEM scratch, no HBM concat); out = enc + MLP(enc) with the 5-layer
    (Linear + LayerNorm + tanh) MLP."""
    n, h = xs[0].shape
    dcat, dmid = w_cat.shape
    nx = len(xs)
    assert dcat == nx * h

    mlp_flat = []
    for i, lp in enumerate(mlp):
        mlp_flat += [lp["w"], lp["b"]]
        if i < 4:
            mlp_flat += [lp["g"], lp["bb"]]
    n_in = nx + 1 + len(mlp_flat)

    def kernel(*refs):
        x_refs = refs[:nx]
        w_ref = refs[nx]
        m_refs = refs[nx + 1:n_in]
        o_ref = refs[n_in]
        xin_sc = refs[n_in + 1]

        for t in range(nx):
            xin_sc[:, t * h:(t + 1) * h] = x_refs[t][...].astype(xin_sc.dtype)
        enc = jnp.dot(xin_sc[...], w_ref[...], preferred_element_type=jnp.float32)

        m = enc
        idx = 0
        for i in range(4):
            w, b, g, bb = m_refs[idx], m_refs[idx + 1], m_refs[idx + 2], m_refs[idx + 3]
            idx += 4
            m = jnp.dot(m.astype(_BF16), w[...],
                        preferred_element_type=jnp.float32) + b[...]
            m = jnp.tanh(_layernorm_f32(m, g[...], bb[...]))
        w, b = m_refs[idx], m_refs[idx + 1]
        m = jnp.dot(m.astype(_BF16), w[...],
                    preferred_element_type=jnp.float32) + b[...]
        o_ref[...] = (enc + m).astype(o_ref.dtype)

    in_specs = (
        [pl.BlockSpec((tile, h), lambda i: (i, 0)) for _ in range(nx)]
        + [pl.BlockSpec((dcat, dmid), lambda i: (0, 0))]
        + [pl.BlockSpec(tuple(op.shape), lambda i: (0, 0)) for op in mlp_flat]
    )
    return pl.pallas_call(
        kernel,
        grid=(n // tile,),
        in_specs=in_specs,
        out_specs=pl.BlockSpec((tile, dmid), lambda i: (i, 0)),
        out_shape=jax.ShapeDtypeStruct((n, dmid), jnp.float32),
        scratch_shapes=[pltpu.VMEM((tile, nx * h), _BF16)],
        compiler_params=cc,
    )(*xs, w_cat, *mlp_flat)


# ----------------------------------------------------------------------------
# Deterministic parameter construction (synthetic; shapes match the PyTorch init)
# ----------------------------------------------------------------------------
def init_params(key, *, in_dim, h_dim, num_heads, n_layers, mlp_hidden=256):
    keys = iter(jax.random.split(key, 512))

    def lin(din, dout, bias=True):
        s = 1.0 / math.sqrt(din)
        w = jax.random.uniform(next(keys), (din, dout), jnp.float32, -s, s)
        b = jax.random.uniform(next(keys), (dout,), jnp.float32, -s, s) if bias else None
        return w, b

    params = {}
    w1, b1 = lin(in_dim, h_dim)
    w2, b2 = lin(h_dim, h_dim)
    params["feat_encoder"] = dict(w1=w1, b1=b1, w2=w2, b2=b2)

    hd = h_dim * num_heads
    layers = []
    for _ in range(n_layers):
        wq, _ = lin(h_dim, hd, bias=False)     # w_q (bias=False)
        wk, _ = lin(h_dim, hd, bias=False)     # w_k (bias=False)
        wv, _ = lin(h_dim, hd, bias=False)     # w_v (bias=False)
        wo, _ = lin(hd, h_dim, bias=False)     # attention output projection
        ffw1, ffb1 = lin(h_dim, h_dim)
        ffw2, ffb2 = lin(h_dim, h_dim)
        layers.append(dict(
            n1_g=jnp.ones((h_dim,), jnp.float32), n1_b=jnp.zeros((h_dim,), jnp.float32),
            n2_g=jnp.ones((h_dim,), jnp.float32), n2_b=jnp.zeros((h_dim,), jnp.float32),
            wq=wq, w_kv=jnp.concatenate([wk, wv], axis=1), wo=wo,
            ffw1=ffw1, ffb1=ffb1, ffw2=ffw2, ffb2=ffb2))
    params["layers"] = layers

    # self.W (bias=False) over cat(all_x): a single [(L+1)*h, h//2] matrix.
    wW, _ = lin(h_dim * (n_layers + 1), h_dim // 2, bias=False)
    params["W"] = wW

    # torch_geometric MLP(in=h//2, out=h//2, hidden=256, num_layers=5,
    #                     norm='layer_norm', act='tanh'); plain last layer.
    dims = [h_dim // 2] + [mlp_hidden] * 4 + [h_dim // 2]
    mlp = []
    for i in range(5):
        w, b = lin(dims[i], dims[i + 1])
        layer = dict(w=w, b=b)
        if i < 4:
            layer["g"] = jnp.ones((dims[i + 1],), jnp.float32)
            layer["bb"] = jnp.zeros((dims[i + 1],), jnp.float32)
        mlp.append(layer)
    params["mlp_out"] = mlp
    return params


# ----------------------------------------------------------------------------
# Forward pass
# ----------------------------------------------------------------------------
def transformer_forward(params, x, coords, num_heads):
    # prepare_input: single-graph batch -> dense [1, N, F] with all-True mask;
    # the trailing `out[mask]` is therefore the identity on [N, .].
    del coords  # pe_func is None; coords only feed the external attention variants.

    n_raw = x.shape[0]
    tile = _choose_token_tile(n_raw)
    n_pad = _round_up(n_raw, tile)
    if n_pad != n_raw:
        x = jnp.pad(x, ((0, n_pad - n_raw), (0, 0)))

    vmem_cap = _vmem_capacity_bytes()
    vmem_limit = min(int(vmem_cap * 0.8), 127 * 1024 * 1024)
    cc1 = pltpu.CompilerParams(dimension_semantics=("parallel",),
                               vmem_limit_bytes=vmem_limit)
    cc2 = pltpu.CompilerParams(dimension_semantics=("parallel", "arbitrary"),
                               vmem_limit_bytes=vmem_limit)

    fe = params["feat_encoder"]
    h = fused_feat_encoder(
        x, fe["w1"].astype(_BF16), fe["b1"].reshape(1, -1),
        fe["w2"].astype(_BF16), fe["b2"].reshape(1, -1), tile, cc1)

    all_x = [h]
    for lp in params["layers"]:
        hd = lp["w_kv"].shape[1] // 2
        # K/V residency: keep the whole padded K and V resident in VMEM when the
        # double-buffered bf16 footprint fits ~60% of this generation's VMEM
        # (v7x 64 MiB -> N up to ~39k; v5e/v6e 128 MiB -> N up to ~79k).
        kv_resident_bytes = 2 * 2 * n_pad * hd * 2
        kv_block = n_pad if kv_resident_bytes <= int(vmem_cap * 0.6) else tile
        tile_kv = 512 if kv_block % 512 == 0 else tile

        k, v = fused_ln_kv(
            h, lp["n1_g"].reshape(1, -1), lp["n1_b"].reshape(1, -1),
            lp["w_kv"].astype(_BF16), tile, cc1)
        h = fused_attention_layer(
            h, k, v,
            n1_g=lp["n1_g"].reshape(1, -1), n1_b=lp["n1_b"].reshape(1, -1),
            wq=lp["wq"].astype(_BF16), wo=lp["wo"].astype(_BF16),
            n2_g=lp["n2_g"].reshape(1, -1), n2_b=lp["n2_b"].reshape(1, -1),
            ffw1=lp["ffw1"].astype(_BF16), ffb1=lp["ffb1"].reshape(1, -1),
            ffw2=lp["ffw2"].astype(_BF16), ffb2=lp["ffb2"].reshape(1, -1),
            num_heads=num_heads, tile_q=tile, kv_block=kv_block, tile_kv=tile_kv,
            n_valid=n_raw, compiler_params=cc2)
        all_x.append(h)

    mlp = []
    for i, lp in enumerate(params["mlp_out"]):
        entry = dict(w=lp["w"].astype(_BF16), b=lp["b"].reshape(1, -1))
        if i < 4:
            entry["g"] = lp["g"].reshape(1, -1)
            entry["bb"] = lp["bb"].reshape(1, -1)
        mlp.append(entry)

    out = fused_output_head(all_x, params["W"].astype(_BF16), mlp, tile, cc1)
    if n_pad != n_raw:
        out = out[:n_raw]
    return out


if __name__ == "__main__":
    N, IN_DIM, COORDS_DIM = 16, 8, 3
    H_DIM, NUM_HEADS, N_LAYERS = 32, 4, 2

    key = jax.random.PRNGKey(0)
    kx, kc, kp = jax.random.split(key, 3)
    x = jax.random.normal(kx, (N, IN_DIM), jnp.float32)
    coords = jax.random.normal(kc, (N, COORDS_DIM), jnp.float32)

    params = init_params(
        kp, in_dim=IN_DIM, h_dim=H_DIM, num_heads=NUM_HEADS, n_layers=N_LAYERS)

    fwd = jax.jit(functools.partial(transformer_forward, num_heads=NUM_HEADS))
    out = jax.block_until_ready(fwd(params, x, coords))
    assert out.shape == (N, H_DIM // 2), out.shape
    assert bool(jnp.all(jnp.isfinite(out)))
    print("KERNEL_OK")
</pallas_src>

<mosaic_0001>
module attributes {stable_mosaic.version = 11 : i64} {
  func.func @kernel(%arg0: i32, %arg1: memref<16x8xf32, #tpu.memory_space<vmem>>, %arg2: memref<8x32xbf16, #tpu.memory_space<vmem>>, %arg3: memref<1x32xf32, #tpu.memory_space<vmem>>, %arg4: memref<32x32xbf16, #tpu.memory_space<vmem>>, %arg5: memref<1x32xf32, #tpu.memory_space<vmem>>, %arg6: memref<16x32xf32, #tpu.memory_space<vmem>>) attributes {dimension_semantics = [#tpu.dimension_semantics<parallel>], iteration_bounds = array<i64: 1>, scalar_prefetch = 0 : i64, scratch_operands = 0 : i64, tpu.core_type = #tpu.core_type<tc>, window_params = [{transform_indices = @transform_0, window_bounds = array<i64: 16, 8>}, {pipeline_mode = #tpu.pipeline_mode<synchronous>, transform_indices = @transform_1, window_bounds = array<i64: 8, 32>}, {pipeline_mode = #tpu.pipeline_mode<synchronous>, transform_indices = @transform_2, window_bounds = array<i64: 1, 32>}, {pipeline_mode = #tpu.pipeline_mode<synchronous>, transform_indices = @transform_3, window_bounds = array<i64: 32, 32>}, {pipeline_mode = #tpu.pipeline_mode<synchronous>, transform_indices = @transform_4, window_bounds = array<i64: 1, 32>}, {transform_indices = @transform_5, window_bounds = array<i64: 16, 32>}]} {
    %c0 = arith.constant 0 : index
    %c0_0 = arith.constant 0 : index
    %0 = vector.load %arg1[%c0, %c0_0] : memref<16x8xf32, #tpu.memory_space<vmem>>, vector<16x8xf32>
    %1 = arith.truncf %0 : vector<16x8xf32> to vector<16x8xbf16>
    %c0_1 = arith.constant 0 : index
    %c0_2 = arith.constant 0 : index
    %2 = vector.load %arg2[%c0_1, %c0_2] : memref<8x32xbf16, #tpu.memory_space<vmem>>, vector<8x32xbf16>
    %cst = arith.constant dense<0.000000e+00> : vector<16x32xf32>
    %3 = tpu.matmul %1, %2, %cst {dimension_numbers = #tpu.dot_dimension_numbers<[1], [0], [0], [1], [0, 0, 1, 1], [], []>} : vector<16x8xbf16>, vector<8x32xbf16>, vector<16x32xf32> -> vector<16x32xf32>
    %c0_3 = arith.constant 0 : index
    %c0_4 = arith.constant 0 : index
    %4 = vector.load %arg3[%c0_3, %c0_4] : memref<1x32xf32, #tpu.memory_space<vmem>>, vector<1x32xf32>
    %5 = vector.broadcast %4 : vector<1x32xf32> to vector<16x32xf32>
    %6 = arith.addf %3, %5 : vector<16x32xf32>
    %cst_5 = arith.constant 0.000000e+00 : f32
    %7 = vector.broadcast %cst_5 : f32 to vector<16x32xf32>
    %8 = arith.maximumf %6, %7 : vector<16x32xf32>
    %9 = arith.truncf %8 : vector<16x32xf32> to vector<16x32xbf16>
    %c0_6 = arith.constant 0 : index
    %c0_7 = arith.constant 0 : index
    %10 = vector.load %arg4[%c0_6, %c0_7] : memref<32x32xbf16, #tpu.memory_space<vmem>>, vector<32x32xbf16>
    %cst_8 = arith.constant dense<0.000000e+00> : vector<16x32xf32>
    %11 = tpu.matmul %9, %10, %cst_8 {dimension_numbers = #tpu.dot_dimension_numbers<[1], [0], [0], [1], [0, 0, 1, 1], [], []>} : vector<16x32xbf16>, vector<32x32xbf16>, vector<16x32xf32> -> vector<16x32xf32>
    %c0_9 = arith.constant 0 : index
    %c0_10 = arith.constant 0 : index
    %12 = vector.load %arg5[%c0_9, %c0_10] : memref<1x32xf32, #tpu.memory_space<vmem>>, vector<1x32xf32>
    %13 = vector.broadcast %12 : vector<1x32xf32> to vector<16x32xf32>
    %14 = arith.addf %11, %13 : vector<16x32xf32>
    %c0_11 = arith.constant 0 : index
    %c0_12 = arith.constant 0 : index
    %15 = vector.load %arg6[%c0_11, %c0_12] : memref<16x32xf32, #tpu.memory_space<vmem>>, vector<16x32xf32>
    tpu.vector_store %arg6[%c0_11, %c0_12], %14 {strides = array<i32>} : memref<16x32xf32, #tpu.memory_space<vmem>>, vector<16x32xf32>,
    return
  }
  func.func @transform_0(%arg0: i32) -> (i32, i32) {
    %c0_i32 = arith.constant 0 : i32
    %c0_i32_0 = arith.constant 0 : i32
    return %arg0, %c0_i32 : i32, i32
  }
  func.func @transform_1(%arg0: i32) -> (i32, i32) {
    %c0_i32 = arith.constant 0 : i32
    %c0_i32_0 = arith.constant 0 : i32
    %c0_i32_1 = arith.constant 0 : i32
    return %c0_i32, %c0_i32_0 : i32, i32
  }
  func.func @transform_2(%arg0: i32) -> (i32, i32) {
    %c0_i32 = arith.constant 0 : i32
    %c0_i32_0 = arith.constant 0 : i32
    %c0_i32_1 = arith.constant 0 : i32
    return %c0_i32, %c0_i32_0 : i32, i32
  }
  func.func @transform_3(%arg0: i32) -> (i32, i32) {
    %c0_i32 = arith.constant 0 : i32
    %c0_i32_0 = arith.constant 0 : i32
    %c0_i32_1 = arith.constant 0 : i32
    return %c0_i32, %c0_i32_0 : i32, i32
  }
  func.func @transform_4(%arg0: i32) -> (i32, i32) {
    %c0_i32 = arith.constant 0 : i32
    %c0_i32_0 = arith.constant 0 : i32
    %c0_i32_1 = arith.constant 0 : i32
    return %c0_i32, %c0_i32_0 : i32, i32
  }
  func.func @transform_5(%arg0: i32) -> (i32, i32) {
    %c0_i32 = arith.constant 0 : i32
    %c0_i32_0 = arith.constant 0 : i32
    return %arg0, %c0_i32 : i32, i32
  }
}

module attributes {stable_mosaic.version = 11 : i64} {
  func.func @kernel(%arg0: i32, %arg1: memref<16x32xf32, #tpu.memory_space<vmem>>, %arg2: memref<1x32xf32, #tpu.memory_space<vmem>>, %arg3: memref<1x32xf32, #tpu.memory_space<vmem>>, %arg4: memref<32x256xbf16, #tpu.memory_space<vmem>>, %arg5: memref<16x128xbf16, #tpu.memory_space<vmem>>, %arg6: memref<16x128xbf16, #tpu.memory_space<vmem>>) attributes {dimension_semantics = [#tpu.dimension_semantics<parallel>], iteration_bounds = array<i64: 1>, scalar_prefetch = 0 : i64, scratch_operands = 0 : i64, tpu.core_type = #tpu.core_type<tc>, window_params = [{transform_indices = @transform_0, window_bounds = array<i64: 16, 32>}, {pipeline_mode = #tpu.pipeline_mode<synchronous>, transform_indices = @transform_1, window_bounds = array<i64: 1, 32>}, {pipeline_mode = #tpu.pipeline_mode<synchronous>, transform_indices = @transform_2, window_bounds = array<i64: 1, 32>}, {pipeline_mode = #tpu.pipeline_mode<synchronous>, transform_indices = @transform_3, window_bounds = array<i64: 32, 256>}, {transform_indices = @transform_4, window_bounds = array<i64: 16, 128>}, {transform_indices = @transform_5, window_bounds = array<i64: 16, 128>}]} {
    %c0 = arith.constant 0 : index
    %c0_0 = arith.constant 0 : index
    %0 = vector.load %arg1[%c0, %c0_0] : memref<16x32xf32, #tpu.memory_space<vmem>>, vector<16x32xf32>
    %c0_1 = arith.constant 0 : index
    %c0_2 = arith.constant 0 : index
    %1 = vector.load %arg2[%c0_1, %c0_2] : memref<1x32xf32, #tpu.memory_space<vmem>>, vector<1x32xf32>
    %c0_3 = arith.constant 0 : index
    %c0_4 = arith.constant 0 : index
    %2 = vector.load %arg3[%c0_3, %c0_4] : memref<1x32xf32, #tpu.memory_space<vmem>>, vector<1x32xf32>
    %cst = arith.constant dense<0.000000e+00> : vector<16xf32>
    %3 = vector.multi_reduction <add>, %0, %cst [1] : vector<16x32xf32> to vector<16xf32>
    %4 = vector.shape_cast %3 : vector<16xf32> to vector<16x1xf32>
    %cst_5 = arith.constant 3.200000e+01 : f32
    %5 = vector.broadcast %cst_5 : f32 to vector<16x1xf32>
    %6 = arith.divf %4, %5 : vector<16x1xf32>
    %7 = vector.broadcast %6 : vector<16x1xf32> to vector<16x32xf32>
    %8 = arith.subf %0, %7 : vector<16x32xf32>
    %9 = arith.mulf %8, %8 : vector<16x32xf32>
    %cst_6 = arith.constant dense<0.000000e+00> : vector<16xf32>
    %10 = vector.multi_reduction <add>, %9, %cst_6 [1] : vector<16x32xf32> to vector<16xf32>
    %11 = vector.shape_cast %10 : vector<16xf32> to vector<16x1xf32>
    %cst_7 = arith.constant 3.200000e+01 : f32
    %12 = vector.broadcast %cst_7 : f32 to vector<16x1xf32>
    %13 = arith.divf %11, %12 : vector<16x1xf32>
    %cst_8 = arith.constant 9.99999974E-6 : f32
    %14 = vector.broadcast %cst_8 : f32 to vector<16x1xf32>
    %15 = arith.addf %13, %14 : vector<16x1xf32>
    %16 = math.rsqrt %15 : vector<16x1xf32>
    %17 = vector.broadcast %16 : vector<16x1xf32> to vector<16x32xf32>
    %18 = arith.mulf %8, %17 : vector<16x32xf32>
    %19 = vector.broadcast %1 : vector<1x32xf32> to vector<16x32xf32>
    %20 = arith.mulf %18, %19 : vector<16x32xf32>
    %21 = vector.broadcast %2 : vector<1x32xf32> to vector<16x32xf32>
    %22 = arith.addf %20, %21 : vector<16x32xf32>
    %23 = arith.truncf %22 : vector<16x32xf32> to vector<16x32xbf16>
    %c0_9 = arith.constant 0 : index
    %c0_10 = arith.constant 0 : index
    %24 = vector.load %arg4[%c0_9, %c0_10] : memref<32x256xbf16, #tpu.memory_space<vmem>>, vector<32x256xbf16>
    %cst_11 = arith.constant dense<0.000000e+00> : vector<16x256xf32>
    %25 = tpu.matmul %23, %24, %cst_11 {dimension_numbers = #tpu.dot_dimension_numbers<[1], [0], [0], [1], [0, 0, 1, 1], [], []>} : vector<16x32xbf16>, vector<32x256xbf16>, vector<16x256xf32> -> vector<16x256xf32>
    %26 = vector.extract_strided_slice %25 {offsets = [0, 0], sizes = [16, 128], strides = [1, 1]} : vector<16x256xf32> to vector<16x128xf32>
    %27 = arith.truncf %26 : vector<16x128xf32> to vector<16x128xbf16>
    %c0_12 = arith.constant 0 : index
    %c0_13 = arith.constant 0 : index
    %28 = vector.load %arg5[%c0_12, %c0_13] : memref<16x128xbf16, #tpu.memory_space<vmem>>, vector<16x128xbf16>
    tpu.vector_store %arg5[%c0_12, %c0_13], %27 {strides = array<i32>} : memref<16x128xbf16, #tpu.memory_space<vmem>>, vector<16x128xbf16>,
    %29 = vector.extract_strided_slice %25 {offsets = [0, 128], sizes = [16, 128], strides = [1, 1]} : vector<16x256xf32> to vector<16x128xf32>
    %30 = arith.truncf %29 : vector<16x128xf32> to vector<16x128xbf16>
    %c0_14 = arith.constant 0 : index
    %c0_15 = arith.constant 0 : index
    %31 = vector.load %arg6[%c0_14, %c0_15] : memref<16x128xbf16, #tpu.memory_space<vmem>>, vector<16x128xbf16>
    tpu.vector_store %arg6[%c0_14, %c0_15], %30 {strides = array<i32>} : memref<16x128xbf16, #tpu.memory_space<vmem>>, vector<16x128xbf16>,
    return
  }
  func.func @transform_0(%arg0: i32) -> (i32, i32) {
    %c0_i32 = arith.constant 0 : i32
    %c0_i32_0 = arith.constant 0 : i32
    return %arg0, %c0_i32 : i32, i32
  }
  func.func @transform_1(%arg0: i32) -> (i32, i32) {
    %c0_i32 = arith.constant 0 : i32
    %c0_i32_0 = arith.constant 0 : i32
    %c0_i32_1 = arith.constant 0 : i32
    return %c0_i32, %c0_i32_0 : i32, i32
  }
  func.func @transform_2(%arg0: i32) -> (i32, i32) {
    %c0_i32 = arith.constant 0 : i32
    %c0_i32_0 = arith.constant 0 : i32
    %c0_i32_1 = arith.constant 0 : i32
    return %c0_i32, %c0_i32_0 : i32, i32
  }
  func.func @transform_3(%arg0: i32) -> (i32, i32) {
    %c0_i32 = arith.constant 0 : i32
    %c0_i32_0 = arith.constant 0 : i32
    %c0_i32_1 = arith.constant 0 : i32
    return %c0_i32, %c0_i32_0 : i32, i32
  }
  func.func @transform_4(%arg0: i32) -> (i32, i32) {
    %c0_i32 = arith.constant 0 : i32
    %c0_i32_0 = arith.constant 0 : i32
    return %arg0, %c0_i32 : i32, i32
  }
  func.func @transform_5(%arg0: i32) -> (i32, i32) {
    %c0_i32 = arith.constant 0 : i32
    %c0_i32_0 = arith.constant 0 : i32
    return %arg0, %c0_i32 : i32, i32
  }
}

module attributes {stable_mosaic.version = 11 : i64} {
  func.func @kernel(%arg0: i32, %arg1: i32, %arg2: memref<16x32xf32, #tpu.memory_space<vmem>>, %arg3: memref<1x32xf32, #tpu.memory_space<vmem>>, %arg4: memref<1x32xf32, #tpu.memory_space<vmem>>, %arg5: memref<32x128xbf16, #tpu.memory_space<vmem>>, %arg6: memref<16x128xbf16, #tpu.memory_space<vmem>>, %arg7: memref<16x128xbf16, #tpu.memory_space<vmem>>, %arg8: memref<128x32xbf16, #tpu.memory_space<vmem>>, %arg9: memref<1x32xf32, #tpu.memory_space<vmem>>, %arg10: memref<1x32xf32, #tpu.memory_space<vmem>>, %arg11: memref<32x32xbf16, #tpu.memory_space<vmem>>, %arg12: memref<1x32xf32, #tpu.memory_space<vmem>>, %arg13: memref<32x32xbf16, #tpu.memory_space<vmem>>, %arg14: memref<1x32xf32, #tpu.memory_space<vmem>>, %arg15: memref<16x32xf32, #tpu.memory_space<vmem>>, %arg16: memref<16x128xbf16, #tpu.memory_space<vmem>>, %arg17: memref<16x4xf32, #tpu.memory_space<vmem>>, %arg18: memref<16x4xf32, #tpu.memory_space<vmem>>, %arg19: memref<16x128xf32, #tpu.memory_space<vmem>>) attributes {dimension_semantics = [#tpu.dimension_semantics<parallel>, #tpu.dimension_semantics<arbitrary>], iteration_bounds = array<i64: 1, 1>, scalar_prefetch = 0 : i64, scratch_operands = 4 : i64, tpu.core_type = #tpu.core_type<tc>, window_params = [{transform_indices = @transform_0, window_bounds = array<i64: 16, 32>}, {pipeline_mode = #tpu.pipeline_mode<synchronous>, transform_indices = @transform_1, window_bounds = array<i64: 1, 32>}, {pipeline_mode = #tpu.pipeline_mode<synchronous>, transform_indices = @transform_2, window_bounds = array<i64: 1, 32>}, {pipeline_mode = #tpu.pipeline_mode<synchronous>, transform_indices = @transform_3, window_bounds = array<i64: 32, 128>}, {transform_indices = @transform_4, window_bounds = array<i64: 16, 128>}, {transform_indices = @transform_5, window_bounds = array<i64: 16, 128>}, {pipeline_mode = #tpu.pipeline_mode<synchronous>, transform_indices = @transform_6, window_bounds = array<i64: 128, 32>}, {pipeline_mode = #tpu.pipeline_mode<synchronous>, transform_indices = @transform_7, window_bounds = array<i64: 1, 32>}, {pipeline_mode = #tpu.pipeline_mode<synchronous>, transform_indices = @transform_8, window_bounds = array<i64: 1, 32>}, {pipeline_mode = #tpu.pipeline_mode<synchronous>, transform_indices = @transform_9, window_bounds = array<i64: 32, 32>}, {pipeline_mode = #tpu.pipeline_mode<synchronous>, transform_indices = @transform_10, window_bounds = array<i64: 1, 32>}, {pipeline_mode = #tpu.pipeline_mode<synchronous>, transform_indices = @transform_11, window_bounds = array<i64: 32, 32>}, {pipeline_mode = #tpu.pipeline_mode<synchronous>, transform_indices = @transform_12, window_bounds = array<i64: 1, 32>}, {transform_indices = @transform_13, window_bounds = array<i64: 16, 32>}]} {
    %c0_i32 = arith.constant 0 : i32
    %0 = arith.cmpi eq, %arg1, %c0_i32 : i32
    %1 = arith.extui %0 : i1 to i32
    %c0_i32_0 = arith.constant 0 : i32
    %2 = arith.cmpi ne, %1, %c0_i32_0 : i32
    scf.if %2 {
      %cst_71 = arith.constant 0xFF800000 : f32
      %116 = vector.broadcast %cst_71 : f32 to vector<16x4xf32>
      %c0_72 = arith.constant 0 : index
      %c0_73 = arith.constant 0 : index
      %117 = vector.load %arg17[%c0_72, %c0_73] : memref<16x4xf32, #tpu.memory_space<vmem>>, vector<16x4xf32>
      tpu.vector_store %arg17[%c0_72, %c0_73], %116 {strides = array<i32>} : memref<16x4xf32, #tpu.memory_space<vmem>>, vector<16x4xf32>,
      %cst_74 = arith.constant 0.000000e+00 : f32
      %118 = vector.broadcast %cst_74 : f32 to vector<16x4xf32>
      %c0_75 = arith.constant 0 : index
      %c0_76 = arith.constant 0 : index
      %119 = vector.load %arg18[%c0_75, %c0_76] : memref<16x4xf32, #tpu.memory_space<vmem>>, vector<16x4xf32>
      tpu.vector_store %arg18[%c0_75, %c0_76], %118 {strides = array<i32>} : memref<16x4xf32, #tpu.memory_space<vmem>>, vector<16x4xf32>,
      %cst_77 = arith.constant 0.000000e+00 : f32
      %120 = vector.broadcast %cst_77 : f32 to vector<16x128xf32>
      %c0_78 = arith.constant 0 : index
      %c0_79 = arith.constant 0 : index
      %121 = vector.load %arg19[%c0_78, %c0_79] : memref<16x128xf32, #tpu.memory_space<vmem>>, vector<16x128xf32>
      tpu.vector_store %arg19[%c0_78, %c0_79], %120 {strides = array<i32>} : memref<16x128xf32, #tpu.memory_space<vmem>>, vector<16x128xf32>,
      %c0_80 = arith.constant 0 : index
      %c0_81 = arith.constant 0 : index
      %122 = vector.load %arg2[%c0_80, %c0_81] : memref<16x32xf32, #tpu.memory_space<vmem>>, vector<16x32xf32>
      %c0_82 = arith.constant 0 : index
      %c0_83 = arith.constant 0 : index
      %123 = vector.load %arg3[%c0_82, %c0_83] : memref<1x32xf32, #tpu.memory_space<vmem>>, vector<1x32xf32>
      %c0_84 = arith.constant 0 : index
      %c0_85 = arith.constant 0 : index
      %124 = vector.load %arg4[%c0_84, %c0_85] : memref<1x32xf32, #tpu.memory_space<vmem>>, vector<1x32xf32>
      %cst_86 = arith.constant dense<0.000000e+00> : vector<16xf32>
      %125 = vector.multi_reduction <add>, %122, %cst_86 [1] : vector<16x32xf32> to vector<16xf32>
      %126 = vector.shape_cast %125 : vector<16xf32> to vector<16x1xf32>
      %cst_87 = arith.constant 3.200000e+01 : f32
      %127 = vector.broadcast %cst_87 : f32 to vector<16x1xf32>
      %128 = arith.divf %126, %127 : vector<16x1xf32>
      %129 = vector.broadcast %128 : vector<16x1xf32> to vector<16x32xf32>
      %130 = arith.subf %122, %129 : vector<16x32xf32>
      %131 = arith.mulf %130, %130 : vector<16x32xf32>
      %cst_88 = arith.constant dense<0.000000e+00> : vector<16xf32>
      %132 = vector.multi_reduction <add>, %131, %cst_88 [1] : vector<16x32xf32> to vector<16xf32>
      %133 = vector.shape_cast %132 : vector<16xf32> to vector<16x1xf32>
      %cst_89 = arith.constant 3.200000e+01 : f32
      %134 = vector.broadcast %cst_89 : f32 to vector<16x1xf32>
      %135 = arith.divf %133, %134 : vector<16x1xf32>
      %cst_90 = arith.constant 9.99999974E-6 : f32
      %136 = vector.broadcast %cst_90 : f32 to vector<16x1xf32>
      %137 = arith.addf %135, %136 : vector<16x1xf32>
      %138 = math.rsqrt %137 : vector<16x1xf32>
      %139 = vector.broadcast %138 : vector<16x1xf32> to vector<16x32xf32>
      %140 = arith.mulf %130, %139 : vector<16x32xf32>
      %141 = vector.broadcast %123 : vector<1x32xf32> to vector<16x32xf32>
      %142 = arith.mulf %140, %141 : vector<16x32xf32>
      %143 = vector.broadcast %124 : vector<1x32xf32> to vector<16x32xf32>
      %144 = arith.addf %142, %143 : vector<16x32xf32>
      %145 = arith.truncf %144 : vector<16x32xf32> to vector<16x32xbf16>
      %c0_91 = arith.constant 0 : index
      %c0_92 = arith.constant 0 : index
      %146 = vector.load %arg5[%c0_91, %c0_92] : memref<32x128xbf16, #tpu.memory_space<vmem>>, vector<32x128xbf16>
      %cst_93 = arith.constant dense<0.000000e+00> : vector<16x128xf32>
      %147 = tpu.matmul %145, %146, %cst_93 {dimension_numbers = #tpu.dot_dimension_numbers<[1], [0], [0], [1], [0, 0, 1, 1], [], []>} : vector<16x32xbf16>, vector<32x128xbf16>, vector<16x128xf32> -> vector<16x128xf32>
      %cst_94 = arith.constant 0.176776692 : f32
      %148 = vector.broadcast %cst_94 : f32 to vector<16x128xf32>
      %149 = arith.mulf %147, %148 : vector<16x128xf32>
      %150 = arith.truncf %149 : vector<16x128xf32> to vector<16x128xbf16>
      %c0_95 = arith.constant 0 : index
      %c0_96 = arith.constant 0 : index
      %151 = vector.load %arg16[%c0_95, %c0_96] : memref<16x128xbf16, #tpu.memory_space<vmem>>, vector<16x128xbf16>
      tpu.vector_store %arg16[%c0_95, %c0_96], %150 {strides = array<i32>} : memref<16x128xbf16, #tpu.memory_space<vmem>>, vector<16x128xbf16>,
    } else {
    }
    %c0 = arith.constant 0 : index
    %c0_1 = arith.constant 0 : index
    %3 = vector.load %arg6[%c0, %c0_1] : memref<16x128xbf16, #tpu.memory_space<vmem>>, vector<16x128xbf16>
    %c0_2 = arith.constant 0 : index
    %c0_3 = arith.constant 0 : index
    %4 = vector.load %arg7[%c0_2, %c0_3] : memref<16x128xbf16, #tpu.memory_space<vmem>>, vector<16x128xbf16>
    %c0_4 = arith.constant 0 : index
    %c0_5 = arith.constant 0 : index
    %5 = vector.load %arg16[%c0_4, %c0_5] : memref<16x128xbf16, #tpu.memory_space<vmem>>, vector<16x32xbf16>
    %6 = vector.extract_strided_slice %3 {offsets = [0, 0], sizes = [16, 32], strides = [1, 1]} : vector<16x128xbf16> to vector<16x32xbf16>
    %cst = arith.constant dense<0.000000e+00> : vector<16x16xf32>
    %7 = tpu.matmul %5, %6, %cst {dimension_numbers = #tpu.dot_dimension_numbers<[1], [1], [0], [0], [0, 0, 1, 0], [], []>} : vector<16x32xbf16>, vector<16x32xbf16>, vector<16x16xf32> -> vector<16x16xf32>
    %c0_6 = arith.constant 0 : index
    %c0_7 = arith.constant 0 : index
    %8 = vector.load %arg17[%c0_6, %c0_7] : memref<16x4xf32, #tpu.memory_space<vmem>>, vector<16x1xf32>
    %cst_8 = arith.constant dense<0xFF800000> : vector<16xf32>
    %9 = vector.multi_reduction <maximumf>, %7, %cst_8 [1] : vector<16x16xf32> to vector<16xf32>
    %10 = vector.shape_cast %9 : vector<16xf32> to vector<16x1xf32>
    %11 = arith.maximumf %8, %10 : vector<16x1xf32>
    %12 = arith.subf %8, %11 : vector<16x1xf32>
    %13 = math.exp %12 : vector<16x1xf32>
    %14 = vector.broadcast %11 : vector<16x1xf32> to vector<16x16xf32>
    %15 = arith.subf %7, %14 : vector<16x16xf32>
    %16 = math.exp %15 : vector<16x16xf32>
    %c0_9 = arith.constant 0 : index
    %c0_10 = arith.constant 0 : index
    %17 = vector.load %arg18[%c0_9, %c0_10] : memref<16x4xf32, #tpu.memory_space<vmem>>, vector<16x1xf32>
    %18 = arith.mulf %13, %17 : vector<16x1xf32>
    %cst_11 = arith.constant dense<0.000000e+00> : vector<16xf32>
    %19 = vector.multi_reduction <add>, %16, %cst_11 [1] : vector<16x16xf32> to vector<16xf32>
    %20 = vector.shape_cast %19 : vector<16xf32> to vector<16x1xf32>
    %21 = arith.addf %18, %20 : vector<16x1xf32>
    %c0_12 = arith.constant 0 : index
    %c0_13 = arith.constant 0 : index
    %22 = vector.load %arg18[%c0_12, %c0_13] : memref<16x4xf32, #tpu.memory_space<vmem>>, vector<16x1xf32>
    tpu.vector_store %arg18[%c0_12, %c0_13], %21 {strides = array<i32>} : memref<16x4xf32, #tpu.memory_space<vmem>>, vector<16x1xf32>,
    %c0_14 = arith.constant 0 : index
    %c0_15 = arith.constant 0 : index
    %23 = vector.load %arg19[%c0_14, %c0_15] : memref<16x128xf32, #tpu.memory_space<vmem>>, vector<16x32xf32>
    %24 = vector.broadcast %13 : vector<16x1xf32> to vector<16x32xf32>
    %25 = arith.mulf %24, %23 : vector<16x32xf32>
    %26 = arith.truncf %16 : vector<16x16xf32> to vector<16x16xbf16>
    %27 = vector.extract_strided_slice %4 {offsets = [0, 0], sizes = [16, 32], strides = [1, 1]} : vector<16x128xbf16> to vector<16x32xbf16>
    %cst_16 = arith.constant dense<0.000000e+00> : vector<16x32xf32>
    %28 = tpu.matmul %26, %27, %cst_16 {dimension_numbers = #tpu.dot_dimension_numbers<[1], [0], [0], [1], [0, 0, 1, 1], [], []>} : vector<16x16xbf16>, vector<16x32xbf16>, vector<16x32xf32> -> vector<16x32xf32>
    %29 = arith.addf %25, %28 : vector<16x32xf32>
    %c0_17 = arith.constant 0 : index
    %c0_18 = arith.constant 0 : index
    %30 = vector.load %arg19[%c0_17, %c0_18] : memref<16x128xf32, #tpu.memory_space<vmem>>, vector<16x32xf32>
    tpu.vector_store %arg19[%c0_17, %c0_18], %29 {strides = array<i32>} : memref<16x128xf32, #tpu.memory_space<vmem>>, vector<16x32xf32>,
    %c0_19 = arith.constant 0 : index
    %c0_20 = arith.constant 0 : index
    %31 = vector.load %arg17[%c0_19, %c0_20] : memref<16x4xf32, #tpu.memory_space<vmem>>, vector<16x1xf32>
    tpu.vector_store %arg17[%c0_19, %c0_20], %11 {strides = array<i32>} : memref<16x4xf32, #tpu.memory_space<vmem>>, vector<16x1xf32>,
    %c0_21 = arith.constant 0 : index
    %c32 = arith.constant 32 : index
    %32 = vector.load %arg16[%c0_21, %c32] : memref<16x128xbf16, #tpu.memory_space<vmem>>, vector<16x32xbf16>
    %33 = vector.extract_strided_slice %3 {offsets = [0, 32], sizes = [16, 32], strides = [1, 1]} : vector<16x128xbf16> to vector<16x32xbf16>
    %cst_22 = arith.constant dense<0.000000e+00> : vector<16x16xf32>
    %34 = tpu.matmul %32, %33, %cst_22 {dimension_numbers = #tpu.dot_dimension_numbers<[1], [1], [0], [0], [0, 0, 1, 0], [], []>} : vector<16x32xbf16>, vector<16x32xbf16>, vector<16x16xf32> -> vector<16x16xf32>
    %c0_23 = arith.constant 0 : index
    %c1 = arith.constant 1 : index
    %35 = vector.load %arg17[%c0_23, %c1] : memref<16x4xf32, #tpu.memory_space<vmem>>, vector<16x1xf32>
    %cst_24 = arith.constant dense<0xFF800000> : vector<16xf32>
    %36 = vector.multi_reduction <maximumf>, %34, %cst_24 [1] : vector<16x16xf32> to vector<16xf32>
    %37 = vector.shape_cast %36 : vector<16xf32> to vector<16x1xf32>
    %38 = arith.maximumf %35, %37 : vector<16x1xf32>
    %39 = arith.subf %35, %38 : vector<16x1xf32>
    %40 = math.exp %39 : vector<16x1xf32>
    %41 = vector.broadcast %38 : vector<16x1xf32> to vector<16x16xf32>
    %42 = arith.subf %34, %41 : vector<16x16xf32>
    %43 = math.exp %42 : vector<16x16xf32>
    %c0_25 = arith.constant 0 : index
    %c1_26 = arith.constant 1 : index
    %44 = vector.load %arg18[%c0_25, %c1_26] : memref<16x4xf32, #tpu.memory_space<vmem>>, vector<16x1xf32>
    %45 = arith.mulf %40, %44 : vector<16x1xf32>
    %cst_27 = arith.constant dense<0.000000e+00> : vector<16xf32>
    %46 = vector.multi_reduction <add>, %43, %cst_27 [1] : vector<16x16xf32> to vector<16xf32>
    %47 = vector.shape_cast %46 : vector<16xf32> to vector<16x1xf32>
    %48 = arith.addf %45, %47 : vector<16x1xf32>
    %c0_28 = arith.constant 0 : index
    %c1_29 = arith.constant 1 : index
    %49 = vector.load %arg18[%c0_28, %c1_29] : memref<16x4xf32, #tpu.memory_space<vmem>>, vector<16x1xf32>
    tpu.vector_store %arg18[%c0_28, %c1_29], %48 {strides = array<i32>} : memref<16x4xf32, #tpu.memory_space<vmem>>, vector<16x1xf32>,
    %c0_30 = arith.constant 0 : index
    %c32_31 = arith.constant 32 : index
    %50 = vector.load %arg19[%c0_30, %c32_31] : memref<16x128xf32, #tpu.memory_space<vmem>>, vector<16x32xf32>
    %51 = vector.broadcast %40 : vector<16x1xf32> to vector<16x32xf32>
    %52 = arith.mulf %51, %50 : vector<16x32xf32>
    %53 = arith.truncf %43 : vector<16x16xf32> to vector<16x16xbf16>
    %54 = vector.extract_strided_slice %4 {offsets = [0, 32], sizes = [16, 32], strides = [1, 1]} : vector<16x128xbf16> to vector<16x32xbf16>
    %cst_32 = arith.constant dense<0.000000e+00> : vector<16x32xf32>
    %55 = tpu.matmul %53, %54, %cst_32 {dimension_numbers = #tpu.dot_dimension_numbers<[1], [0], [0], [1], [0, 0, 1, 1], [], []>} : vector<16x16xbf16>, vector<16x32xbf16>, vector<16x32xf32> -> vector<16x32xf32>
    %56 = arith.addf %52, %55 : vector<16x32xf32>
    %c0_33 = arith.constant 0 : index
    %c32_34 = arith.constant 32 : index
    %57 = vector.load %arg19[%c0_33, %c32_34] : memref<16x128xf32, #tpu.memory_space<vmem>>, vector<16x32xf32>
    tpu.vector_store %arg19[%c0_33, %c32_34], %56 {strides = array<i32>} : memref<16x128xf32, #tpu.memory_space<vmem>>, vector<16x32xf32>,
    %c0_35 = arith.constant 0 : index
    %c1_36 = arith.constant 1 : index
    %58 = vector.load %arg17[%c0_35, %c1_36] : memref<16x4xf32, #tpu.memory_space<vmem>>, vector<16x1xf32>
    tpu.vector_store %arg17[%c0_35, %c1_36], %38 {strides = array<i32>} : memref<16x4xf32, #tpu.memory_space<vmem>>, vector<16x1xf32>,
    %c0_37 = arith.constant 0 : index
    %c64 = arith.constant 64 : index
    %59 = vector.load %arg16[%c0_37, %c64] : memref<16x128xbf16, #tpu.memory_space<vmem>>, vector<16x32xbf16>
    %60 = vector.extract_strided_slice %3 {offsets = [0, 64], sizes = [16, 32], strides = [1, 1]} : vector<16x128xbf16> to vector<16x32xbf16>
    %cst_38 = arith.constant dense<0.000000e+00> : vector<16x16xf32>
    %61 = tpu.matmul %59, %60, %cst_38 {dimension_numbers = #tpu.dot_dimension_numbers<[1], [1], [0], [0], [0, 0, 1, 0], [], []>} : vector<16x32xbf16>, vector<16x32xbf16>, vector<16x16xf32> -> vector<16x16xf32>
    %c0_39 = arith.constant 0 : index
    %c2 = arith.constant 2 : index
    %62 = vector.load %arg17[%c0_39, %c2] : memref<16x4xf32, #tpu.memory_space<vmem>>, vector<16x1xf32>
    %cst_40 = arith.constant dense<0xFF800000> : vector<16xf32>
    %63 = vector.multi_reduction <maximumf>, %61, %cst_40 [1] : vector<16x16xf32> to vector<16xf32>
    %64 = vector.shape_cast %63 : vector<16xf32> to vector<16x1xf32>
    %65 = arith.maximumf %62, %64 : vector<16x1xf32>
    %66 = arith.subf %62, %65 : vector<16x1xf32>
    %67 = math.exp %66 : vector<16x1xf32>
    %68 = vector.broadcast %65 : vector<16x1xf32> to vector<16x16xf32>
    %69 = arith.subf %61, %68 : vector<16x16xf32>
    %70 = math.exp %69 : vector<16x16xf32>
    %c0_41 = arith.constant 0 : index
    %c2_42 = arith.constant 2 : index
    %71 = vector.load %arg18[%c0_41, %c2_42] : memref<16x4xf32, #tpu.memory_space<vmem>>, vector<16x1xf32>
    %72 = arith.mulf %67, %71 : vector<16x1xf32>
    %cst_43 = arith.constant dense<0.000000e+00> : vector<16xf32>
    %73 = vector.multi_reduction <add>, %70, %cst_43 [1] : vector<16x16xf32> to vector<16xf32>
    %74 = vector.shape_cast %73 : vector<16xf32> to vector<16x1xf32>
    %75 = arith.addf %72, %74 : vector<16x1xf32>
    %c0_44 = arith.constant 0 : index
    %c2_45 = arith.constant 2 : index
    %76 = vector.load %arg18[%c0_44, %c2_45] : memref<16x4xf32, #tpu.memory_space<vmem>>, vector<16x1xf32>
    tpu.vector_store %arg18[%c0_44, %c2_45], %75 {strides = array<i32>} : memref<16x4xf32, #tpu.memory_space<vmem>>, vector<16x1xf32>,
    %c0_46 = arith.constant 0 : index
    %c64_47 = arith.constant 64 : index
    %77 = vector.load %arg19[%c0_46, %c64_47] : memref<16x128xf32, #tpu.memory_space<vmem>>, vector<16x32xf32>
    %78 = vector.broadcast %67 : vector<16x1xf32> to vector<16x32xf32>
    %79 = arith.mulf %78, %77 : vector<16x32xf32>
    %80 = arith.truncf %70 : vector<16x16xf32> to vector<16x16xbf16>
    %81 = vector.extract_strided_slice %4 {offsets = [0, 64], sizes = [16, 32], strides = [1, 1]} : vector<16x128xbf16> to vector<16x32xbf16>
    %cst_48 = arith.constant dense<0.000000e+00> : vector<16x32xf32>
    %82 = tpu.matmul %80, %81, %cst_48 {dimension_numbers = #tpu.dot_dimension_numbers<[1], [0], [0], [1], [0, 0, 1, 1], [], []>} : vector<16x16xbf16>, vector<16x32xbf16>, vector<16x32xf32> -> vector<16x32xf32>
    %83 = arith.addf %79, %82 : vector<16x32xf32>
    %c0_49 = arith.constant 0 : index
    %c64_50 = arith.constant 64 : index
    %84 = vector.load %arg19[%c0_49, %c64_50] : memref<16x128xf32, #tpu.memory_space<vmem>>, vector<16x32xf32>
    tpu.vector_store %arg19[%c0_49, %c64_50], %83 {strides = array<i32>} : memref<16x128xf32, #tpu.memory_space<vmem>>, vector<16x32xf32>,
    %c0_51 = arith.constant 0 : index
    %c2_52 = arith.constant 2 : index
    %85 = vector.load %arg17[%c0_51, %c2_52] : memref<16x4xf32, #tpu.memory_space<vmem>>, vector<16x1xf32>
    tpu.vector_store %arg17[%c0_51, %c2_52], %65 {strides = array<i32>} : memref<16x4xf32, #tpu.memory_space<vmem>>, vector<16x1xf32>,
    %c0_53 = arith.constant 0 : index
    %c96 = arith.constant 96 : index
    %86 = vector.load %arg16[%c0_53, %c96] : memref<16x128xbf16, #tpu.memory_space<vmem>>, vector<16x32xbf16>
    %87 = vector.extract_strided_slice %3 {offsets = [0, 96], sizes = [16, 32], strides = [1, 1]} : vector<16x128xbf16> to vector<16x32xbf16>
    %cst_54 = arith.constant dense<0.000000e+00> : vector<16x16xf32>
    %88 = tpu.matmul %86, %87, %cst_54 {dimension_numbers = #tpu.dot_dimension_numbers<[1], [1], [0], [0], [0, 0, 1, 0], [], []>} : vector<16x32xbf16>, vector<16x32xbf16>, vector<16x16xf32> -> vector<16x16xf32>
    %c0_55 = arith.constant 0 : index
    %c3 = arith.constant 3 : index
    %89 = vector.load %arg17[%c0_55, %c3] : memref<16x4xf32, #tpu.memory_space<vmem>>, vector<16x1xf32>
    %cst_56 = arith.constant dense<0xFF800000> : vector<16xf32>
    %90 = vector.multi_reduction <maximumf>, %88, %cst_56 [1] : vector<16x16xf32> to vector<16xf32>
    %91 = vector.shape_cast %90 : vector<16xf32> to vector<16x1xf32>
    %92 = arith.maximumf %89, %91 : vector<16x1xf32>
    %93 = arith.subf %89, %92 : vector<16x1xf32>
    %94 = math.exp %93 : vector<16x1xf32>
    %95 = vector.broadcast %92 : vector<16x1xf32> to vector<16x16xf32>
    %96 = arith.subf %88, %95 : vector<16x16xf32>
    %97 = math.exp %96 : vector<16x16xf32>
    %c0_57 = arith.constant 0 : index
    %c3_58 = arith.constant 3 : index
    %98 = vector.load %arg18[%c0_57, %c3_58] : memref<16x4xf32, #tpu.memory_space<vmem>>, vector<16x1xf32>
    %99 = arith.mulf %94, %98 : vector<16x1xf32>
    %cst_59 = arith.constant dense<0.000000e+00> : vector<16xf32>
    %100 = vector.multi_reduction <add>, %97, %cst_59 [1] : vector<16x16xf32> to vector<16xf32>
    %101 = vector.shape_cast %100 : vector<16xf32> to vector<16x1xf32>
    %102 = arith.addf %99, %101 : vector<16x1xf32>
    %c0_60 = arith.constant 0 : index
    %c3_61 = arith.constant 3 : index
    %103 = vector.load %arg18[%c0_60, %c3_61] : memref<16x4xf32, #tpu.memory_space<vmem>>, vector<16x1xf32>
    tpu.vector_store %arg18[%c0_60, %c3_61], %102 {strides = array<i32>} : memref<16x4xf32, #tpu.memory_space<vmem>>, vector<16x1xf32>,
    %c0_62 = arith.constant 0 : index
    %c96_63 = arith.constant 96 : index
    %104 = vector.load %arg19[%c0_62, %c96_63] : memref<16x128xf32, #tpu.memory_space<vmem>>, vector<16x32xf32>
    %105 = vector.broadcast %94 : vector<16x1xf32> to vector<16x32xf32>
    %106 = arith.mulf %105, %104 : vector<16x32xf32>
    %107 = arith.truncf %97 : vector<16x16xf32> to vector<16x16xbf16>
    %108 = vector.extract_strided_slice %4 {offsets = [0, 96], sizes = [16, 32], strides = [1, 1]} : vector<16x128xbf16> to vector<16x32xbf16>
    %cst_64 = arith.constant dense<0.000000e+00> : vector<16x32xf32>
    %109 = tpu.matmul %107, %108, %cst_64 {dimension_numbers = #tpu.dot_dimension_numbers<[1], [0], [0], [1], [0, 0, 1, 1], [], []>} : vector<16x16xbf16>, vector<16x32xbf16>, vector<16x32xf32> -> vector<16x32xf32>
    %110 = arith.addf %106, %109 : vector<16x32xf32>
    %c0_65 = arith.constant 0 : index
    %c96_66 = arith.constant 96 : index
    %111 = vector.load %arg19[%c0_65, %c96_66] : memref<16x128xf32, #tpu.memory_space<vmem>>, vector<16x32xf32>
    tpu.vector_store %arg19[%c0_65, %c96_66], %110 {strides = array<i32>} : memref<16x128xf32, #tpu.memory_space<vmem>>, vector<16x32xf32>,
    %c0_67 = arith.constant 0 : index
    %c3_68 = arith.constant 3 : index
    %112 = vector.load %arg17[%c0_67, %c3_68] : memref<16x4xf32, #tpu.memory_space<vmem>>, vector<16x1xf32>
    tpu.vector_store %arg17[%c0_67, %c3_68], %92 {strides = array<i32>} : memref<16x4xf32, #tpu.memory_space<vmem>>, vector<16x1xf32>,
    %c0_i32_69 = arith.constant 0 : i32
    %113 = arith.cmpi eq, %arg1, %c0_i32_69 : i32
    %114 = arith.extui %113 : i1 to i32
    %c0_i32_70 = arith.constant 0 : i32
    %115 = arith.cmpi ne, %114, %c0_i32_70 : i32
    scf.if %115 {
      %c0_71 = arith.constant 0 : index
      %c0_72 = arith.constant 0 : index
      %116 = vector.load %arg2[%c0_71, %c0_72] : memref<16x32xf32, #tpu.memory_space<vmem>>, vector<16x32xf32>
      %c0_73 = arith.constant 0 : index
      %c0_74 = arith.constant 0 : index
      %117 = vector.load %arg19[%c0_73, %c0_74] : memref<16x128xf32, #tpu.memory_space<vmem>>, vector<16x32xf32>
      %c0_75 = arith.constant 0 : index
      %c0_76 = arith.constant 0 : index
      %118 = vector.load %arg18[%c0_75, %c0_76] : memref<16x4xf32, #tpu.memory_space<vmem>>, vector<16x1xf32>
      %119 = vector.broadcast %118 : vector<16x1xf32> to vector<16x32xf32>
      %120 = arith.divf %117, %119 : vector<16x32xf32>
      %c0_77 = arith.constant 0 : index
      %c0_78 = arith.constant 0 : index
      %121 = vector.load %arg19[%c0_77, %c0_78] : memref<16x128xf32, #tpu.memory_space<vmem>>, vector<16x32xf32>
      tpu.vector_store %arg19[%c0_77, %c0_78], %120 {strides = array<i32>} : memref<16x128xf32, #tpu.memory_space<vmem>>, vector<16x32xf32>,
      %c0_79 = arith.constant 0 : index
      %c32_80 = arith.constant 32 : index
      %122 = vector.load %arg19[%c0_79, %c32_80] : memref<16x128xf32, #tpu.memory_space<vmem>>, vector<16x32xf32>
      %c0_81 = arith.constant 0 : index
      %c1_82 = arith.constant 1 : index
      %123 = vector.load %arg18[%c0_81, %c1_82] : memref<16x4xf32, #tpu.memory_space<vmem>>, vector<16x1xf32>
      %124 = vector.broadcast %123 : vector<16x1xf32> to vector<16x32xf32>
      %125 = arith.divf %122, %124 : vector<16x32xf32>
      %c0_83 = arith.constant 0 : index
      %c32_84 = arith.constant 32 : index
      %126 = vector.load %arg19[%c0_83, %c32_84] : memref<16x128xf32, #tpu.memory_space<vmem>>, vector<16x32xf32>
      tpu.vector_store %arg19[%c0_83, %c32_84], %125 {strides = array<i32>} : memref<16x128xf32, #tpu.memory_space<vmem>>, vector<16x32xf32>,
      %c0_85 = arith.constant 0 : index
      %c64_86 = arith.constant 64 : index
      %127 = vector.load %arg19[%c0_85, %c64_86] : memref<16x128xf32, #tpu.memory_space<vmem>>, vector<16x32xf32>
      %c0_87 = arith.constant 0 : index
      %c2_88 = arith.constant 2 : index
      %128 = vector.load %arg18[%c0_87, %c2_88] : memref<16x4xf32, #tpu.memory_space<vmem>>, vector<16x1xf32>
      %129 = vector.broadcast %128 : vector<16x1xf32> to vector<16x32xf32>
      %130 = arith.divf %127, %129 : vector<16x32xf32>
      %c0_89 = arith.constant 0 : index
      %c64_90 = arith.constant 64 : index
      %131 = vector.load %arg19[%c0_89, %c64_90] : memref<16x128xf32, #tpu.memory_space<vmem>>, vector<16x32xf32>
      tpu.vector_store %arg19[%c0_89, %c64_90], %130 {strides = array<i32>} : memref<16x128xf32, #tpu.memory_space<vmem>>, vector<16x32xf32>,
      %c0_91 = arith.constant 0 : index
      %c96_92 = arith.constant 96 : index
      %132 = vector.load %arg19[%c0_91, %c96_92] : memref<16x128xf32, #tpu.memory_space<vmem>>, vector<16x32xf32>
      %c0_93 = arith.constant 0 : index
      %c3_94 = arith.constant 3 : index
      %133 = vector.load %arg18[%c0_93, %c3_94] : memref<16x4xf32, #tpu.memory_space<vmem>>, vector<16x1xf32>
      %134 = vector.broadcast %133 : vector<16x1xf32> to vector<16x32xf32>
      %135 = arith.divf %132, %134 : vector<16x32xf32>
      %c0_95 = arith.constant 0 : index
      %c96_96 = arith.constant 96 : index
      %136 = vector.load %arg19[%c0_95, %c96_96] : memref<16x128xf32, #tpu.memory_space<vmem>>, vector<16x32xf32>
      tpu.vector_store %arg19[%c0_95, %c96_96], %135 {strides = array<i32>} : memref<16x128xf32, #tpu.memory_space<vmem>>, vector<16x32xf32>,
      %c0_97 = arith.constant 0 : index
      %c0_98 = arith.constant 0 : index
      %137 = vector.load %arg19[%c0_97, %c0_98] : memref<16x128xf32, #tpu.memory_space<vmem>>, vector<16x128xf32>
      %138 = arith.truncf %137 : vector<16x128xf32> to vector<16x128xbf16>
      %c0_99 = arith.constant 0 : index
      %c0_100 = arith.constant 0 : index
      %139 = vector.load %arg8[%c0_99, %c0_100] : memref<128x32xbf16, #tpu.memory_space<vmem>>, vector<128x32xbf16>
      %cst_101 = arith.constant dense<0.000000e+00> : vector<16x32xf32>
      %140 = tpu.matmul %138, %139, %cst_101 {dimension_numbers = #tpu.dot_dimension_numbers<[1], [0], [0], [1], [0, 0, 1, 1], [], []>} : vector<16x128xbf16>, vector<128x32xbf16>, vector<16x32xf32> -> vector<16x32xf32>
      %141 = arith.addf %116, %140 : vector<16x32xf32>
      %c0_102 = arith.constant 0 : index
      %c0_103 = arith.constant 0 : index
      %142 = vector.load %arg9[%c0_102, %c0_103] : memref<1x32xf32, #tpu.memory_space<vmem>>, vector<1x32xf32>
      %c0_104 = arith.constant 0 : index
      %c0_105 = arith.constant 0 : index
      %143 = vector.load %arg10[%c0_104, %c0_105] : memref<1x32xf32, #tpu.memory_space<vmem>>, vector<1x32xf32>
      %cst_106 = arith.constant dense<0.000000e+00> : vector<16xf32>
      %144 = vector.multi_reduction <add>, %141, %cst_106 [1] : vector<16x32xf32> to vector<16xf32>
      %145 = vector.shape_cast %144 : vector<16xf32> to vector<16x1xf32>
      %cst_107 = arith.constant 3.200000e+01 : f32
      %146 = vector.broadcast %cst_107 : f32 to vector<16x1xf32>
      %147 = arith.divf %145, %146 : vector<16x1xf32>
      %148 = vector.broadcast %147 : vector<16x1xf32> to vector<16x32xf32>
      %149 = arith.subf %141, %148 : vector<16x32xf32>
      %150 = arith.mulf %149, %149 : vector<16x32xf32>
      %cst_108 = arith.constant dense<0.000000e+00> : vector<16xf32>
      %151 = vector.multi_reduction <add>, %150, %cst_108 [1] : vector<16x32xf32> to vector<16xf32>
      %152 = vector.shape_cast %151 : vector<16xf32> to vector<16x1xf32>
      %cst_109 = arith.constant 3.200000e+01 : f32
      %153 = vector.broadcast %cst_109 : f32 to vector<16x1xf32>
      %154 = arith.divf %152, %153 : vector<16x1xf32>
      %cst_110 = arith.constant 9.99999974E-6 : f32
      %155 = vector.broadcast %cst_110 : f32 to vector<16x1xf32>
      %156 = arith.addf %154, %155 : vector<16x1xf32>
      %157 = math.rsqrt %156 : vector<16x1xf32>
      %158 = vector.broadcast %157 : vector<16x1xf32> to vector<16x32xf32>
      %159 = arith.mulf %149, %158 : vector<16x32xf32>
      %160 = vector.broadcast %142 : vector<1x32xf32> to vector<16x32xf32>
      %161 = arith.mulf %159, %160 : vector<16x32xf32>
      %162 = vector.broadcast %143 : vector<1x32xf32> to vector<16x32xf32>
      %163 = arith.addf %161, %162 : vector<16x32xf32>
      %164 = arith.truncf %163 : vector<16x32xf32> to vector<16x32xbf16>
      %c0_111 = arith.constant 0 : index
      %c0_112 = arith.constant 0 : index
      %165 = vector.load %arg11[%c0_111, %c0_112] : memref<32x32xbf16, #tpu.memory_space<vmem>>, vector<32x32xbf16>
      %cst_113 = arith.constant dense<0.000000e+00> : vector<16x32xf32>
      %166 = tpu.matmul %164, %165, %cst_113 {dimension_numbers = #tpu.dot_dimension_numbers<[1], [0], [0], [1], [0, 0, 1, 1], [], []>} : vector<16x32xbf16>, vector<32x32xbf16>, vector<16x32xf32> -> vector<16x32xf32>
      %c0_114 = arith.constant 0 : index
      %c0_115 = arith.constant 0 : index
      %167 = vector.load %arg12[%c0_114, %c0_115] : memref<1x32xf32, #tpu.memory_space<vmem>>, vector<1x32xf32>
      %168 = vector.broadcast %167 : vector<1x32xf32> to vector<16x32xf32>
      %169 = arith.addf %166, %168 : vector<16x32xf32>
      %cst_116 = arith.constant 0.000000e+00 : f32
      %170 = vector.broadcast %cst_116 : f32 to vector<16x32xf32>
      %171 = arith.maximumf %169, %170 : vector<16x32xf32>
      %172 = arith.truncf %171 : vector<16x32xf32> to vector<16x32xbf16>
      %c0_117 = arith.constant 0 : index
      %c0_118 = arith.constant 0 : index
      %173 = vector.load %arg13[%c0_117, %c0_118] : memref<32x32xbf16, #tpu.memory_space<vmem>>, vector<32x32xbf16>
      %cst_119 = arith.constant dense<0.000000e+00> : vector<16x32xf32>
      %174 = tpu.matmul %172, %173, %cst_119 {dimension_numbers = #tpu.dot_dimension_numbers<[1], [0], [0], [1], [0, 0, 1, 1], [], []>} : vector<16x32xbf16>, vector<32x32xbf16>, vector<16x32xf32> -> vector<16x32xf32>
      %c0_120 = arith.constant 0 : index
      %c0_121 = arith.constant 0 : index
      %175 = vector.load %arg14[%c0_120, %c0_121] : memref<1x32xf32, #tpu.memory_space<vmem>>, vector<1x32xf32>
      %176 = vector.broadcast %175 : vector<1x32xf32> to vector<16x32xf32>
      %177 = arith.addf %174, %176 : vector<16x32xf32>
      %178 = arith.addf %141, %177 : vector<16x32xf32>
      %c0_122 = arith.constant 0 : index
      %c0_123 = arith.constant 0 : index
      %179 = vector.load %arg15[%c0_122, %c0_123] : memref<16x32xf32, #tpu.memory_space<vmem>>, vector<16x32xf32>
      tpu.vector_store %arg15[%c0_122, %c0_123], %178 {strides = array<i32>} : memref<16x32xf32, #tpu.memory_space<vmem>>, vector<16x32xf32>,
    } else {
    }
    return
  }
  func.func @transform_0(%arg0: i32, %arg1: i32) -> (i32, i32) {
    %c0_i32 = arith.constant 0 : i32
    %c0_i32_0 = arith.constant 0 : i32
    return %arg0, %c0_i32 : i32, i32
  }
  func.func @transform_1(%arg0: i32, %arg1: i32) -> (i32, i32) {
    %c0_i32 = arith.constant 0 : i32
    %c0_i32_0 = arith.constant 0 : i32
    %c0_i32_1 = arith.constant 0 : i32
    return %c0_i32, %c0_i32_0 : i32, i32
  }
  func.func @transform_2(%arg0: i32, %arg1: i32) -> (i32, i32) {
    %c0_i32 = arith.constant 0 : i32
    %c0_i32_0 = arith.constant 0 : i32
    %c0_i32_1 = arith.constant 0 : i32
    return %c0_i32, %c0_i32_0 : i32, i32
  }
  func.func @transform_3(%arg0: i32, %arg1: i32) -> (i32, i32) {
    %c0_i32 = arith.constant 0 : i32
    %c0_i32_0 = arith.constant 0 : i32
    %c0_i32_1 = arith.constant 0 : i32
    return %c0_i32, %c0_i32_0 : i32, i32
  }
  func.func @transform_4(%arg0: i32, %arg1: i32) -> (i32, i32) {
    %c0_i32 = arith.constant 0 : i32
    %c0_i32_0 = arith.constant 0 : i32
    return %arg1, %c0_i32 : i32, i32
  }
  func.func @transform_5(%arg0: i32, %arg1: i32) -> (i32, i32) {
    %c0_i32 = arith.constant 0 : i32
    %c0_i32_0 = arith.constant 0 : i32
    return %arg1, %c0_i32 : i32, i32
  }
  func.func @transform_6(%arg0: i32, %arg1: i32) -> (i32, i32) {
    %c0_i32 = arith.constant 0 : i32
    %c0_i32_0 = arith.constant 0 : i32
    %c0_i32_1 = arith.constant 0 : i32
    return %c0_i32, %c0_i32_0 : i32, i32
  }
  func.func @transform_7(%arg0: i32, %arg1: i32) -> (i32, i32) {
    %c0_i32 = arith.constant 0 : i32
    %c0_i32_0 = arith.constant 0 : i32
    %c0_i32_1 = arith.constant 0 : i32
    return %c0_i32, %c0_i32_0 : i32, i32
  }
  func.func @transform_8(%arg0: i32, %arg1: i32) -> (i32, i32) {
    %c0_i32 = arith.constant 0 : i32
    %c0_i32_0 = arith.constant 0 : i32
    %c0_i32_1 = arith.constant 0 : i32
    return %c0_i32, %c0_i32_0 : i32, i32
  }
  func.func @transform_9(%arg0: i32, %arg1: i32) -> (i32, i32) {
    %c0_i32 = arith.constant 0 : i32
    %c0_i32_0 = arith.constant 0 : i32
    %c0_i32_1 = arith.constant 0 : i32
    return %c0_i32, %c0_i32_0 : i32, i32
  }
  func.func @transform_10(%arg0: i32, %arg1: i32) -> (i32, i32) {
    %c0_i32 = arith.constant 0 : i32
    %c0_i32_0 = arith.constant 0 : i32
    %c0_i32_1 = arith.constant 0 : i32
    return %c0_i32, %c0_i32_0 : i32, i32
  }
  func.func @transform_11(%arg0: i32, %arg1: i32) -> (i32, i32) {
    %c0_i32 = arith.constant 0 : i32
    %c0_i32_0 = arith.constant 0 : i32
    %c0_i32_1 = arith.constant 0 : i32
    return %c0_i32, %c0_i32_0 : i32, i32
  }
  func.func @transform_12(%arg0: i32, %arg1: i32) -> (i32, i32) {
    %c0_i32 = arith.constant 0 : i32
    %c0_i32_0 = arith.constant 0 : i32
    %c0_i32_1 = arith.constant 0 : i32
    return %c0_i32, %c0_i32_0 : i32, i32
  }
  func.func @transform_13(%arg0: i32, %arg1: i32) -> (i32, i32) {
    %c0_i32 = arith.constant 0 : i32
    %c0_i32_0 = arith.constant 0 : i32
    return %arg0, %c0_i32 : i32, i32
  }
}

module attributes {stable_mosaic.version = 11 : i64} {
  func.func @kernel(%arg0: i32, %arg1: memref<16x32xf32, #tpu.memory_space<vmem>>, %arg2: memref<16x32xf32, #tpu.memory_space<vmem>>, %arg3: memref<16x32xf32, #tpu.memory_space<vmem>>, %arg4: memref<96x16xbf16, #tpu.memory_space<vmem>>, %arg5: memref<16x256xbf16, #tpu.memory_space<vmem>>, %arg6: memref<1x256xf32, #tpu.memory_space<vmem>>, %arg7: memref<1x256xf32, #tpu.memory_space<vmem>>, %arg8: memref<1x256xf32, #tpu.memory_space<vmem>>, %arg9: memref<256x256xbf16, #tpu.memory_space<vmem>>, %arg10: memref<1x256xf32, #tpu.memory_space<vmem>>, %arg11: memref<1x256xf32, #tpu.memory_space<vmem>>, %arg12: memref<1x256xf32, #tpu.memory_space<vmem>>, %arg13: memref<256x256xbf16, #tpu.memory_space<vmem>>, %arg14: memref<1x256xf32, #tpu.memory_space<vmem>>, %arg15: memref<1x256xf32, #tpu.memory_space<vmem>>, %arg16: memref<1x256xf32, #tpu.memory_space<vmem>>, %arg17: memref<256x256xbf16, #tpu.memory_space<vmem>>, %arg18: memref<1x256xf32, #tpu.memory_space<vmem>>, %arg19: memref<1x256xf32, #tpu.memory_space<vmem>>, %arg20: memref<1x256xf32, #tpu.memory_space<vmem>>, %arg21: memref<256x16xbf16, #tpu.memory_space<vmem>>, %arg22: memref<1x16xf32, #tpu.memory_space<vmem>>, %arg23: memref<16x16xf32, #tpu.memory_space<vmem>>, %arg24: memref<16x96xbf16, #tpu.memory_space<vmem>>) attributes {dimension_semantics = [#tpu.dimension_semantics<parallel>], iteration_bounds = array<i64: 1>, scalar_prefetch = 0 : i64, scratch_operands = 1 : i64, tpu.core_type = #tpu.core_type<tc>, window_params = [{transform_indices = @transform_0, window_bounds = array<i64: 16, 32>}, {transform_indices = @transform_1, window_bounds = array<i64: 16, 32>}, {transform_indices = @transform_2, window_bounds = array<i64: 16, 32>}, {pipeline_mode = #tpu.pipeline_mode<synchronous>, transform_indices = @transform_3, window_bounds = array<i64: 96, 16>}, {pipeline_mode = #tpu.pipeline_mode<synchronous>, transform_indices = @transform_4, window_bounds = array<i64: 16, 256>}, {pipeline_mode = #tpu.pipeline_mode<synchronous>, transform_indices = @transform_5, window_bounds = array<i64: 1, 256>}, {pipeline_mode = #tpu.pipeline_mode<synchronous>, transform_indices = @transform_6, window_bounds = array<i64: 1, 256>}, {pipeline_mode = #tpu.pipeline_mode<synchronous>, transform_indices = @transform_7, window_bounds = array<i64: 1, 256>}, {pipeline_mode = #tpu.pipeline_mode<synchronous>, transform_indices = @transform_8, window_bounds = array<i64: 256, 256>}, {pipeline_mode = #tpu.pipeline_mode<synchronous>, transform_indices = @transform_9, window_bounds = array<i64: 1, 256>}, {pipeline_mode = #tpu.pipeline_mode<synchronous>, transform_indices = @transform_10, window_bounds = array<i64: 1, 256>}, {pipeline_mode = #tpu.pipeline_mode<synchronous>, transform_indices = @transform_11, window_bounds = array<i64: 1, 256>}, {pipeline_mode = #tpu.pipeline_mode<synchronous>, transform_indices = @transform_12, window_bounds = array<i64: 256, 256>}, {pipeline_mode = #tpu.pipeline_mode<synchronous>, transform_indices = @transform_13, window_bounds = array<i64: 1, 256>}, {pipeline_mode = #tpu.pipeline_mode<synchronous>, transform_indices = @transform_14, window_bounds = array<i64: 1, 256>}, {pipeline_mode = #tpu.pipeline_mode<synchronous>, transform_indices = @transform_15, window_bounds = array<i64: 1, 256>}, {pipeline_mode = #tpu.pipeline_mode<synchronous>, transform_indices = @transform_16, window_bounds = array<i64: 256, 256>}, {pipeline_mode = #tpu.pipeline_mode<synchronous>, transform_indices = @transform_17, window_bounds = array<i64: 1, 256>}, {pipeline_mode = #tpu.pipeline_mode<synchronous>, transform_indices = @transform_18, window_bounds = array<i64: 1, 256>}, {pipeline_mode = #tpu.pipeline_mode<synchronous>, transform_indices = @transform_19, window_bounds = array<i64: 1, 256>}, {pipeline_mode = #tpu.pipeline_mode<synchronous>, transform_indices = @transform_20, window_bounds = array<i64: 256, 16>}, {pipeline_mode = #tpu.pipeline_mode<synchronous>, transform_indices = @transform_21, window_bounds = array<i64: 1, 16>}, {transform_indices = @transform_22, window_bounds = array<i64: 16, 16>}]} {
    %c0 = arith.constant 0 : index
    %c0_0 = arith.constant 0 : index
    %0 = vector.load %arg1[%c0, %c0_0] : memref<16x32xf32, #tpu.memory_space<vmem>>, vector<16x32xf32>
    %1 = arith.truncf %0 : vector<16x32xf32> to vector<16x32xbf16>
    %c0_1 = arith.constant 0 : index
    %c0_2 = arith.constant 0 : index
    %2 = vector.load %arg24[%c0_1, %c0_2] : memref<16x96xbf16, #tpu.memory_space<vmem>>, vector<16x32xbf16>
    tpu.vector_store %arg24[%c0_1, %c0_2], %1 {strides = array<i32>} : memref<16x96xbf16, #tpu.memory_space<vmem>>, vector<16x32xbf16>,
    %c0_3 = arith.constant 0 : index
    %c0_4 = arith.constant 0 : index
    %3 = vector.load %arg2[%c0_3, %c0_4] : memref<16x32xf32, #tpu.memory_space<vmem>>, vector<16x32xf32>
    %4 = arith.truncf %3 : vector<16x32xf32> to vector<16x32xbf16>
    %c0_5 = arith.constant 0 : index
    %c32 = arith.constant 32 : index
    %5 = vector.load %arg24[%c0_5, %c32] : memref<16x96xbf16, #tpu.memory_space<vmem>>, vector<16x32xbf16>
    tpu.vector_store %arg24[%c0_5, %c32], %4 {strides = array<i32>} : memref<16x96xbf16, #tpu.memory_space<vmem>>, vector<16x32xbf16>,
    %c0_6 = arith.constant 0 : index
    %c0_7 = arith.constant 0 : index
    %6 = vector.load %arg3[%c0_6, %c0_7] : memref<16x32xf32, #tpu.memory_space<vmem>>, vector<16x32xf32>
    %7 = arith.truncf %6 : vector<16x32xf32> to vector<16x32xbf16>
    %c0_8 = arith.constant 0 : index
    %c64 = arith.constant 64 : index
    %8 = vector.load %arg24[%c0_8, %c64] : memref<16x96xbf16, #tpu.memory_space<vmem>>, vector<16x32xbf16>
    tpu.vector_store %arg24[%c0_8, %c64], %7 {strides = array<i32>} : memref<16x96xbf16, #tpu.memory_space<vmem>>, vector<16x32xbf16>,
    %c0_9 = arith.constant 0 : index
    %c0_10 = arith.constant 0 : index
    %9 = vector.load %arg24[%c0_9, %c0_10] : memref<16x96xbf16, #tpu.memory_space<vmem>>, vector<16x96xbf16>
    %c0_11 = arith.constant 0 : index
    %c0_12 = arith.constant 0 : index
    %10 = vector.load %arg4[%c0_11, %c0_12] : memref<96x16xbf16, #tpu.memory_space<vmem>>, vector<96x16xbf16>
    %cst = arith.constant dense<0.000000e+00> : vector<16x16xf32>
    %11 = tpu.matmul %9, %10, %cst {dimension_numbers = #tpu.dot_dimension_numbers<[1], [0], [0], [1], [0, 0, 1, 1], [], []>} : vector<16x96xbf16>, vector<96x16xbf16>, vector<16x16xf32> -> vector<16x16xf32>
    %12 = arith.truncf %11 : vector<16x16xf32> to vector<16x16xbf16>
    %c0_13 = arith.constant 0 : index
    %c0_14 = arith.constant 0 : index
    %13 = vector.load %arg5[%c0_13, %c0_14] : memref<16x256xbf16, #tpu.memory_space<vmem>>, vector<16x256xbf16>
    %cst_15 = arith.constant dense<0.000000e+00> : vector<16x256xf32>
    %14 = tpu.matmul %12, %13, %cst_15 {dimension_numbers = #tpu.dot_dimension_numbers<[1], [0], [0], [1], [0, 0, 1, 1], [], []>} : vector<16x16xbf16>, vector<16x256xbf16>, vector<16x256xf32> -> vector<16x256xf32>
    %c0_16 = arith.constant 0 : index
    %c0_17 = arith.constant 0 : index
    %15 = vector.load %arg6[%c0_16, %c0_17] : memref<1x256xf32, #tpu.memory_space<vmem>>, vector<1x256xf32>
    %16 = vector.broadcast %15 : vector<1x256xf32> to vector<16x256xf32>
    %17 = arith.addf %14, %16 : vector<16x256xf32>
    %c0_18 = arith.constant 0 : index
    %c0_19 = arith.constant 0 : index
    %18 = vector.load %arg7[%c0_18, %c0_19] : memref<1x256xf32, #tpu.memory_space<vmem>>, vector<1x256xf32>
    %c0_20 = arith.constant 0 : index
    %c0_21 = arith.constant 0 : index
    %19 = vector.load %arg8[%c0_20, %c0_21] : memref<1x256xf32, #tpu.memory_space<vmem>>, vector<1x256xf32>
    %cst_22 = arith.constant dense<0.000000e+00> : vector<16xf32>
    %20 = vector.multi_reduction <add>, %17, %cst_22 [1] : vector<16x256xf32> to vector<16xf32>
    %21 = vector.shape_cast %20 : vector<16xf32> to vector<16x1xf32>
    %cst_23 = arith.constant 2.560000e+02 : f32
    %22 = vector.broadcast %cst_23 : f32 to vector<16x1xf32>
    %23 = arith.divf %21, %22 : vector<16x1xf32>
    %24 = vector.broadcast %23 : vector<16x1xf32> to vector<16x256xf32>
    %25 = arith.subf %17, %24 : vector<16x256xf32>
    %26 = arith.mulf %25, %25 : vector<16x256xf32>
    %cst_24 = arith.constant dense<0.000000e+00> : vector<16xf32>
    %27 = vector.multi_reduction <add>, %26, %cst_24 [1] : vector<16x256xf32> to vector<16xf32>
    %28 = vector.shape_cast %27 : vector<16xf32> to vector<16x1xf32>
    %cst_25 = arith.constant 2.560000e+02 : f32
    %29 = vector.broadcast %cst_25 : f32 to vector<16x1xf32>
    %30 = arith.divf %28, %29 : vector<16x1xf32>
    %cst_26 = arith.constant 9.99999974E-6 : f32
    %31 = vector.broadcast %cst_26 : f32 to vector<16x1xf32>
    %32 = arith.addf %30, %31 : vector<16x1xf32>
    %33 = math.rsqrt %32 : vector<16x1xf32>
    %34 = vector.broadcast %33 : vector<16x1xf32> to vector<16x256xf32>
    %35 = arith.mulf %25, %34 : vector<16x256xf32>
    %36 = vector.broadcast %18 : vector<1x256xf32> to vector<16x256xf32>
    %37 = arith.mulf %35, %36 : vector<16x256xf32>
    %38 = vector.broadcast %19 : vector<1x256xf32> to vector<16x256xf32>
    %39 = arith.addf %37, %38 : vector<16x256xf32>
    %40 = math.tanh %39 : vector<16x256xf32>
    %41 = arith.truncf %40 : vector<16x256xf32> to vector<16x256xbf16>
    %c0_27 = arith.constant 0 : index
    %c0_28 = arith.constant 0 : index
    %42 = vector.load %arg9[%c0_27, %c0_28] : memref<256x256xbf16, #tpu.memory_space<vmem>>, vector<256x256xbf16>
    %cst_29 = arith.constant dense<0.000000e+00> : vector<16x256xf32>
    %43 = tpu.matmul %41, %42, %cst_29 {dimension_numbers = #tpu.dot_dimension_numbers<[1], [0], [0], [1], [0, 0, 1, 1], [], []>} : vector<16x256xbf16>, vector<256x256xbf16>, vector<16x256xf32> -> vector<16x256xf32>
    %c0_30 = arith.constant 0 : index
    %c0_31 = arith.constant 0 : index
    %44 = vector.load %arg10[%c0_30, %c0_31] : memref<1x256xf32, #tpu.memory_space<vmem>>, vector<1x256xf32>
    %45 = vector.broadcast %44 : vector<1x256xf32> to vector<16x256xf32>
    %46 = arith.addf %43, %45 : vector<16x256xf32>
    %c0_32 = arith.constant 0 : index
    %c0_33 = arith.constant 0 : index
    %47 = vector.load %arg11[%c0_32, %c0_33] : memref<1x256xf32, #tpu.memory_space<vmem>>, vector<1x256xf32>
    %c0_34 = arith.constant 0 : index
    %c0_35 = arith.constant 0 : index
    %48 = vector.load %arg12[%c0_34, %c0_35] : memref<1x256xf32, #tpu.memory_space<vmem>>, vector<1x256xf32>
    %cst_36 = arith.constant dense<0.000000e+00> : vector<16xf32>
    %49 = vector.multi_reduction <add>, %46, %cst_36 [1] : vector<16x256xf32> to vector<16xf32>
    %50 = vector.shape_cast %49 : vector<16xf32> to vector<16x1xf32>
    %cst_37 = arith.constant 2.560000e+02 : f32
    %51 = vector.broadcast %cst_37 : f32 to vector<16x1xf32>
    %52 = arith.divf %50, %51 : vector<16x1xf32>
    %53 = vector.broadcast %52 : vector<16x1xf32> to vector<16x256xf32>
    %54 = arith.subf %46, %53 : vector<16x256xf32>
    %55 = arith.mulf %54, %54 : vector<16x256xf32>
    %cst_38 = arith.constant dense<0.000000e+00> : vector<16xf32>
    %56 = vector.multi_reduction <add>, %55, %cst_38 [1] : vector<16x256xf32> to vector<16xf32>
    %57 = vector.shape_cast %56 : vector<16xf32> to vector<16x1xf32>
    %cst_39 = arith.constant 2.560000e+02 : f32
    %58 = vector.broadcast %cst_39 : f32 to vector<16x1xf32>
    %59 = arith.divf %57, %58 : vector<16x1xf32>
    %cst_40 = arith.constant 9.99999974E-6 : f32
    %60 = vector.broadcast %cst_40 : f32 to vector<16x1xf32>
    %61 = arith.addf %59, %60 : vector<16x1xf32>
    %62 = math.rsqrt %61 : vector<16x1xf32>
    %63 = vector.broadcast %62 : vector<16x1xf32> to vector<16x256xf32>
    %64 = arith.mulf %54, %63 : vector<16x256xf32>
    %65 = vector.broadcast %47 : vector<1x256xf32> to vector<16x256xf32>
    %66 = arith.mulf %64, %65 : vector<16x256xf32>
    %67 = vector.broadcast %48 : vector<1x256xf32> to vector<16x256xf32>
    %68 = arith.addf %66, %67 : vector<16x256xf32>
    %69 = math.tanh %68 : vector<16x256xf32>
    %70 = arith.truncf %69 : vector<16x256xf32> to vector<16x256xbf16>
    %c0_41 = arith.constant 0 : index
    %c0_42 = arith.constant 0 : index
    %71 = vector.load %arg13[%c0_41, %c0_42] : memref<256x256xbf16, #tpu.memory_space<vmem>>, vector<256x256xbf16>
    %cst_43 = arith.constant dense<0.000000e+00> : vector<16x256xf32>
    %72 = tpu.matmul %70, %71, %cst_43 {dimension_numbers = #tpu.dot_dimension_numbers<[1], [0], [0], [1], [0, 0, 1, 1], [], []>} : vector<16x256xbf16>, vector<256x256xbf16>, vector<16x256xf32> -> vector<16x256xf32>
    %c0_44 = arith.constant 0 : index
    %c0_45 = arith.constant 0 : index
    %73 = vector.load %arg14[%c0_44, %c0_45] : memref<1x256xf32, #tpu.memory_space<vmem>>, vector<1x256xf32>
    %74 = vector.broadcast %73 : vector<1x256xf32> to vector<16x256xf32>
    %75 = arith.addf %72, %74 : vector<16x256xf32>
    %c0_46 = arith.constant 0 : index
    %c0_47 = arith.constant 0 : index
    %76 = vector.load %arg15[%c0_46, %c0_47] : memref<1x256xf32, #tpu.memory_space<vmem>>, vector<1x256xf32>
    %c0_48 = arith.constant 0 : index
    %c0_49 = arith.constant 0 : index
    %77 = vector.load %arg16[%c0_48, %c0_49] : memref<1x256xf32, #tpu.memory_space<vmem>>, vector<1x256xf32>
    %cst_50 = arith.constant dense<0.000000e+00> : vector<16xf32>
    %78 = vector.multi_reduction <add>, %75, %cst_50 [1] : vector<16x256xf32> to vector<16xf32>
    %79 = vector.shape_cast %78 : vector<16xf32> to vector<16x1xf32>
    %cst_51 = arith.constant 2.560000e+02 : f32
    %80 = vector.broadcast %cst_51 : f32 to vector<16x1xf32>
    %81 = arith.divf %79, %80 : vector<16x1xf32>
    %82 = vector.broadcast %81 : vector<16x1xf32> to vector<16x256xf32>
    %83 = arith.subf %75, %82 : vector<16x256xf32>
    %84 = arith.mulf %83, %83 : vector<16x256xf32>
    %cst_52 = arith.constant dense<0.000000e+00> : vector<16xf32>
    %85 = vector.multi_reduction <add>, %84, %cst_52 [1] : vector<16x256xf32> to vector<16xf32>
    %86 = vector.shape_cast %85 : vector<16xf32> to vector<16x1xf32>
    %cst_53 = arith.constant 2.560000e+02 : f32
    %87 = vector.broadcast %cst_53 : f32 to vector<16x1xf32>
    %88 = arith.divf %86, %87 : vector<16x1xf32>
    %cst_54 = arith.constant 9.99999974E-6 : f32
    %89 = vector.broadcast %cst_54 : f32 to vector<16x1xf32>
    %90 = arith.addf %88, %89 : vector<16x1xf32>
    %91 = math.rsqrt %90 : vector<16x1xf32>
    %92 = vector.broadcast %91 : vector<16x1xf32> to vector<16x256xf32>
    %93 = arith.mulf %83, %92 : vector<16x256xf32>
    %94 = vector.broadcast %76 : vector<1x256xf32> to vector<16x256xf32>
    %95 = arith.mulf %93, %94 : vector<16x256xf32>
    %96 = vector.broadcast %77 : vector<1x256xf32> to vector<16x256xf32>
    %97 = arith.addf %95, %96 : vector<16x256xf32>
    %98 = math.tanh %97 : vector<16x256xf32>
    %99 = arith.truncf %98 : vector<16x256xf32> to vector<16x256xbf16>
    %c0_55 = arith.constant 0 : index
    %c0_56 = arith.constant 0 : index
    %100 = vector.load %arg17[%c0_55, %c0_56] : memref<256x256xbf16, #tpu.memory_space<vmem>>, vector<256x256xbf16>
    %cst_57 = arith.constant dense<0.000000e+00> : vector<16x256xf32>
    %101 = tpu.matmul %99, %100, %cst_57 {dimension_numbers = #tpu.dot_dimension_numbers<[1], [0], [0], [1], [0, 0, 1, 1], [], []>} : vector<16x256xbf16>, vector<256x256xbf16>, vector<16x256xf32> -> vector<16x256xf32>
    %c0_58 = arith.constant 0 : index
    %c0_59 = arith.constant 0 : index
    %102 = vector.load %arg18[%c0_58, %c0_59] : memref<1x256xf32, #tpu.memory_space<vmem>>, vector<1x256xf32>
    %103 = vector.broadcast %102 : vector<1x256xf32> to vector<16x256xf32>
    %104 = arith.addf %101, %103 : vector<16x256xf32>
    %c0_60 = arith.constant 0 : index
    %c0_61 = arith.constant 0 : index
    %105 = vector.load %arg19[%c0_60, %c0_61] : memref<1x256xf32, #tpu.memory_space<vmem>>, vector<1x256xf32>
    %c0_62 = arith.constant 0 : index
    %c0_63 = arith.constant 0 : index
    %106 = vector.load %arg20[%c0_62, %c0_63] : memref<1x256xf32, #tpu.memory_space<vmem>>, vector<1x256xf32>
    %cst_64 = arith.constant dense<0.000000e+00> : vector<16xf32>
    %107 = vector.multi_reduction <add>, %104, %cst_64 [1] : vector<16x256xf32> to vector<16xf32>
    %108 = vector.shape_cast %107 : vector<16xf32> to vector<16x1xf32>
    %cst_65 = arith.constant 2.560000e+02 : f32
    %109 = vector.broadcast %cst_65 : f32 to vector<16x1xf32>
    %110 = arith.divf %108, %109 : vector<16x1xf32>
    %111 = vector.broadcast %110 : vector<16x1xf32> to vector<16x256xf32>
    %112 = arith.subf %104, %111 : vector<16x256xf32>
    %113 = arith.mulf %112, %112 : vector<16x256xf32>
    %cst_66 = arith.constant dense<0.000000e+00> : vector<16xf32>
    %114 = vector.multi_reduction <add>, %113, %cst_66 [1] : vector<16x256xf32> to vector<16xf32>
    %115 = vector.shape_cast %114 : vector<16xf32> to vector<16x1xf32>
    %cst_67 = arith.constant 2.560000e+02 : f32
    %116 = vector.broadcast %cst_67 : f32 to vector<16x1xf32>
    %117 = arith.divf %115, %116 : vector<16x1xf32>
    %cst_68 = arith.constant 9.99999974E-6 : f32
    %118 = vector.broadcast %cst_68 : f32 to vector<16x1xf32>
    %119 = arith.addf %117, %118 : vector<16x1xf32>
    %120 = math.rsqrt %119 : vector<16x1xf32>
    %121 = vector.broadcast %120 : vector<16x1xf32> to vector<16x256xf32>
    %122 = arith.mulf %112, %121 : vector<16x256xf32>
    %123 = vector.broadcast %105 : vector<1x256xf32> to vector<16x256xf32>
    %124 = arith.mulf %122, %123 : vector<16x256xf32>
    %125 = vector.broadcast %106 : vector<1x256xf32> to vector<16x256xf32>
    %126 = arith.addf %124, %125 : vector<16x256xf32>
    %127 = math.tanh %126 : vector<16x256xf32>
    %128 = arith.truncf %127 : vector<16x256xf32> to vector<16x256xbf16>
    %c0_69 = arith.constant 0 : index
    %c0_70 = arith.constant 0 : index
    %129 = vector.load %arg21[%c0_69, %c0_70] : memref<256x16xbf16, #tpu.memory_space<vmem>>, vector<256x16xbf16>
    %cst_71 = arith.constant dense<0.000000e+00> : vector<16x16xf32>
    %130 = tpu.matmul %128, %129, %cst_71 {dimension_numbers = #tpu.dot_dimension_numbers<[1], [0], [0], [1], [0, 0, 1, 1], [], []>} : vector<16x256xbf16>, vector<256x16xbf16>, vector<16x16xf32> -> vector<16x16xf32>
    %c0_72 = arith.constant 0 : index
    %c0_73 = arith.constant 0 : index
    %131 = vector.load %arg22[%c0_72, %c0_73] : memref<1x16xf32, #tpu.memory_space<vmem>>, vector<1x16xf32>
    %132 = vector.broadcast %131 : vector<1x16xf32> to vector<16x16xf32>
    %133 = arith.addf %130, %132 : vector<16x16xf32>
    %134 = arith.addf %11, %133 : vector<16x16xf32>
    %c0_74 = arith.constant 0 : index
    %c0_75 = arith.constant 0 : index
    %135 = vector.load %arg23[%c0_74, %c0_75] : memref<16x16xf32, #tpu.memory_space<vmem>>, vector<16x16xf32>
    tpu.vector_store %arg23[%c0_74, %c0_75], %134 {strides = array<i32>} : memref<16x16xf32, #tpu.memory_space<vmem>>, vector<16x16xf32>,
    return
  }
  func.func @transform_0(%arg0: i32) -> (i32, i32) {
    %c0_i32 = arith.constant 0 : i32
    %c0_i32_0 = arith.constant 0 : i32
    return %arg0, %c0_i32 : i32, i32
  }
  func.func @transform_1(%arg0: i32) -> (i32, i32) {
    %c0_i32 = arith.constant 0 : i32
    %c0_i32_0 = arith.constant 0 : i32
    return %arg0, %c0_i32 : i32, i32
  }
  func.func @transform_2(%arg0: i32) -> (i32, i32) {
    %c0_i32 = arith.constant 0 : i32
    %c0_i32_0 = arith.constant 0 : i32
    return %arg0, %c0_i32 : i32, i32
  }
  func.func @transform_3(%arg0: i32) -> (i32, i32) {
    %c0_i32 = arith.constant 0 : i32
    %c0_i32_0 = arith.constant 0 : i32
    %c0_i32_1 = arith.constant 0 : i32
    return %c0_i32, %c0_i32_0 : i32, i32
  }
  func.func @transform_4(%arg0: i32) -> (i32, i32) {
    %c0_i32 = arith.constant 0 : i32
    %c0_i32_0 = arith.constant 0 : i32
    %c0_i32_1 = arith.constant 0 : i32
    return %c0_i32, %c0_i32_0 : i32, i32
  }
  func.func @transform_5(%arg0: i32) -> (i32, i32) {
    %c0_i32 = arith.constant 0 : i32
    %c0_i32_0 = arith.constant 0 : i32
    %c0_i32_1 = arith.constant 0 : i32
    return %c0_i32, %c0_i32_0 : i32, i32
  }
  func.func @transform_6(%arg0: i32) -> (i32, i32) {
    %c0_i32 = arith.constant 0 : i32
    %c0_i32_0 = arith.constant 0 : i32
    %c0_i32_1 = arith.constant 0 : i32
    return %c0_i32, %c0_i32_0 : i32, i32
  }
  func.func @transform_7(%arg0: i32) -> (i32, i32) {
    %c0_i32 = arith.constant 0 : i32
    %c0_i32_0 = arith.constant 0 : i32
    %c0_i32_1 = arith.constant 0 : i32
    return %c0_i32, %c0_i32_0 : i32, i32
  }
  func.func @transform_8(%arg0: i32) -> (i32, i32) {
    %c0_i32 = arith.constant 0 : i32
    %c0_i32_0 = arith.constant 0 : i32
    %c0_i32_1 = arith.constant 0 : i32
    return %c0_i32, %c0_i32_0 : i32, i32
  }
  func.func @transform_9(%arg0: i32) -> (i32, i32) {
    %c0_i32 = arith.constant 0 : i32
    %c0_i32_0 = arith.constant 0 : i32
    %c0_i32_1 = arith.constant 0 : i32
    return %c0_i32, %c0_i32_0 : i32, i32
  }
  func.func @transform_10(%arg0: i32) -> (i32, i32) {
    %c0_i32 = arith.constant 0 : i32
    %c0_i32_0 = arith.constant 0 : i32
    %c0_i32_1 = arith.constant 0 : i32
    return %c0_i32, %c0_i32_0 : i32, i32
  }
  func.func @transform_11(%arg0: i32) -> (i32, i32) {
    %c0_i32 = arith.constant 0 : i32
    %c0_i32_0 = arith.constant 0 : i32
    %c0_i32_1 = arith.constant 0 : i32
    return %c0_i32, %c0_i32_0 : i32, i32
  }
  func.func @transform_12(%arg0: i32) -> (i32, i32) {
    %c0_i32 = arith.constant 0 : i32
    %c0_i32_0 = arith.constant 0 : i32
    %c0_i32_1 = arith.constant 0 : i32
    return %c0_i32, %c0_i32_0 : i32, i32
  }
  func.func @transform_13(%arg0: i32) -> (i32, i32) {
    %c0_i32 = arith.constant 0 : i32
    %c0_i32_0 = arith.constant 0 : i32
    %c0_i32_1 = arith.constant 0 : i32
    return %c0_i32, %c0_i32_0 : i32, i32
  }
  func.func @transform_14(%arg0: i32) -> (i32, i32) {
    %c0_i32 = arith.constant 0 : i32
    %c0_i32_0 = arith.constant 0 : i32
    %c0_i32_1 = arith.constant 0 : i32
    return %c0_i32, %c0_i32_0 : i32, i32
  }
  func.func @transform_15(%arg0: i32) -> (i32, i32) {
    %c0_i32 = arith.constant 0 : i32
    %c0_i32_0 = arith.constant 0 : i32
    %c0_i32_1 = arith.constant 0 : i32
    return %c0_i32, %c0_i32_0 : i32, i32
  }
  func.func @transform_16(%arg0: i32) -> (i32, i32) {
    %c0_i32 = arith.constant 0 : i32
    %c0_i32_0 = arith.constant 0 : i32
    %c0_i32_1 = arith.constant 0 : i32
    return %c0_i32, %c0_i32_0 : i32, i32
  }
  func.func @transform_17(%arg0: i32) -> (i32, i32) {
    %c0_i32 = arith.constant 0 : i32
    %c0_i32_0 = arith.constant 0 : i32
    %c0_i32_1 = arith.constant 0 : i32
    return %c0_i32, %c0_i32_0 : i32, i32
  }
  func.func @transform_18(%arg0: i32) -> (i32, i32) {
    %c0_i32 = arith.constant 0 : i32
    %c0_i32_0 = arith.constant 0 : i32
    %c0_i32_1 = arith.constant 0 : i32
    return %c0_i32, %c0_i32_0 : i32, i32
  }
  func.func @transform_19(%arg0: i32) -> (i32, i32) {
    %c0_i32 = arith.constant 0 : i32
    %c0_i32_0 = arith.constant 0 : i32
    %c0_i32_1 = arith.constant 0 : i32
    return %c0_i32, %c0_i32_0 : i32, i32
  }
  func.func @transform_20(%arg0: i32) -> (i32, i32) {
    %c0_i32 = arith.constant 0 : i32
    %c0_i32_0 = arith.constant 0 : i32
    %c0_i32_1 = arith.constant 0 : i32
    return %c0_i32, %c0_i32_0 : i32, i32
  }
  func.func @transform_21(%arg0: i32) -> (i32, i32) {
    %c0_i32 = arith.constant 0 : i32
    %c0_i32_0 = arith.constant 0 : i32
    %c0_i32_1 = arith.constant 0 : i32
    return %c0_i32, %c0_i32_0 : i32, i32
  }
  func.func @transform_22(%arg0: i32) -> (i32, i32) {
    %c0_i32 = arith.constant 0 : i32
    %c0_i32_0 = arith.constant 0 : i32
    return %arg0, %c0_i32 : i32, i32
  }
}

</mosaic_0001>

<llo_original>
// kernel: transformer_forward.6
$region0: #{transformer_forward.6}
  #allocation0 [shape = 'u32[]', space=smem, size = 0x4, offset = 0x4, fixed_abs, tag = 'smem constant byte address 0x4 - core index']
  #allocation1 [shape = 'u32[144,128]{1,0:T(1,128)}', space=vmem, size = 0x12000, scoped, tag = 'internal scratch']
  %s0 = inlined_call_operand.vmem [shape: f32[16,8], index: 0, kind: input, shape index: {}]
  %s1 = inlined_call_operand.vmem [shape: bf16[8,32], index: 1, kind: input, shape index: {}]
  %s2 = inlined_call_operand.vmem [shape: f32[1,32], index: 2, kind: input, shape index: {}]
  %s3 = inlined_call_operand.vmem [shape: bf16[32,32], index: 3, kind: input, shape index: {}]
  %s4 = inlined_call_operand.vmem [shape: f32[1,32], index: 4, kind: input, shape index: {}]
  %s5 = inlined_call_operand.vmem [shape: f32[16,32], index: 5, kind: output, shape index: {}]
  %s6 = sld [smem:[#allocation0]]
  $region30: #{transformer_forward.6} parent=0
    _
  %s8 = ssub.s32 1, %s6
  %s9 = scalar_select 0, %s8, %s6
  // Predicated region
  $region2: #{transformer_forward.6} parent=0 // pred_check
    _
  $region3: #{transformer_forward.6} parent=0 // pred_check_branch
    %11 = sbr.rel (0) target = $region5
  $region4: #{transformer_forward.6} parent=0 // pred_region
    _
  $region5: #{transformer_forward.6} parent=0 // pred_fallthru
    _
  // Predicated region
  $region6: #{transformer_forward.6} parent=0 // pred_check
    _
  $region7: #{transformer_forward.6} parent=0 // pred_check_branch
    %13 = sbr.rel (0) target = $region9
  $region8: #{transformer_forward.6} parent=0 // pred_region
    _
  $region9: #{transformer_forward.6} parent=0 // pred_fallthru
    _
  // Predicated region
  $region10: #{transformer_forward.6} parent=0 // pred_check
    _
  $region11: #{transformer_forward.6} parent=0 // pred_check_branch
    %15 = sbr.rel (0) target = $region13
  $region12: #{transformer_forward.6} parent=0 // pred_region
    _
  $region13: #{transformer_forward.6} parent=0 // pred_fallthru
    _
  // Predicated region
  $region14: #{transformer_forward.6} parent=0 // pred_check
    _
  $region15: #{transformer_forward.6} parent=0 // pred_check_branch
    %17 = sbr.rel (0) target = $region17
  $region16: #{transformer_forward.6} parent=0 // pred_region
    _
  $region17: #{transformer_forward.6} parent=0 // pred_fallthru
    _
  // Predicated region
  $region18: #{transformer_forward.6} parent=0 // pred_check
    _
  $region19: #{transformer_forward.6} parent=0 // pred_check_branch
    %19 = sbr.rel (0) target = $region21
  $region20: #{transformer_forward.6} parent=0 // pred_region
    _
  $region21: #{transformer_forward.6} parent=0 // pred_fallthru
    _
  %v21 = vld [vmem:[%s0] sm:$0xff]
  %v22 = vld [vmem:[%s0 + $0x8] sm:$0xff]
  %v23 = vpack.c.bf16 %v22, %v21
  %v24 = vld [vmem:[%s1] sm:$0xf]
  %v25 = vld [vmem:[%s2] sm:$0x1]
  %v27 = vlaneseq
  %v28 = vshrl.u32 %v27, 7
  %v29 = vsub.s32 0, %v28
  %v30 = vrot.slane %v25, %v29
  %vm32 = vcmask 64512
  %v34 = vsel %vm32, %v23, 0
  %vm36 = vcmask 1043456
  %v38 = vsel %vm36, %v24, 0
  %40 = vmatprep.subr.bf16.mxu0 0
  %41 = vmatpush1.bf16.msra.mxu0 0
  %42 = vmatprep.subr.bf16.mxu0 0
  %43 = vmatpush1.bf16.msra.mxu0 0
  %44 = vmatprep.subr.bf16.mxu0 0
  %45 = vmatpush1.bf16.msra.mxu0 0
  %46 = vmatprep.subr.bf16.mxu0 0
  %47 = vmatpush1.bf16.msra.mxu0 0
  %48 = vmatprep.subr.bf16.mxu0 0
  %49 = vmatpush1.bf16.msra.mxu0 0
  %50 = vmatprep.subr.bf16.mxu0 0
  %51 = vmatpush1.bf16.msra.mxu0 0
  %52 = vmatprep.subr.bf16.mxu0 0
  %53 = vmatpush1.bf16.msra.mxu0 0
  %54 = vmatprep.subr.bf16.mxu0 0
  %55 = vmatpush1.bf16.msra.mxu0 %v38
  %56 = vmatprep.subr.bf16.mxu0 0
  %57 = vmatpush2.bf16.msra.mxu0 0
  %58 = vmatprep.subr.bf16.mxu0 0
  %59 = vmatpush2.bf16.msra.mxu0 0
  %60 = vmatprep.subr.bf16.mxu0 0
  %61 = vmatpush2.bf16.msra.mxu0 0
  %62 = vmatprep.subr.bf16.mxu0 0
  %63 = vmatpush2.bf16.msra.mxu0 0
  %64 = vmatprep.subr.bf16.mxu0 0
  %65 = vmatpush2.bf16.msra.mxu0 0
  %66 = vmatprep.subr.bf16.mxu0 0
  %67 = vmatpush2.bf16.msra.mxu0 0
  %68 = vmatprep.subr.bf16.mxu0 0
  %69 = vmatpush2.bf16.msra.mxu0 0
  %70 = vmatprep.subr.bf16.mxu0 0
  %71 = vmatpush2.bf16.msra.mxu0 0
  %72 = vmatprep.mubr.bf16.mxu0 0
  %73 = vmatmul.mubr.bf16.gmra.mxu0 %v34
  %v74 = vpop.f32.mrf.mxu0
  %v75 = vadd.f32 %v30, %v74
  %v76 = vpop.f32.mrf.mxu0
  %v77 = vpop.f32.mrf.mxu0
  %v78 = vadd.f32 %v30, %v77
  %v79 = vpop.f32.mrf.mxu0
  %80 = vdwg.mxu0
  %v81 = vmax.f32 %v75, 0.0
  %v82 = vmax.f32 %v78, 0.0
  %v83 = vpack.c.bf16 %v82, %v81
  %v84 = vld [vmem:[%s3] sm:$0xf]
  %v85 = vld [vmem:[%s3 + $0x4] sm:$0xf]
  %v86 = vld [vmem:[%s3 + $0x8] sm:$0xf]
  %v87 = vld [vmem:[%s3 + $0xc] sm:$0xf]
  %v88 = vld [vmem:[%s4] sm:$0x1]
  %v90 = vlaneseq
  %v91 = vshrl.u32 %v90, 7
  %v92 = vsub.s32 0, %v91
  %v93 = vrot.slane %v88, %v92
  %v99 = vunpack.c.l.b16 %v84
  %v100 = vunpack.c.l.b16 %v85
  %v101 = vunpack.c.l.b16 %v86
  %v102 = vunpack.c.l.b16 %v87
  %v103 = vpack.c.b16 %v100, %v99
  %v104 = vpack.c.b16 %v102, %v101
  %vm107 = vcmask 261120
  %v109 = vsel %vm107, %v83, 0
  %111 = vmatprep.subr.bf16.mxu0 0
  %112 = vmatpush1.bf16.msra.mxu0 0
  %113 = vmatprep.subr.bf16.mxu0 0
  %114 = vmatpush1.bf16.msra.mxu0 0
  %115 = vmatprep.subr.bf16.mxu0 0
  %116 = vmatpush1.bf16.msra.mxu0 0
  %117 = vmatprep.subr.bf16.mxu0 0
  %118 = vmatpush1.bf16.msra.mxu0 0
  %119 = vmatprep.subr.bf16.mxu0 0
  %120 = vmatpush1.bf16.msra.mxu0 0
  %121 = vmatprep.subr.bf16.mxu0 0
  %122 = vmatpush1.bf16.msra.mxu0 0
  %123 = vmatprep.subr.bf16.mxu0 0
  %124 = vmatpush1.bf16.msra.mxu0 %v104
  %125 = vmatprep.subr.bf16.mxu0 0
  %126 = vmatpush1.bf16.msra.mxu0 %v103
  %127 = vmatprep.subr.bf16.mxu0 0
  %128 = vmatpush2.bf16.msra.mxu0 0
  %129 = vmatprep.subr.bf16.mxu0 0
  %130 = vmatpush2.bf16.msra.mxu0 0
  %131 = vmatprep.subr.bf16.mxu0 0
  %132 = vmatpush2.bf16.msra.mxu0 0
  %133 = vmatprep.subr.bf16.mxu0 0
  %134 = vmatpush2.bf16.msra.mxu0 0
  %135 = vmatprep.subr.bf16.mxu0 0
  %136 = vmatpush2.bf16.msra.mxu0 0
  %137 = vmatprep.subr.bf16.mxu0 0
  %138 = vmatpush2.bf16.msra.mxu0 0
  %139 = vmatprep.subr.bf16.mxu0 0
  %140 = vmatpush2.bf16.msra.mxu0 0
  %141 = vmatprep.subr.bf16.mxu0 0
  %142 = vmatpush2.bf16.msra.mxu0 0
  %143 = vmatprep.mubr.bf16.mxu0 0
  %144 = vmatmul.mubr.bf16.gmra.mxu0 %v109
  %v145 = vpop.f32.mrf.mxu0
  %v146 = vadd.f32 %v93, %v145
  %v147 = vpop.f32.mrf.mxu0
  %v148 = vpop.f32.mrf.mxu0
  %v149 = vadd.f32 %v93, %v148
  %v150 = vpop.f32.mrf.mxu0
  %151 = vdwg.mxu0
  %152 = vst.msk [vmem:[%s5] sm:$0xff] %vm107, %v146
  %153 = vst.msk [vmem:[%s5 + $0x8] sm:$0xff] %vm107, %v149
  // Predicated region
  $region22: #{transformer_forward.6} parent=0 // pred_check
    _
  $region23: #{transformer_forward.6} parent=0 // pred_check_branch
    %155 = sbr.rel (0) target = $region25
  $region24: #{transformer_forward.6} parent=0 // pred_region
    _
  $region25: #{transformer_forward.6} parent=0 // pred_fallthru
    _
  // Predicated region
  $region26: #{transformer_forward.6} parent=0 // pred_check
    _
  $region27: #{transformer_forward.6} parent=0 // pred_check_branch
    %157 = sbr.rel (0) target = $region29
  $region28: #{transformer_forward.6} parent=0 // pred_region
    _
  $region29: #{transformer_forward.6} parent=0 // pred_fallthru
    _

// kernel: transformer_forward.7
$region0: #{transformer_forward.7}
  #allocation0 [shape = 'u32[]', space=smem, size = 0x4, offset = 0x4, fixed_abs, tag = 'smem constant byte address 0x4 - core index']
  #allocation1 [shape = 'u32[144,128]{1,0:T(1,128)}', space=vmem, size = 0x12000, scoped, tag = 'internal scratch']
  %s0 = inlined_call_operand.vmem [shape: f32[16,32], index: 0, kind: input, shape index: {}]
  %s1 = inlined_call_operand.vmem [shape: f32[1,32], index: 1, kind: input, shape index: {}]
  %s2 = inlined_call_operand.vmem [shape: f32[1,32], index: 2, kind: input, shape index: {}]
  %s3 = inlined_call_operand.vmem [shape: bf16[32,256], index: 3, kind: input, shape index: {}]
  %s4 = inlined_call_operand.vmem [shape: bf16[16,128], index: 4, kind: output, shape index: {0}]
  %s5 = inlined_call_operand.vmem [shape: bf16[16,128], index: 5, kind: output, shape index: {1}]
  %6 = xla_tuple %s4, %s5
  %s7 = sld [smem:[#allocation0]]
  $region34: #{transformer_forward.7} parent=0
    _
  %s9 = ssub.s32 1, %s7
  %s10 = scalar_select 0, %s9, %s7
  // Predicated region
  $region2: #{transformer_forward.7} parent=0 // pred_check
    _
  $region3: #{transformer_forward.7} parent=0 // pred_check_branch
    %12 = sbr.rel (0) target = $region5
  $region4: #{transformer_forward.7} parent=0 // pred_region
    _
  $region5: #{transformer_forward.7} parent=0 // pred_fallthru
    _
  // Predicated region
  $region6: #{transformer_forward.7} parent=0 // pred_check
    _
  $region7: #{transformer_forward.7} parent=0 // pred_check_branch
    %14 = sbr.rel (0) target = $region9
  $region8: #{transformer_forward.7} parent=0 // pred_region
    _
  $region9: #{transformer_forward.7} parent=0 // pred_fallthru
    _
  // Predicated region
  $region10: #{transformer_forward.7} parent=0 // pred_check
    _
  $region11: #{transformer_forward.7} parent=0 // pred_check_branch
    %16 = sbr.rel (0) target = $region13
  $region12: #{transformer_forward.7} parent=0 // pred_region
    _
  $region13: #{transformer_forward.7} parent=0 // pred_fallthru
    _
  // Predicated region
  $region14: #{transformer_forward.7} parent=0 // pred_check
    _
  $region15: #{transformer_forward.7} parent=0 // pred_check_branch
    %18 = sbr.rel (0) target = $region17
  $region16: #{transformer_forward.7} parent=0 // pred_region
    _
  $region17: #{transformer_forward.7} parent=0 // pred_fallthru
    _
  %v20 = vld [vmem:[%s0] sm:$0xff]
  %v21 = vld [vmem:[%s0 + $0x8] sm:$0xff]
  %v22 = vld [vmem:[%s1] sm:$0x1]
  %v23 = vld [vmem:[%s2] sm:$0x1]
  %vm24 = vcmask 261120
  %v25 = vsel %vm24, %v20, 0.0
  %26 = vadd.xlane.f32.xlu0 %v25
  %v27 = vpop.xlane.xlu0 %26
  %v28 = vsel %vm24, %v21, 0.0
  %29 = vadd.xlane.f32.xlu0 %v28
  %v30 = vpop.xlane.xlu0 %29
  %v31 = vrcp.pop 32.0
  %v32 = vmul.f32 %v27, %v31
  %v33 = vmul.f32 %v30, %v31
  %v34 = vsub.f32 %v20, %v32
  %v35 = vsub.f32 %v21, %v33
  %v36 = vmul.f32 %v34, %v34
  %v37 = vmul.f32 %v35, %v35
  %v38 = vsel %vm24, %v36, 0.0
  %39 = vadd.xlane.f32.xlu0 %v38
  %v40 = vpop.xlane.xlu0 %39
  %v41 = vsel %vm24, %v37, 0.0
  %42 = vadd.xlane.f32.xlu0 %v41
  %v43 = vpop.xlane.xlu0 %42
  %v44 = vmul.f32 %v40, %v31
  %v45 = vmul.f32 %v43, %v31
  %v46 = vadd.f32 %v44, 1e-05
  %v47 = vadd.f32 %v45, 1e-05
  %v48 = vrsqrt.pop %v46
  %v49 = vrsqrt.pop %v47
  %v50 = vmul.f32 %v34, %v48
  %v51 = vmul.f32 %v35, %v49
  %v53 = vlaneseq
  %v54 = vshrl.u32 %v53, 7
  %v55 = vsub.s32 0, %v54
  %v56 = vrot.slane %v22, %v55
  %v58 = vmul.f32 %v50, %v56
  %v59 = vmul.f32 %v51, %v56
  %v61 = vlaneseq
  %v62 = vshrl.u32 %v61, 7
  %v63 = vsub.s32 0, %v62
  %v64 = vrot.slane %v23, %v63
  %v66 = vadd.f32 %v58, %v64
  %v67 = vadd.f32 %v59, %v64
  %v68 = vpack.c.bf16 %v67, %v66
  %v69 = vld [vmem:[%s3] sm:$0xff]
  %v70 = vld [vmem:[%s3 + $0x8] sm:$0xff]
  %v71 = vld [vmem:[%s3 + $0x10] sm:$0xff]
  %v72 = vld [vmem:[%s3 + $0x18] sm:$0xff]
  %v77 = vunpack.c.l.b16 %v69
  %v78 = vunpack.c.h.b16 %v69
  %v79 = vunpack.c.l.b16 %v70
  %v80 = vunpack.c.h.b16 %v70
  %v81 = vunpack.c.l.b16 %v71
  %v82 = vunpack.c.h.b16 %v71
  %v83 = vunpack.c.l.b16 %v72
  %v84 = vunpack.c.h.b16 %v72
  %v85 = vpack.c.b16 %v79, %v77
  %v86 = vpack.c.b16 %v80, %v78
  %v87 = vpack.c.b16 %v83, %v81
  %v88 = vpack.c.b16 %v84, %v82
  %v94 = vsel %vm24, %v68, 0
  %96 = vmatprep.subr.bf16.mxu0 0
  %97 = vmatpush1.bf16.msra.mxu0 0
  %98 = vmatprep.subr.bf16.mxu0 0
  %99 = vmatpush1.bf16.msra.mxu0 0
  %100 = vmatprep.subr.bf16.mxu0 0
  %101 = vmatpush1.bf16.msra.mxu0 0
  %102 = vmatprep.subr.bf16.mxu0 0
  %103 = vmatpush1.bf16.msra.mxu0 0
  %104 = vmatprep.subr.bf16.mxu0 0
  %105 = vmatpush1.bf16.msra.mxu0 0
  %106 = vmatprep.subr.bf16.mxu0 0
  %107 = vmatpush1.bf16.msra.mxu0 0
  %108 = vmatprep.subr.bf16.mxu0 %v88
  %109 = vmatpush1.bf16.msra.mxu0 %v87
  %110 = vmatprep.subr.bf16.mxu0 %v86
  %111 = vmatpush1.bf16.msra.mxu0 %v85
  %112 = vmatprep.subr.bf16.mxu0 0
  %113 = vmatpush2.bf16.msra.mxu0 0
  %114 = vmatprep.subr.bf16.mxu0 0
  %115 = vmatpush2.bf16.msra.mxu0 0
  %116 = vmatprep.subr.bf16.mxu0 0
  %117 = vmatpush2.bf16.msra.mxu0 0
  %118 = vmatprep.subr.bf16.mxu0 0
  %119 = vmatpush2.bf16.msra.mxu0 0
  %120 = vmatprep.subr.bf16.mxu0 0
  %121 = vmatpush2.bf16.msra.mxu0 0
  %122 = vmatprep.subr.bf16.mxu0 0
  %123 = vmatpush2.bf16.msra.mxu0 0
  %124 = vmatprep.subr.bf16.mxu0 0
  %125 = vmatpush2.bf16.msra.mxu0 0
  %126 = vmatprep.subr.bf16.mxu0 0
  %127 = vmatpush2.bf16.msra.mxu0 0
  %128 = vmatprep.mubr.bf16.mxu0 0
  %129 = vmatmul.mubr.bf16.gmra.mxu0 %v94
  %v130 = vpop.f32.mrf.mxu0
  %v131 = vadd.f32 0.0, %v130
  %v132 = vpop.f32.mrf.mxu0
  %v133 = vadd.f32 0.0, %v132
  %v134 = vpop.f32.mrf.mxu0
  %v135 = vadd.f32 0.0, %v134
  %v136 = vpop.f32.mrf.mxu0
  %v137 = vadd.f32 0.0, %v136
  %138 = vdwg.mxu0
  %v139 = vpack.c.bf16 %v135, %v131
  %v141 = vunpack.c.l.b16 %v139
  %v142 = vunpack.c.h.b16 %v139
  %v143 = vpack.c.b16 %v141, %v141
  %v144 = vpack.c.b16 %v142, %v142
  %147 = vst [vmem:[%s4] sm:$0xf] %v143
  %148 = vst [vmem:[%s4 + $0x4] sm:$0xf] %v144
  %v149 = vpack.c.bf16 %v137, %v133
  %v151 = vunpack.c.l.b16 %v149
  %v152 = vunpack.c.h.b16 %v149
  %v153 = vpack.c.b16 %v151, %v151
  %v154 = vpack.c.b16 %v152, %v152
  %157 = vst [vmem:[%s5] sm:$0xf] %v153
  %158 = vst [vmem:[%s5 + $0x4] sm:$0xf] %v154
  // Predicated region
  $region18: #{transformer_forward.7} parent=0 // pred_check
    _
  $region19: #{transformer_forward.7} parent=0 // pred_check_branch
    %160 = sbr.rel (0) target = $region21
  $region20: #{transformer_forward.7} parent=0 // pred_region
    _
  $region21: #{transformer_forward.7} parent=0 // pred_fallthru
    _
  // Predicated region
  $region22: #{transformer_forward.7} parent=0 // pred_check
    _
  $region23: #{transformer_forward.7} parent=0 // pred_check_branch
    %162 = sbr.rel (0) target = $region25
  $region24: #{transformer_forward.7} parent=0 // pred_region
    _
  $region25: #{transformer_forward.7} parent=0 // pred_fallthru
    _
  // Predicated region
  $region26: #{transformer_forward.7} parent=0 // pred_check
    _
  $region27: #{transformer_forward.7} parent=0 // pred_check_branch
    %164 = sbr.rel (0) target = $region29
  $region28: #{transformer_forward.7} parent=0 // pred_region
    _
  $region29: #{transformer_forward.7} parent=0 // pred_fallthru
    _
  // Predicated region
  $region30: #{transformer_forward.7} parent=0 // pred_check
    _
  $region31: #{transformer_forward.7} parent=0 // pred_check_branch
    %166 = sbr.rel (0) target = $region33
  $region32: #{transformer_forward.7} parent=0 // pred_region
    _
  $region33: #{transformer_forward.7} parent=0 // pred_fallthru
    _

// kernel: transformer_forward.8
$region0: #{transformer_forward.8}
  #allocation0 [shape = 'u32[]', space=smem, size = 0x4, offset = 0x4, fixed_abs, tag = 'smem constant byte address 0x4 - core index']
  #allocation1 [shape = 'u32[144,128]{1,0:T(1,128)}', space=vmem, size = 0x12000, scoped, tag = 'internal scratch']
  #allocation2 [shape = 'bf16[16,128]{1,0:T(8,128)(2,1)}', space=vmem, size = 0x1000, scoped, tag = 'scratch operand']
  #allocation3 [shape = 'f32[16,4]{1,0:T(8,128)}', space=vmem, size = 0x2000, scoped, tag = 'scratch operand']
  #allocation4 [shape = 'f32[16,4]{1,0:T(8,128)}', space=vmem, size = 0x2000, scoped, tag = 'scratch operand']
  #allocation5 [shape = 'f32[16,128]{1,0:T(8,128)}', space=vmem, size = 0x2000, scoped, tag = 'scratch operand']
  %s0 = inlined_call_operand.vmem [shape: f32[16,32], index: 0, kind: input, shape index: {}]
  %s1 = inlined_call_operand.vmem [shape: f32[1,32], index: 1, kind: input, shape index: {}]
  %s2 = inlined_call_operand.vmem [shape: f32[1,32], index: 2, kind: input, shape index: {}]
  %s3 = inlined_call_operand.vmem [shape: bf16[32,128], index: 3, kind: input, shape index: {}]
  %s4 = inlined_call_operand.vmem [shape: bf16[16,128], index: 4, kind: input, shape index: {}]
  %s5 = inlined_call_operand.vmem [shape: bf16[16,128], index: 5, kind: input, shape index: {}]
  %s6 = inlined_call_operand.vmem [shape: bf16[128,32], index: 6, kind: input, shape index: {}]
  %s7 = inlined_call_operand.vmem [shape: f32[1,32], index: 7, kind: input, shape index: {}]
  %s8 = inlined_call_operand.vmem [shape: f32[1,32], index: 8, kind: input, shape index: {}]
  %s9 = inlined_call_operand.vmem [shape: bf16[32,32], index: 9, kind: input, shape index: {}]
  %s10 = inlined_call_operand.vmem [shape: f32[1,32], index: 10, kind: input, shape index: {}]
  %s11 = inlined_call_operand.vmem [shape: bf16[32,32], index: 11, kind: input, shape index: {}]
  %s12 = inlined_call_operand.vmem [shape: f32[1,32], index: 12, kind: input, shape index: {}]
  %s13 = inlined_call_operand.vmem [shape: f32[16,32], index: 13, kind: output, shape index: {}]
  %s14 = sld [smem:[#allocation0]]
  $region70: #{transformer_forward.8} parent=0
    _
  %s16 = ssub.s32 1, %s14
  %s17 = scalar_select 0, %s16, %s14
  // Predicated region
  $region2: #{transformer_forward.8} parent=0 // pred_check
    _
  $region3: #{transformer_forward.8} parent=0 // pred_check_branch
    %19 = sbr.rel (0) target = $region5
  $region4: #{transformer_forward.8} parent=0 // pred_region
    _
  $region5: #{transformer_forward.8} parent=0 // pred_fallthru
    _
  // Predicated region
  $region6: #{transformer_forward.8} parent=0 // pred_check
    _
  $region7: #{transformer_forward.8} parent=0 // pred_check_branch
    %21 = sbr.rel (0) target = $region9
  $region8: #{transformer_forward.8} parent=0 // pred_region
    _
  $region9: #{transformer_forward.8} parent=0 // pred_fallthru
    _
  // Predicated region
  $region10: #{transformer_forward.8} parent=0 // pred_check
    _
  $region11: #{transformer_forward.8} parent=0 // pred_check_branch
    %23 = sbr.rel (0) target = $region13
  $region12: #{transformer_forward.8} parent=0 // pred_region
    _
  $region13: #{transformer_forward.8} parent=0 // pred_fallthru
    _
  // Predicated region
  $region14: #{transformer_forward.8} parent=0 // pred_check
    _
  $region15: #{transformer_forward.8} parent=0 // pred_check_branch
    %25 = sbr.rel (0) target = $region17
  $region16: #{transformer_forward.8} parent=0 // pred_region
    _
  $region17: #{transformer_forward.8} parent=0 // pred_fallthru
    _
  // Predicated region
  $region18: #{transformer_forward.8} parent=0 // pred_check
    _
  $region19: #{transformer_forward.8} parent=0 // pred_check_branch
    %27 = sbr.rel (0) target = $region21
  $region20: #{transformer_forward.8} parent=0 // pred_region
    _
  $region21: #{transformer_forward.8} parent=0 // pred_fallthru
    _
  // Predicated region
  $region22: #{transformer_forward.8} parent=0 // pred_check
    _
  $region23: #{transformer_forward.8} parent=0 // pred_check_branch
    %29 = sbr.rel (0) target = $region25
  $region24: #{transformer_forward.8} parent=0 // pred_region
    _
  $region25: #{transformer_forward.8} parent=0 // pred_fallthru
    _
  // Predicated region
  $region26: #{transformer_forward.8} parent=0 // pred_check
    _
  $region27: #{transformer_forward.8} parent=0 // pred_check_branch
    %31 = sbr.rel (0) target = $region29
  $region28: #{transformer_forward.8} parent=0 // pred_region
    _
  $region29: #{transformer_forward.8} parent=0 // pred_fallthru
    _
  // Predicated region
  $region30: #{transformer_forward.8} parent=0 // pred_check
    _
  $region31: #{transformer_forward.8} parent=0 // pred_check_branch
    %33 = sbr.rel (0) target = $region33
  $region32: #{transformer_forward.8} parent=0 // pred_region
    _
  $region33: #{transformer_forward.8} parent=0 // pred_fallthru
    _
  // Predicated region
  $region34: #{transformer_forward.8} parent=0 // pred_check
    _
  $region35: #{transformer_forward.8} parent=0 // pred_check_branch
    %35 = sbr.rel (0) target = $region37
  $region36: #{transformer_forward.8} parent=0 // pred_region
    _
  $region37: #{transformer_forward.8} parent=0 // pred_fallthru
    _
  // Predicated region
  $region38: #{transformer_forward.8} parent=0 // pred_check
    _
  $region39: #{transformer_forward.8} parent=0 // pred_check_branch
    %37 = sbr.rel (0) target = $region41
  $region40: #{transformer_forward.8} parent=0 // pred_region
    _
  $region41: #{transformer_forward.8} parent=0 // pred_fallthru
    _
  // Predicated region
  $region42: #{transformer_forward.8} parent=0 // pred_check
    _
  $region43: #{transformer_forward.8} parent=0 // pred_check_branch
    %39 = sbr.rel (0) target = $region45
  $region44: #{transformer_forward.8} parent=0 // pred_region
    _
  $region45: #{transformer_forward.8} parent=0 // pred_fallthru
    _
  // Predicated region
  $region46: #{transformer_forward.8} parent=0 // pred_check
    _
  $region47: #{transformer_forward.8} parent=0 // pred_check_branch
    %41 = sbr.rel (0) target = $region49
  $region48: #{transformer_forward.8} parent=0 // pred_region
    _
  $region49: #{transformer_forward.8} parent=0 // pred_fallthru
    _
  // Predicated region
  $region50: #{transformer_forward.8} parent=0 // pred_check
    _
  $region51: #{transformer_forward.8} parent=0 // pred_check_branch
    %43 = sbr.rel (0) target = $region53
  $region52: #{transformer_forward.8} parent=0 // pred_region
    _
  $region53: #{transformer_forward.8} parent=0 // pred_fallthru
    _
  %p45 = scmp.eq.s32.totalorder 0, 0
  // Predicated region
  $region54: #{transformer_forward.8} parent=0 // pred_check
    %p46 = pneg %p45
  $region55: #{transformer_forward.8} parent=0 // pred_check_branch
    %48 = sbr.rel (%p46) target = $region57
  $region56: #{transformer_forward.8} parent=0 // pred_region
    %vm49 = vcmask 31744
    %50 = vst.msk [vmem:[#allocation3] sm:$0xff] %vm49, -inf
    %51 = vst.msk [vmem:[#allocation3 + $0x8] sm:$0xff] %vm49, -inf
    %52 = vst.msk [vmem:[#allocation4] sm:$0xff] %vm49, 0.0
    %53 = vst.msk [vmem:[#allocation4 + $0x8] sm:$0xff] %vm49, 0.0
    %54 = vst [vmem:[#allocation5] sm:$0xff] 0.0
    %55 = vst [vmem:[#allocation5 + $0x8] sm:$0xff] 0.0
    %v56 = vld [vmem:[%s0] sm:$0xff]
    %v57 = vld [vmem:[%s0 + $0x8] sm:$0xff]
    %v58 = vld [vmem:[%s1] sm:$0x1]
    %v59 = vld [vmem:[%s2] sm:$0x1]
    %vm60 = vcmask 261120
    %v61 = vsel %vm60, %v56, 0.0
    %62 = vadd.xlane.f32.xlu0 %v61
    %v63 = vpop.xlane.xlu0 %62
    %v64 = vsel %vm60, %v57, 0.0
    %65 = vadd.xlane.f32.xlu0 %v64
    %v66 = vpop.xlane.xlu0 %65
    %v67 = vrcp.pop 32.0
    %v68 = vmul.f32 %v63, %v67
    %v69 = vmul.f32 %v66, %v67
    %v70 = vsub.f32 %v56, %v68
    %v71 = vsub.f32 %v57, %v69
    %v72 = vmul.f32 %v70, %v70
    %v73 = vmul.f32 %v71, %v71
    %v74 = vsel %vm60, %v72, 0.0
    %75 = vadd.xlane.f32.xlu0 %v74
    %v76 = vpop.xlane.xlu0 %75
    %v77 = vsel %vm60, %v73, 0.0
    %78 = vadd.xlane.f32.xlu0 %v77
    %v79 = vpop.xlane.xlu0 %78
    %v80 = vmul.f32 %v76, %v67
    %v81 = vmul.f32 %v79, %v67
    %v82 = vadd.f32 %v80, 1e-05
    %v83 = vadd.f32 %v81, 1e-05
    %v84 = vrsqrt.pop %v82
    %v85 = vrsqrt.pop %v83
    %v86 = vmul.f32 %v70, %v84
    %v87 = vmul.f32 %v71, %v85
    %v89 = vlaneseq
    %v90 = vshrl.u32 %v89, 7
    %v91 = vsub.s32 0, %v90
    %v92 = vrot.slane %v58, %v91
    %v94 = vmul.f32 %v86, %v92
    %v95 = vmul.f32 %v87, %v92
    %v97 = vlaneseq
    %v98 = vshrl.u32 %v97, 7
    %v99 = vsub.s32 0, %v98
    %v100 = vrot.slane %v59, %v99
    %v102 = vadd.f32 %v94, %v100
    %v103 = vadd.f32 %v95, %v100
    %v104 = vpack.c.bf16 %v103, %v102
    %v105 = vld [vmem:[%s3] sm:$0xf]
    %v106 = vld [vmem:[%s3 + $0x4] sm:$0xf]
    %v107 = vld [vmem:[%s3 + $0x8] sm:$0xf]
    %v108 = vld [vmem:[%s3 + $0xc] sm:$0xf]
    %v113 = vunpack.c.l.b16 %v105
    %v114 = vunpack.c.l.b16 %v106
    %v115 = vunpack.c.l.b16 %v107
    %v116 = vunpack.c.l.b16 %v108
    %v117 = vpack.c.b16 %v114, %v113
    %v118 = vpack.c.b16 %v116, %v115
    %v122 = vsel %vm60, %v104, 0
    %124 = vmatprep.subr.bf16.mxu0 0
    %125 = vmatpush1.bf16.msra.mxu0 0
    %126 = vmatprep.subr.bf16.mxu0 0
    %127 = vmatpush1.bf16.msra.mxu0 0
    %128 = vmatprep.subr.bf16.mxu0 0
    %129 = vmatpush1.bf16.msra.mxu0 0
    %130 = vmatprep.subr.bf16.mxu0 0
    %131 = vmatpush1.bf16.msra.mxu0 0
    %132 = vmatprep.subr.bf16.mxu0 0
    %133 = vmatpush1.bf16.msra.mxu0 0
    %134 = vmatprep.subr.bf16.mxu0 0
    %135 = vmatpush1.bf16.msra.mxu0 0
    %136 = vmatprep.subr.bf16.mxu0 0
    %137 = vmatpush1.bf16.msra.mxu0 %v118
    %138 = vmatprep.subr.bf16.mxu0 0
    %139 = vmatpush1.bf16.msra.mxu0 %v117
    %140 = vmatprep.subr.bf16.mxu0 0
    %141 = vmatpush2.bf16.msra.mxu0 0
    %142 = vmatprep.subr.bf16.mxu0 0
    %143 = vmatpush2.bf16.msra.mxu0 0
    %144 = vmatprep.subr.bf16.mxu0 0
    %145 = vmatpush2.bf16.msra.mxu0 0
    %146 = vmatprep.subr.bf16.mxu0 0
    %147 = vmatpush2.bf16.msra.mxu0 0
    %148 = vmatprep.subr.bf16.mxu0 0
    %149 = vmatpush2.bf16.msra.mxu0 0
    %150 = vmatprep.subr.bf16.mxu0 0
    %151 = vmatpush2.bf16.msra.mxu0 0
    %152 = vmatprep.subr.bf16.mxu0 0
    %153 = vmatpush2.bf16.msra.mxu0 0
    %154 = vmatprep.subr.bf16.mxu0 0
    %155 = vmatpush2.bf16.msra.mxu0 0
    %156 = vmatprep.mubr.bf16.mxu0 0
    %157 = vmatmul.mubr.bf16.gmra.mxu0 %v122
    %v158 = vpop.f32.mrf.mxu0
    %v159 = vadd.f32 0.0, %v158
    %v160 = vpop.f32.mrf.mxu0
    %v161 = vpop.f32.mrf.mxu0
    %v162 = vadd.f32 0.0, %v161
    %v163 = vpop.f32.mrf.mxu0
    %164 = vdwg.mxu0
    %v165 = vmul.f32 %v159, 0.17677669
    %v166 = vmul.f32 %v162, 0.17677669
    %v167 = vpack.c.bf16 %v166, %v165
    %v169 = vunpack.c.l.b16 %v167
    %v170 = vunpack.c.h.b16 %v167
    %v171 = vpack.c.b16 %v169, %v169
    %v172 = vpack.c.b16 %v170, %v170
    %175 = vst [vmem:[#allocation2] sm:$0xf] %v171
    %176 = vst [vmem:[#allocation2 + $0x4] sm:$0xf] %v172
  $region57: #{transformer_forward.8} parent=0 // pred_fallthru
    _
  %v177 = vld [vmem:[%s4] sm:$0xf]
  %v178 = vld [vmem:[%s4 + $0x4] sm:$0xf]
  %v179 = vld [vmem:[%s5] sm:$0xf]
  %v180 = vld [vmem:[%s5 + $0x4] sm:$0xf]
  %v181 = vld [vmem:[#allocation2] sm:$0xf]
  %v182 = vld [vmem:[#allocation2 + $0x4] sm:$0xf]
  %v185 = vunpack.c.l.b16 %v181
  %v186 = vunpack.c.l.b16 %v182
  %v187 = vpack.c.b16 %v186, %v185
  %v190 = vunpack.c.l.b16 %v177
  %v191 = vunpack.c.l.b16 %v178
  %v192 = vpack.c.b16 %v191, %v190
  %vm193 = vcmask 261120
  %v195 = vsel %vm193, %v187, 0
  %v198 = vsel %vm193, %v192, 0
  %200 = vmatprep.subr.bf16.mxu0 0
  %201 = vmatpush1.bf16.xpose.msra.mxu0 0
  %202 = vmatprep.subr.bf16.mxu0 0
  %203 = vmatpush1.bf16.xpose.msra.mxu0 0
  %204 = vmatprep.subr.bf16.mxu0 0
  %205 = vmatpush1.bf16.xpose.msra.mxu0 0
  %206 = vmatprep.subr.bf16.mxu0 0
  %207 = vmatpush1.bf16.xpose.msra.mxu0 0
  %208 = vmatprep.subr.bf16.mxu0 0
  %209 = vmatpush1.bf16.xpose.msra.mxu0 0
  %210 = vmatprep.subr.bf16.mxu0 0
  %211 = vmatpush1.bf16.xpose.msra.mxu0 0
  %212 = vmatprep.subr.bf16.mxu0 0
  %213 = vmatpush1.bf16.xpose.msra.mxu0 0
  %214 = vmatprep.subr.bf16.mxu0 0
  %215 = vmatpush1.bf16.xpose.msra.mxu0 %v198
  %216 = vmatprep.subr.bf16.mxu0 0
  %217 = vmatpush2.bf16.xpose.msra.mxu0 0
  %218 = vmatprep.subr.bf16.mxu0 0
  %219 = vmatpush2.bf16.xpose.msra.mxu0 0
  %220 = vmatprep.subr.bf16.mxu0 0
  %221 = vmatpush2.bf16.xpose.msra.mxu0 0
  %222 = vmatprep.subr.bf16.mxu0 0
  %223 = vmatpush2.bf16.xpose.msra.mxu0 0
  %224 = vmatprep.subr.bf16.mxu0 0
  %225 = vmatpush2.bf16.xpose.msra.mxu0 0
  %226 = vmatprep.subr.bf16.mxu0 0
  %227 = vmatpush2.bf16.xpose.msra.mxu0 0
  %228 = vmatprep.subr.bf16.mxu0 0
  %229 = vmatpush2.bf16.xpose.msra.mxu0 0
  %230 = vmatprep.subr.bf16.mxu0 0
  %231 = vmatpush2.bf16.xpose.msra.mxu0 0
  %232 = vmatprep.mubr.bf16.mxu0 0
  %233 = vmatmul.mubr.bf16.gmra.mxu0 %v195
  %v234 = vpop.f32.mrf.mxu0
  %v235 = vadd.f32 0.0, %v234
  %v236 = vpop.f32.mrf.mxu0
  %v237 = vpop.f32.mrf.mxu0
  %v238 = vadd.f32 0.0, %v237
  %v239 = vpop.f32.mrf.mxu0
  %240 = vdwg.mxu0
  %v241 = vld [vmem:[#allocation3] sm:$0xff]
  %v242 = vld [vmem:[#allocation3 + $0x8] sm:$0xff]
  %vm243 = vcmask 130048
  %v244 = vsel %vm243, %v235, -inf
  %245 = vmax.xlane.f32.xlu0 %v244
  %v246 = vpop.xlane.xlu0 %245
  %v247 = vsel %vm243, %v238, -inf
  %248 = vmax.xlane.f32.xlu0 %v247
  %v249 = vpop.xlane.xlu0 %248
  %v250 = vmax.f32 %v241, %v246
  %v251 = vmax.f32 %v242, %v249
  %v252 = vsub.f32 %v241, %v250
  %v253 = vsub.f32 %v242, %v251
  %v254 = vmul.f32 %v252, 1.442695
  %v255 = vpow.pop %v254
  %v256 = vmul.f32 %v253, 1.442695
  %v257 = vpow.pop %v256
  %259 = vset.pattern.permute.xlu0 0
  %260 = vperm.xlu0 %259, %v250
  %v261 = vpop.permute.xlu0 %260
  %264 = vset.pattern.permute.xlu0 0
  %265 = vperm.xlu0 %264, %v251
  %v266 = vpop.permute.xlu0 %265
  %v268 = vsub.f32 %v235, %v261
  %v269 = vsub.f32 %v238, %v266
  %v270 = vmul.f32 %v268, 1.442695
  %v271 = vpow.pop %v270
  %v272 = vmul.f32 %v269, 1.442695
  %v273 = vpow.pop %v272
  %v274 = vld [vmem:[#allocation4] sm:$0xff]
  %v275 = vld [vmem:[#allocation4 + $0x8] sm:$0xff]
  %v276 = vmul.f32 %v255, %v274
  %v277 = vmul.f32 %v257, %v275
  %v278 = vsel %vm243, %v271, 0.0
  %279 = vadd.xlane.f32.xlu0 %v278
  %v280 = vpop.xlane.xlu0 %279
  %v281 = vsel %vm243, %v273, 0.0
  %282 = vadd.xlane.f32.xlu0 %v281
  %v283 = vpop.xlane.xlu0 %282
  %v284 = vadd.f32 %v276, %v280
  %v285 = vadd.f32 %v277, %v283
  %vm286 = vcmask 7168
  %287 = vst.msk [vmem:[#allocation4] sm:$0xff] %vm286, %v284
  %288 = vst.msk [vmem:[#allocation4 + $0x8] sm:$0xff] %vm286, %v285
  %v289 = vld [vmem:[#allocation5] sm:$0xff]
  %v290 = vld [vmem:[#allocation5 + $0x8] sm:$0xff]
  %292 = vset.pattern.permute.xlu0 0
  %293 = vperm.xlu0 %292, %v255
  %v294 = vpop.permute.xlu0 %293
  %297 = vset.pattern.permute.xlu0 0
  %298 = vperm.xlu0 %297, %v257
  %v299 = vpop.permute.xlu0 %298
  %v301 = vmul.f32 %v294, %v289
  %v302 = vmul.f32 %v299, %v290
  %v303 = vpack.c.bf16 %v273, %v271
  %v306 = vunpack.c.l.b16 %v179
  %v307 = vunpack.c.l.b16 %v180
  %v308 = vpack.c.b16 %v307, %v306
  %v311 = vsel %vm243, %v303, 0
  %313 = vmatprep.subr.bf16.mxu0 0
  %314 = vmatpush1.bf16.msra.mxu0 0
  %315 = vmatprep.subr.bf16.mxu0 0
  %316 = vmatpush1.bf16.msra.mxu0 0
  %317 = vmatprep.subr.bf16.mxu0 0
  %318 = vmatpush1.bf16.msra.mxu0 0
  %319 = vmatprep.subr.bf16.mxu0 0
  %320 = vmatpush1.bf16.msra.mxu0 0
  %321 = vmatprep.subr.bf16.mxu0 0
  %322 = vmatpush1.bf16.msra.mxu0 0
  %323 = vmatprep.subr.bf16.mxu0 0
  %324 = vmatpush1.bf16.msra.mxu0 0
  %325 = vmatprep.subr.bf16.mxu0 0
  %326 = vmatpush1.bf16.msra.mxu0 0
  %327 = vmatprep.subr.bf16.mxu0 0
  %328 = vmatpush1.bf16.msra.mxu0 %v308
  %329 = vmatprep.subr.bf16.mxu0 0
  %330 = vmatpush2.bf16.msra.mxu0 0
  %331 = vmatprep.subr.bf16.mxu0 0
  %332 = vmatpush2.bf16.msra.mxu0 0
  %333 = vmatprep.subr.bf16.mxu0 0
  %334 = vmatpush2.bf16.msra.mxu0 0
  %335 = vmatprep.subr.bf16.mxu0 0
  %336 = vmatpush2.bf16.msra.mxu0 0
  %337 = vmatprep.subr.bf16.mxu0 0
  %338 = vmatpush2.bf16.msra.mxu0 0
  %339 = vmatprep.subr.bf16.mxu0 0
  %340 = vmatpush2.bf16.msra.mxu0 0
  %341 = vmatprep.subr.bf16.mxu0 0
  %342 = vmatpush2.bf16.msra.mxu0 0
  %343 = vmatprep.subr.bf16.mxu0 0
  %344 = vmatpush2.bf16.msra.mxu0 0
  %345 = vmatprep.mubr.bf16.mxu0 0
  %346 = vmatmul.mubr.bf16.gmra.mxu0 %v311
  %v347 = vpop.f32.mrf.mxu0
  %v348 = vadd.f32 0.0, %v347
  %v349 = vpop.f32.mrf.mxu0
  %v350 = vpop.f32.mrf.mxu0
  %v351 = vadd.f32 0.0, %v350
  %v352 = vpop.f32.mrf.mxu0
  %353 = vdwg.mxu0
  %v354 = vadd.f32 %v301, %v348
  %v355 = vadd.f32 %v302, %v351
  %356 = vst.msk [vmem:[#allocation5] sm:$0xff] %vm193, %v354
  %357 = vst.msk [vmem:[#allocation5 + $0x8] sm:$0xff] %vm193, %v355
  %358 = vst.msk [vmem:[#allocation3] sm:$0xff] %vm286, %v250
  %359 = vst.msk [vmem:[#allocation3 + $0x8] sm:$0xff] %vm286, %v251
  %v360 = vld [vmem:[#allocation2] sm:$0xf]
  %v361 = vld [vmem:[#allocation2 + $0x4] sm:$0xf]
  %v364 = vunpack.c.l.b16 %v360
  %v365 = vunpack.c.l.b16 %v361
  %v366 = vpack.c.b16 %v365, %v364
  %367 = vrot.lane.b32.xlu0 %v366, 96
  %v368 = vpop.permute.xlu0 %367
  %369 = vrot.lane.b32.xlu0 %v192, 96
  %v370 = vpop.permute.xlu0 %369
  %v372 = vsel %vm193, %v368, 0
  %v375 = vsel %vm193, %v370, 0
  %377 = vmatprep.subr.bf16.mxu0 0
  %378 = vmatpush1.bf16.xpose.msra.mxu0 0
  %379 = vmatprep.subr.bf16.mxu0 0
  %380 = vmatpush1.bf16.xpose.msra.mxu0 0
  %381 = vmatprep.subr.bf16.mxu0 0
  %382 = vmatpush1.bf16.xpose.msra.mxu0 0
  %383 = vmatprep.subr.bf16.mxu0 0
  %384 = vmatpush1.bf16.xpose.msra.mxu0 0
  %385 = vmatprep.subr.bf16.mxu0 0
  %386 = vmatpush1.bf16.xpose.msra.mxu0 0
  %387 = vmatprep.subr.bf16.mxu0 0
  %388 = vmatpush1.bf16.xpose.msra.mxu0 0
  %389 = vmatprep.subr.bf16.mxu0 0
  %390 = vmatpush1.bf16.xpose.msra.mxu0 0
  %391 = vmatprep.subr.bf16.mxu0 0
  %392 = vmatpush1.bf16.xpose.msra.mxu0 %v375
  %393 = vmatprep.subr.bf16.mxu0 0
  %394 = vmatpush2.bf16.xpose.msra.mxu0 0
  %395 = vmatprep.subr.bf16.mxu0 0
  %396 = vmatpush2.bf16.xpose.msra.mxu0 0
  %397 = vmatprep.subr.bf16.mxu0 0
  %398 = vmatpush2.bf16.xpose.msra.mxu0 0
  %399 = vmatprep.subr.bf16.mxu0 0
  %400 = vmatpush2.bf16.xpose.msra.mxu0 0
  %401 = vmatprep.subr.bf16.mxu0 0
  %402 = vmatpush2.bf16.xpose.msra.mxu0 0
  %403 = vmatprep.subr.bf16.mxu0 0
  %404 = vmatpush2.bf16.xpose.msra.mxu0 0
  %405 = vmatprep.subr.bf16.mxu0 0
  %406 = vmatpush2.bf16.xpose.msra.mxu0 0
  %407 = vmatprep.subr.bf16.mxu0 0
  %408 = vmatpush2.bf16.xpose.msra.mxu0 0
  %409 = vmatprep.mubr.bf16.mxu0 0
  %410 = vmatmul.mubr.bf16.gmra.mxu0 %v372
  %v411 = vpop.f32.mrf.mxu0
  %v412 = vadd.f32 0.0, %v411
  %v413 = vpop.f32.mrf.mxu0
  %v414 = vpop.f32.mrf.mxu0
  %v415 = vadd.f32 0.0, %v414
  %v416 = vpop.f32.mrf.mxu0
  %417 = vdwg.mxu0
  %v418 = vld [vmem:[#allocation3] sm:$0xff]
  %v419 = vld [vmem:[#allocation3 + $0x8] sm:$0xff]
  %v420 = vsel %vm243, %v412, -inf
  %421 = vmax.xlane.f32.xlu0 %v420
  %v422 = vpop.xlane.xlu0 %421
  %v423 = vsel %vm243, %v415, -inf
  %424 = vmax.xlane.f32.xlu0 %v423
  %v425 = vpop.xlane.xlu0 %424
  %v426 = vmax.f32 %v418, %v422
  %v427 = vmax.f32 %v419, %v425
  %v428 = vsub.f32 %v418, %v426
  %v429 = vsub.f32 %v419, %v427
  %v430 = vmul.f32 %v428, 1.442695
  %v431 = vpow.pop %v430
  %v432 = vmul.f32 %v429, 1.442695
  %v433 = vpow.pop %v432
  %435 = vset.pattern.permute.xlu0 1
  %436 = vperm.xlu0 %435, %v426
  %v437 = vpop.permute.xlu0 %436
  %440 = vset.pattern.permute.xlu0 1
  %441 = vperm.xlu0 %440, %v427
  %v442 = vpop.permute.xlu0 %441
  %v444 = vsub.f32 %v412, %v437
  %v445 = vsub.f32 %v415, %v442
  %v446 = vmul.f32 %v444, 1.442695
  %v447 = vpow.pop %v446
  %v448 = vmul.f32 %v445, 1.442695
  %v449 = vpow.pop %v448
  %v450 = vld [vmem:[#allocation4] sm:$0xff]
  %v451 = vld [vmem:[#allocation4 + $0x8] sm:$0xff]
  %v452 = vmul.f32 %v431, %v450
  %v453 = vmul.f32 %v433, %v451
  %v454 = vsel %vm243, %v447, 0.0
  %455 = vadd.xlane.f32.xlu0 %v454
  %v456 = vpop.xlane.xlu0 %455
  %v457 = vsel %vm243, %v449, 0.0
  %458 = vadd.xlane.f32.xlu0 %v457
  %v459 = vpop.xlane.xlu0 %458
  %v460 = vadd.f32 %v452, %v456
  %v461 = vadd.f32 %v453, %v459
  %vm462 = vcmask 15368
  %463 = vst.msk [vmem:[#allocation4] sm:$0xff] %vm462, %v460
  %464 = vst.msk [vmem:[#allocation4 + $0x8] sm:$0xff] %vm462, %v461
  %v465 = vld [vmem:[#allocation5] sm:$0xff]
  %v466 = vld [vmem:[#allocation5 + $0x8] sm:$0xff]
  %468 = vset.pattern.permute.xlu0 1
  %469 = vperm.xlu0 %468, %v431
  %v470 = vpop.permute.xlu0 %469
  %473 = vset.pattern.permute.xlu0 1
  %474 = vperm.xlu0 %473, %v433
  %v475 = vpop.permute.xlu0 %474
  %v477 = vmul.f32 %v470, %v465
  %v478 = vmul.f32 %v475, %v466
  %v479 = vpack.c.bf16 %v449, %v447
  %480 = vrot.lane.b32.xlu0 %v308, 96
  %v481 = vpop.permute.xlu0 %480
  %v484 = vsel %vm243, %v479, 0
  %486 = vmatprep.subr.bf16.mxu0 0
  %487 = vmatpush1.bf16.msra.mxu0 0
  %488 = vmatprep.subr.bf16.mxu0 0
  %489 = vmatpush1.bf16.msra.mxu0 0
  %490 = vmatprep.subr.bf16.mxu0 0
  %491 = vmatpush1.bf16.msra.mxu0 0
  %492 = vmatprep.subr.bf16.mxu0 0
  %493 = vmatpush1.bf16.msra.mxu0 0
  %494 = vmatprep.subr.bf16.mxu0 0
  %495 = vmatpush1.bf16.msra.mxu0 0
  %496 = vmatprep.subr.bf16.mxu0 0
  %497 = vmatpush1.bf16.msra.mxu0 0
  %498 = vmatprep.subr.bf16.mxu0 0
  %499 = vmatpush1.bf16.msra.mxu0 0
  %500 = vmatprep.subr.bf16.mxu0 0
  %501 = vmatpush1.bf16.msra.mxu0 %v481
  %502 = vmatprep.subr.bf16.mxu0 0
  %503 = vmatpush2.bf16.msra.mxu0 0
  %504 = vmatprep.subr.bf16.mxu0 0
  %505 = vmatpush2.bf16.msra.mxu0 0
  %506 = vmatprep.subr.bf16.mxu0 0
  %507 = vmatpush2.bf16.msra.mxu0 0
  %508 = vmatprep.subr.bf16.mxu0 0
  %509 = vmatpush2.bf16.msra.mxu0 0
  %510 = vmatprep.subr.bf16.mxu0 0
  %511 = vmatpush2.bf16.msra.mxu0 0
  %512 = vmatprep.subr.bf16.mxu0 0
  %513 = vmatpush2.bf16.msra.mxu0 0
  %514 = vmatprep.subr.bf16.mxu0 0
  %515 = vmatpush2.bf16.msra.mxu0 0
  %516 = vmatprep.subr.bf16.mxu0 0
  %517 = vmatpush2.bf16.msra.mxu0 0
  %518 = vmatprep.mubr.bf16.mxu0 0
  %519 = vmatmul.mubr.bf16.gmra.mxu0 %v484
  %v520 = vpop.f32.mrf.mxu0
  %v521 = vadd.f32 0.0, %v520
  %v522 = vpop.f32.mrf.mxu0
  %v523 = vpop.f32.mrf.mxu0
  %v524 = vadd.f32 0.0, %v523
  %v525 = vpop.f32.mrf.mxu0
  %526 = vdwg.mxu0
  %529 = vrot.lane.b32.xlu0 %v521, 32
  %v530 = vpop.permute.xlu0 %529
  %531 = vrot.lane.b32.xlu0 %v524, 32
  %v532 = vpop.permute.xlu0 %531
  %v535 = vadd.f32 %v477, %v530
  %v536 = vadd.f32 %v478, %v532
  %vm537 = vcmask 523520
  %538 = vst.msk [vmem:[#allocation5] sm:$0xff] %vm537, %v535
  %539 = vst.msk [vmem:[#allocation5 + $0x8] sm:$0xff] %vm537, %v536
  %540 = vst.msk [vmem:[#allocation3] sm:$0xff] %vm462, %v426
  %541 = vst.msk [vmem:[#allocation3 + $0x8] sm:$0xff] %vm462, %v427
  %v542 = vld [vmem:[#allocation2] sm:$0xf]
  %v543 = vld [vmem:[#allocation2 + $0x4] sm:$0xf]
  %v546 = vunpack.c.l.b16 %v542
  %v547 = vunpack.c.l.b16 %v543
  %v548 = vpack.c.b16 %v547, %v546
  %549 = vrot.lane.b32.xlu0 %v548, 64
  %v550 = vpop.permute.xlu0 %549
  %551 = vrot.lane.b32.xlu0 %v192, 64
  %v552 = vpop.permute.xlu0 %551
  %v554 = vsel %vm193, %v550, 0
  %v557 = vsel %vm193, %v552, 0
  %559 = vmatprep.subr.bf16.mxu0 0
  %560 = vmatpush1.bf16.xpose.msra.mxu0 0
  %561 = vmatprep.subr.bf16.mxu0 0
  %562 = vmatpush1.bf16.xpose.msra.mxu0 0
  %563 = vmatprep.subr.bf16.mxu0 0
  %564 = vmatpush1.bf16.xpose.msra.mxu0 0
  %565 = vmatprep.subr.bf16.mxu0 0
  %566 = vmatpush1.bf16.xpose.msra.mxu0 0
  %567 = vmatprep.subr.bf16.mxu0 0
  %568 = vmatpush1.bf16.xpose.msra.mxu0 0
  %569 = vmatprep.subr.bf16.mxu0 0
  %570 = vmatpush1.bf16.xpose.msra.mxu0 0
  %571 = vmatprep.subr.bf16.mxu0 0
  %572 = vmatpush1.bf16.xpose.msra.mxu0 0
  %573 = vmatprep.subr.bf16.mxu0 0
  %574 = vmatpush1.bf16.xpose.msra.mxu0 %v557
  %575 = vmatprep.subr.bf16.mxu0 0
  %576 = vmatpush2.bf16.xpose.msra.mxu0 0
  %577 = vmatprep.subr.bf16.mxu0 0
  %578 = vmatpush2.bf16.xpose.msra.mxu0 0
  %579 = vmatprep.subr.bf16.mxu0 0
  %580 = vmatpush2.bf16.xpose.msra.mxu0 0
  %581 = vmatprep.subr.bf16.mxu0 0
  %582 = vmatpush2.bf16.xpose.msra.mxu0 0
  %583 = vmatprep.subr.bf16.mxu0 0
  %584 = vmatpush2.bf16.xpose.msra.mxu0 0
  %585 = vmatprep.subr.bf16.mxu0 0
  %586 = vmatpush2.bf16.xpose.msra.mxu0 0
  %587 = vmatprep.subr.bf16.mxu0 0
  %588 = vmatpush2.bf16.xpose.msra.mxu0 0
  %589 = vmatprep.subr.bf16.mxu0 0
  %590 = vmatpush2.bf16.xpose.msra.mxu0 0
  %591 = vmatprep.mubr.bf16.mxu0 0
  %592 = vmatmul.mubr.bf16.gmra.mxu0 %v554
  %v593 = vpop.f32.mrf.mxu0
  %v594 = vadd.f32 0.0, %v593
  %v595 = vpop.f32.mrf.mxu0
  %v596 = vpop.f32.mrf.mxu0
  %v597 = vadd.f32 0.0, %v596
  %v598 = vpop.f32.mrf.mxu0
  %599 = vdwg.mxu0
  %v600 = vld [vmem:[#allocation3] sm:$0xff]
  %v601 = vld [vmem:[#allocation3 + $0x8] sm:$0xff]
  %v602 = vsel %vm243, %v594, -inf
  %603 = vmax.xlane.f32.xlu0 %v602
  %v604 = vpop.xlane.xlu0 %603
  %v605 = vsel %vm243, %v597, -inf
  %606 = vmax.xlane.f32.xlu0 %v605
  %v607 = vpop.xlane.xlu0 %606
  %v608 = vmax.f32 %v600, %v604
  %v609 = vmax.f32 %v601, %v607
  %v610 = vsub.f32 %v600, %v608
  %v611 = vsub.f32 %v601, %v609
  %v612 = vmul.f32 %v610, 1.442695
  %v613 = vpow.pop %v612
  %v614 = vmul.f32 %v611, 1.442695
  %v615 = vpow.pop %v614
  %617 = vset.pattern.permute.xlu0 2
  %618 = vperm.xlu0 %617, %v608
  %v619 = vpop.permute.xlu0 %618
  %622 = vset.pattern.permute.xlu0 2
  %623 = vperm.xlu0 %622, %v609
  %v624 = vpop.permute.xlu0 %623
  %v626 = vsub.f32 %v594, %v619
  %v627 = vsub.f32 %v597, %v624
  %v628 = vmul.f32 %v626, 1.442695
  %v629 = vpow.pop %v628
  %v630 = vmul.f32 %v627, 1.442695
  %v631 = vpow.pop %v630
  %v632 = vld [vmem:[#allocation4] sm:$0xff]
  %v633 = vld [vmem:[#allocation4 + $0x8] sm:$0xff]
  %v634 = vmul.f32 %v613, %v632
  %v635 = vmul.f32 %v615, %v633
  %v636 = vsel %vm243, %v629, 0.0
  %637 = vadd.xlane.f32.xlu0 %v636
  %v638 = vpop.xlane.xlu0 %637
  %v639 = vsel %vm243, %v631, 0.0
  %640 = vadd.xlane.f32.xlu0 %v639
  %v641 = vpop.xlane.xlu0 %640
  %v642 = vadd.f32 %v634, %v638
  %v643 = vadd.f32 %v635, %v641
  %vm644 = vcmask 23568
  %645 = vst.msk [vmem:[#allocation4] sm:$0xff] %vm644, %v642
  %646 = vst.msk [vmem:[#allocation4 + $0x8] sm:$0xff] %vm644, %v643
  %v647 = vld [vmem:[#allocation5] sm:$0xff]
  %v648 = vld [vmem:[#allocation5 + $0x8] sm:$0xff]
  %650 = vset.pattern.permute.xlu0 2
  %651 = vperm.xlu0 %650, %v613
  %v652 = vpop.permute.xlu0 %651
  %655 = vset.pattern.permute.xlu0 2
  %656 = vperm.xlu0 %655, %v615
  %v657 = vpop.permute.xlu0 %656
  %v659 = vmul.f32 %v652, %v647
  %v660 = vmul.f32 %v657, %v648
  %v661 = vpack.c.bf16 %v631, %v629
  %662 = vrot.lane.b32.xlu0 %v308, 64
  %v663 = vpop.permute.xlu0 %662
  %v666 = vsel %vm243, %v661, 0
  %668 = vmatprep.subr.bf16.mxu0 0
  %669 = vmatpush1.bf16.msra.mxu0 0
  %670 = vmatprep.subr.bf16.mxu0 0
  %671 = vmatpush1.bf16.msra.mxu0 0
  %672 = vmatprep.subr.bf16.mxu0 0
  %673 = vmatpush1.bf16.msra.mxu0 0
  %674 = vmatprep.subr.bf16.mxu0 0
  %675 = vmatpush1.bf16.msra.mxu0 0
  %676 = vmatprep.subr.bf16.mxu0 0
  %677 = vmatpush1.bf16.msra.mxu0 0
  %678 = vmatprep.subr.bf16.mxu0 0
  %679 = vmatpush1.bf16.msra.mxu0 0
  %680 = vmatprep.subr.bf16.mxu0 0
  %681 = vmatpush1.bf16.msra.mxu0 0
  %682 = vmatprep.subr.bf16.mxu0 0
  %683 = vmatpush1.bf16.msra.mxu0 %v663
  %684 = vmatprep.subr.bf16.mxu0 0
  %685 = vmatpush2.bf16.msra.mxu0 0
  %686 = vmatprep.subr.bf16.mxu0 0
  %687 = vmatpush2.bf16.msra.mxu0 0
  %688 = vmatprep.subr.bf16.mxu0 0
  %689 = vmatpush2.bf16.msra.mxu0 0
  %690 = vmatprep.subr.bf16.mxu0 0
  %691 = vmatpush2.bf16.msra.mxu0 0
  %692 = vmatprep.subr.bf16.mxu0 0
  %693 = vmatpush2.bf16.msra.mxu0 0
  %694 = vmatprep.subr.bf16.mxu0 0
  %695 = vmatpush2.bf16.msra.mxu0 0
  %696 = vmatprep.subr.bf16.mxu0 0
  %697 = vmatpush2.bf16.msra.mxu0 0
  %698 = vmatprep.subr.bf16.mxu0 0
  %699 = vmatpush2.bf16.msra.mxu0 0
  %700 = vmatprep.mubr.bf16.mxu0 0
  %701 = vmatmul.mubr.bf16.gmra.mxu0 %v666
  %v702 = vpop.f32.mrf.mxu0
  %v703 = vadd.f32 0.0, %v702
  %v704 = vpop.f32.mrf.mxu0
  %v705 = vpop.f32.mrf.mxu0
  %v706 = vadd.f32 0.0, %v705
  %v707 = vpop.f32.mrf.mxu0
  %708 = vdwg.mxu0
  %711 = vrot.lane.b32.xlu0 %v703, 64
  %v712 = vpop.permute.xlu0 %711
  %713 = vrot.lane.b32.xlu0 %v706, 64
  %v714 = vpop.permute.xlu0 %713
  %v717 = vadd.f32 %v659, %v712
  %v718 = vadd.f32 %v660, %v714
  %vm719 = vcmask 785920
  %720 = vst.msk [vmem:[#allocation5] sm:$0xff] %vm719, %v717
  %721 = vst.msk [vmem:[#allocation5 + $0x8] sm:$0xff] %vm719, %v718
  %722 = vst.msk [vmem:[#allocation3] sm:$0xff] %vm644, %v608
  %723 = vst.msk [vmem:[#allocation3 + $0x8] sm:$0xff] %vm644, %v609
  %v724 = vld [vmem:[#allocation2] sm:$0xf]
  %v725 = vld [vmem:[#allocation2 + $0x4] sm:$0xf]
  %v728 = vunpack.c.l.b16 %v724
  %v729 = vunpack.c.l.b16 %v725
  %v730 = vpack.c.b16 %v729, %v728
  %731 = vrot.lane.b32.xlu0 %v730, 32
  %v732 = vpop.permute.xlu0 %731
  %733 = vrot.lane.b32.xlu0 %v192, 32
  %v734 = vpop.permute.xlu0 %733
  %v736 = vsel %vm193, %v732, 0
  %v739 = vsel %vm193, %v734, 0
  %741 = vmatprep.subr.bf16.mxu0 0
  %742 = vmatpush1.bf16.xpose.msra.mxu0 0
  %743 = vmatprep.subr.bf16.mxu0 0
  %744 = vmatpush1.bf16.xpose.msra.mxu0 0
  %745 = vmatprep.subr.bf16.mxu0 0
  %746 = vmatpush1.bf16.xpose.msra.mxu0 0
  %747 = vmatprep.subr.bf16.mxu0 0
  %748 = vmatpush1.bf16.xpose.msra.mxu0 0
  %749 = vmatprep.subr.bf16.mxu0 0
  %750 = vmatpush1.bf16.xpose.msra.mxu0 0
  %751 = vmatprep.subr.bf16.mxu0 0
  %752 = vmatpush1.bf16.xpose.msra.mxu0 0
  %753 = vmatprep.subr.bf16.mxu0 0
  %754 = vmatpush1.bf16.xpose.msra.mxu0 0
  %755 = vmatprep.subr.bf16.mxu0 0
  %756 = vmatpush1.bf16.xpose.msra.mxu0 %v739
  %757 = vmatprep.subr.bf16.mxu0 0
  %758 = vmatpush2.bf16.xpose.msra.mxu0 0
  %759 = vmatprep.subr.bf16.mxu0 0
  %760 = vmatpush2.bf16.xpose.msra.mxu0 0
  %761 = vmatprep.subr.bf16.mxu0 0
  %762 = vmatpush2.bf16.xpose.msra.mxu0 0
  %763 = vmatprep.subr.bf16.mxu0 0
  %764 = vmatpush2.bf16.xpose.msra.mxu0 0
  %765 = vmatprep.subr.bf16.mxu0 0
  %766 = vmatpush2.bf16.xpose.msra.mxu0 0
  %767 = vmatprep.subr.bf16.mxu0 0
  %768 = vmatpush2.bf16.xpose.msra.mxu0 0
  %769 = vmatprep.subr.bf16.mxu0 0
  %770 = vmatpush2.bf16.xpose.msra.mxu0 0
  %771 = vmatprep.subr.bf16.mxu0 0
  %772 = vmatpush2.bf16.xpose.msra.mxu0 0
  %773 = vmatprep.mubr.bf16.mxu0 0
  %774 = vmatmul.mubr.bf16.gmra.mxu0 %v736
  %v775 = vpop.f32.mrf.mxu0
  %v776 = vadd.f32 0.0, %v775
  %v777 = vpop.f32.mrf.mxu0
  %v778 = vpop.f32.mrf.mxu0
  %v779 = vadd.f32 0.0, %v778
  %v780 = vpop.f32.mrf.mxu0
  %781 = vdwg.mxu0
  %v782 = vld [vmem:[#allocation3] sm:$0xff]
  %v783 = vld [vmem:[#allocation3 + $0x8] sm:$0xff]
  %v784 = vsel %vm243, %v776, -inf
  %785 = vmax.xlane.f32.xlu0 %v784
  %v786 = vpop.xlane.xlu0 %785
  %v787 = vsel %vm243, %v779, -inf
  %788 = vmax.xlane.f32.xlu0 %v787
  %v789 = vpop.xlane.xlu0 %788
  %v790 = vmax.f32 %v782, %v786
  %v791 = vmax.f32 %v783, %v789
  %v792 = vsub.f32 %v782, %v790
  %v793 = vsub.f32 %v783, %v791
  %v794 = vmul.f32 %v792, 1.442695
  %v795 = vpow.pop %v794
  %v796 = vmul.f32 %v793, 1.442695
  %v797 = vpow.pop %v796
  %799 = vset.pattern.permute.xlu0 3
  %800 = vperm.xlu0 %799, %v790
  %v801 = vpop.permute.xlu0 %800
  %804 = vset.pattern.permute.xlu0 3
  %805 = vperm.xlu0 %804, %v791
  %v806 = vpop.permute.xlu0 %805
  %v808 = vsub.f32 %v776, %v801
  %v809 = vsub.f32 %v779, %v806
  %v810 = vmul.f32 %v808, 1.442695
  %v811 = vpow.pop %v810
  %v812 = vmul.f32 %v809, 1.442695
  %v813 = vpow.pop %v812
  %v814 = vld [vmem:[#allocation4] sm:$0xff]
  %v815 = vld [vmem:[#allocation4 + $0x8] sm:$0xff]
  %v816 = vmul.f32 %v795, %v814
  %v817 = vmul.f32 %v797, %v815
  %v818 = vsel %vm243, %v811, 0.0
  %819 = vadd.xlane.f32.xlu0 %v818
  %v820 = vpop.xlane.xlu0 %819
  %v821 = vsel %vm243, %v813, 0.0
  %822 = vadd.xlane.f32.xlu0 %v821
  %v823 = vpop.xlane.xlu0 %822
  %v824 = vadd.f32 %v816, %v820
  %v825 = vadd.f32 %v817, %v823
  %vm826 = vcmask 31768
  %827 = vst.msk [vmem:[#allocation4] sm:$0xff] %vm826, %v824
  %828 = vst.msk [vmem:[#allocation4 + $0x8] sm:$0xff] %vm826, %v825
  %v829 = vld [vmem:[#allocation5] sm:$0xff]
  %v830 = vld [vmem:[#allocation5 + $0x8] sm:$0xff]
  %832 = vset.pattern.permute.xlu0 3
  %833 = vperm.xlu0 %832, %v795
  %v834 = vpop.permute.xlu0 %833
  %837 = vset.pattern.permute.xlu0 3
  %838 = vperm.xlu0 %837, %v797
  %v839 = vpop.permute.xlu0 %838
  %v841 = vmul.f32 %v834, %v829
  %v842 = vmul.f32 %v839, %v830
  %v843 = vpack.c.bf16 %v813, %v811
  %844 = vrot.lane.b32.xlu0 %v308, 32
  %v845 = vpop.permute.xlu0 %844
  %v848 = vsel %vm243, %v843, 0
  %850 = vmatprep.subr.bf16.mxu0 0
  %851 = vmatpush1.bf16.msra.mxu0 0
  %852 = vmatprep.subr.bf16.mxu0 0
  %853 = vmatpush1.bf16.msra.mxu0 0
  %854 = vmatprep.subr.bf16.mxu0 0
  %855 = vmatpush1.bf16.msra.mxu0 0
  %856 = vmatprep.subr.bf16.mxu0 0
  %857 = vmatpush1.bf16.msra.mxu0 0
  %858 = vmatprep.subr.bf16.mxu0 0
  %859 = vmatpush1.bf16.msra.mxu0 0
  %860 = vmatprep.subr.bf16.mxu0 0
  %861 = vmatpush1.bf16.msra.mxu0 0
  %862 = vmatprep.subr.bf16.mxu0 0
  %863 = vmatpush1.bf16.msra.mxu0 0
  %864 = vmatprep.subr.bf16.mxu0 0
  %865 = vmatpush1.bf16.msra.mxu0 %v845
  %866 = vmatprep.subr.bf16.mxu0 0
  %867 = vmatpush2.bf16.msra.mxu0 0
  %868 = vmatprep.subr.bf16.mxu0 0
  %869 = vmatpush2.bf16.msra.mxu0 0
  %870 = vmatprep.subr.bf16.mxu0 0
  %871 = vmatpush2.bf16.msra.mxu0 0
  %872 = vmatprep.subr.bf16.mxu0 0
  %873 = vmatpush2.bf16.msra.mxu0 0
  %874 = vmatprep.subr.bf16.mxu0 0
  %875 = vmatpush2.bf16.msra.mxu0 0
  %876 = vmatprep.subr.bf16.mxu0 0
  %877 = vmatpush2.bf16.msra.mxu0 0
  %878 = vmatprep.subr.bf16.mxu0 0
  %879 = vmatpush2.bf16.msra.mxu0 0
  %880 = vmatprep.subr.bf16.mxu0 0
  %881 = vmatpush2.bf16.msra.mxu0 0
  %882 = vmatprep.mubr.bf16.mxu0 0
  %883 = vmatmul.mubr.bf16.gmra.mxu0 %v848
  %v884 = vpop.f32.mrf.mxu0
  %v885 = vadd.f32 0.0, %v884
  %v886 = vpop.f32.mrf.mxu0
  %v887 = vpop.f32.mrf.mxu0
  %v888 = vadd.f32 0.0, %v887
  %v889 = vpop.f32.mrf.mxu0
  %890 = vdwg.mxu0
  %893 = vrot.lane.b32.xlu0 %v885, 96
  %v894 = vpop.permute.xlu0 %893
  %895 = vrot.lane.b32.xlu0 %v888, 96
  %v896 = vpop.permute.xlu0 %895
  %v899 = vadd.f32 %v841, %v894
  %v900 = vadd.f32 %v842, %v896
  %vm901 = vcmask 1048320
  %902 = vst.msk [vmem:[#allocation5] sm:$0xff] %vm901, %v899
  %903 = vst.msk [vmem:[#allocation5 + $0x8] sm:$0xff] %vm901, %v900
  %904 = vst.msk [vmem:[#allocation3] sm:$0xff] %vm826, %v790
  %905 = vst.msk [vmem:[#allocation3 + $0x8] sm:$0xff] %vm826, %v791
  // Predicated region
  $region58: #{transformer_forward.8} parent=0 // pred_check
    %p906 = pneg %p45
  $region59: #{transformer_forward.8} parent=0 // pred_check_branch
    %908 = sbr.rel (%p906) target = $region61
  $region60: #{transformer_forward.8} parent=0 // pred_region
    %v909 = vld [vmem:[%s0] sm:$0xff]
    %v910 = vld [vmem:[%s0 + $0x8] sm:$0xff]
    %v911 = vld [vmem:[#allocation5] sm:$0xff]
    %v912 = vld [vmem:[#allocation5 + $0x8] sm:$0xff]
    %v913 = vld [vmem:[#allocation4] sm:$0xff]
    %v914 = vld [vmem:[#allocation4 + $0x8] sm:$0xff]
    %916 = vset.pattern.permute.xlu0 0
    %917 = vperm.xlu0 %916, %v913
    %v918 = vpop.permute.xlu0 %917
    %921 = vset.pattern.permute.xlu0 0
    %922 = vperm.xlu0 %921, %v914
    %v923 = vpop.permute.xlu0 %922
    %v925 = vrcp.pop %v918
    %v926 = vmul.f32 %v911, %v925
    %v927 = vrcp.pop %v923
    %v928 = vmul.f32 %v912, %v927
    %929 = vst.msk [vmem:[#allocation5] sm:$0xff] %vm193, %v926
    %930 = vst.msk [vmem:[#allocation5 + $0x8] sm:$0xff] %vm193, %v928
    %v931 = vld [vmem:[#allocation5] sm:$0xff]
    %v932 = vld [vmem:[#allocation5 + $0x8] sm:$0xff]
    %v933 = vld [vmem:[#allocation4] sm:$0xff]
    %v934 = vld [vmem:[#allocation4 + $0x8] sm:$0xff]
    %936 = vset.pattern.permute.xlu0 1
    %937 = vperm.xlu0 %936, %v933
    %v938 = vpop.permute.xlu0 %937
    %941 = vset.pattern.permute.xlu0 1
    %942 = vperm.xlu0 %941, %v934
    %v943 = vpop.permute.xlu0 %942
    %v945 = vrcp.pop %v938
    %v946 = vmul.f32 %v931, %v945
    %v947 = vrcp.pop %v943
    %v948 = vmul.f32 %v932, %v947
    %949 = vst.msk [vmem:[#allocation5] sm:$0xff] %vm537, %v946
    %950 = vst.msk [vmem:[#allocation5 + $0x8] sm:$0xff] %vm537, %v948
    %v951 = vld [vmem:[#allocation5] sm:$0xff]
    %v952 = vld [vmem:[#allocation5 + $0x8] sm:$0xff]
    %v953 = vld [vmem:[#allocation4] sm:$0xff]
    %v954 = vld [vmem:[#allocation4 + $0x8] sm:$0xff]
    %956 = vset.pattern.permute.xlu0 2
    %957 = vperm.xlu0 %956, %v953
    %v958 = vpop.permute.xlu0 %957
    %961 = vset.pattern.permute.xlu0 2
    %962 = vperm.xlu0 %961, %v954
    %v963 = vpop.permute.xlu0 %962
    %v965 = vrcp.pop %v958
    %v966 = vmul.f32 %v951, %v965
    %v967 = vrcp.pop %v963
    %v968 = vmul.f32 %v952, %v967
    %969 = vst.msk [vmem:[#allocation5] sm:$0xff] %vm719, %v966
    %970 = vst.msk [vmem:[#allocation5 + $0x8] sm:$0xff] %vm719, %v968
    %v971 = vld [vmem:[#allocation5] sm:$0xff]
    %v972 = vld [vmem:[#allocation5 + $0x8] sm:$0xff]
    %v973 = vld [vmem:[#allocation4] sm:$0xff]
    %v974 = vld [vmem:[#allocation4 + $0x8] sm:$0xff]
    %976 = vset.pattern.permute.xlu0 3
    %977 = vperm.xlu0 %976, %v973
    %v978 = vpop.permute.xlu0 %977
    %981 = vset.pattern.permute.xlu0 3
    %982 = vperm.xlu0 %981, %v974
    %v983 = vpop.permute.xlu0 %982
    %v985 = vrcp.pop %v978
    %v986 = vmul.f32 %v971, %v985
    %v987 = vrcp.pop %v983
    %v988 = vmul.f32 %v972, %v987
    %989 = vst.msk [vmem:[#allocation5] sm:$0xff] %vm901, %v986
    %990 = vst.msk [vmem:[#allocation5 + $0x8] sm:$0xff] %vm901, %v988
    %v991 = vld [vmem:[#allocation5] sm:$0xff]
    %v992 = vld [vmem:[#allocation5 + $0x8] sm:$0xff]
    %v993 = vpack.c.bf16 %v992, %v991
    %v994 = vld [vmem:[%s6] sm:$0xf]
    %v995 = vld [vmem:[%s6 + $0x4] sm:$0xf]
    %v996 = vld [vmem:[%s6 + $0x8] sm:$0xf]
    %v997 = vld [vmem:[%s6 + $0xc] sm:$0xf]
    %v998 = vld [vmem:[%s6 + $0x10] sm:$0xf]
    %v999 = vld [vmem:[%s6 + $0x14] sm:$0xf]
    %v1000 = vld [vmem:[%s6 + $0x18] sm:$0xf]
    %v1001 = vld [vmem:[%s6 + $0x1c] sm:$0xf]
    %v1002 = vld [vmem:[%s6 + $0x20] sm:$0xf]
    %v1003 = vld [vmem:[%s6 + $0x24] sm:$0xf]
    %v1004 = vld [vmem:[%s6 + $0x28] sm:$0xf]
    %v1005 = vld [vmem:[%s6 + $0x2c] sm:$0xf]
    %v1006 = vld [vmem:[%s6 + $0x30] sm:$0xf]
    %v1007 = vld [vmem:[%s6 + $0x34] sm:$0xf]
    %v1008 = vld [vmem:[%s6 + $0x38] sm:$0xf]
    %v1009 = vld [vmem:[%s6 + $0x3c] sm:$0xf]
    %v1026 = vunpack.c.l.b16 %v994
    %v1027 = vunpack.c.l.b16 %v995
    %v1028 = vunpack.c.l.b16 %v996
    %v1029 = vunpack.c.l.b16 %v997
    %v1030 = vunpack.c.l.b16 %v998
    %v1031 = vunpack.c.l.b16 %v999
    %v1032 = vunpack.c.l.b16 %v1000
    %v1033 = vunpack.c.l.b16 %v1001
    %v1034 = vunpack.c.l.b16 %v1002
    %v1035 = vunpack.c.l.b16 %v1003
    %v1036 = vunpack.c.l.b16 %v1004
    %v1037 = vunpack.c.l.b16 %v1005
    %v1038 = vunpack.c.l.b16 %v1006
    %v1039 = vunpack.c.l.b16 %v1007
    %v1040 = vunpack.c.l.b16 %v1008
    %v1041 = vunpack.c.l.b16 %v1009
    %v1042 = vpack.c.b16 %v1027, %v1026
    %v1043 = vpack.c.b16 %v1029, %v1028
    %v1044 = vpack.c.b16 %v1031, %v1030
    %v1045 = vpack.c.b16 %v1033, %v1032
    %v1046 = vpack.c.b16 %v1035, %v1034
    %v1047 = vpack.c.b16 %v1037, %v1036
    %v1048 = vpack.c.b16 %v1039, %v1038
    %v1049 = vpack.c.b16 %v1041, %v1040
    %1058 = vmatprep.subr.bf16.mxu0 0
    %1059 = vmatpush1.bf16.msra.mxu0 %v1049
    %1060 = vmatprep.subr.bf16.mxu0 0
    %1061 = vmatpush1.bf16.msra.mxu0 %v1048
    %1062 = vmatprep.subr.bf16.mxu0 0
    %1063 = vmatpush1.bf16.msra.mxu0 %v1047
    %1064 = vmatprep.subr.bf16.mxu0 0
    %1065 = vmatpush1.bf16.msra.mxu0 %v1046
    %1066 = vmatprep.subr.bf16.mxu0 0
    %1067 = vmatpush1.bf16.msra.mxu0 %v1045
    %1068 = vmatprep.subr.bf16.mxu0 0
    %1069 = vmatpush1.bf16.msra.mxu0 %v1044
    %1070 = vmatprep.subr.bf16.mxu0 0
    %1071 = vmatpush1.bf16.msra.mxu0 %v1043
    %1072 = vmatprep.subr.bf16.mxu0 0
    %1073 = vmatpush1.bf16.msra.mxu0 %v1042
    %1074 = vmatprep.subr.bf16.mxu0 0
    %1075 = vmatpush2.bf16.msra.mxu0 0
    %1076 = vmatprep.subr.bf16.mxu0 0
    %1077 = vmatpush2.bf16.msra.mxu0 0
    %1078 = vmatprep.subr.bf16.mxu0 0
    %1079 = vmatpush2.bf16.msra.mxu0 0
    %1080 = vmatprep.subr.bf16.mxu0 0
    %1081 = vmatpush2.bf16.msra.mxu0 0
    %1082 = vmatprep.subr.bf16.mxu0 0
    %1083 = vmatpush2.bf16.msra.mxu0 0
    %1084 = vmatprep.subr.bf16.mxu0 0
    %1085 = vmatpush2.bf16.msra.mxu0 0
    %1086 = vmatprep.subr.bf16.mxu0 0
    %1087 = vmatpush2.bf16.msra.mxu0 0
    %1088 = vmatprep.subr.bf16.mxu0 0
    %1089 = vmatpush2.bf16.msra.mxu0 0
    %1090 = vmatprep.mubr.bf16.mxu0 0
    %1091 = vmatmul.mubr.bf16.gmra.mxu0 %v993
    %v1092 = vpop.f32.mrf.mxu0
    %v1093 = vadd.f32 0.0, %v1092
    %v1094 = vpop.f32.mrf.mxu0
    %v1095 = vpop.f32.mrf.mxu0
    %v1096 = vadd.f32 0.0, %v1095
    %v1097 = vpop.f32.mrf.mxu0
    %1098 = vdwg.mxu0
    %v1099 = vadd.f32 %v909, %v1093
    %v1100 = vadd.f32 %v910, %v1096
    %v1101 = vld [vmem:[%s7] sm:$0x1]
    %v1102 = vld [vmem:[%s8] sm:$0x1]
    %v1103 = vsel %vm193, %v1099, 0.0
    %1104 = vadd.xlane.f32.xlu0 %v1103
    %v1105 = vpop.xlane.xlu0 %1104
    %v1106 = vsel %vm193, %v1100, 0.0
    %1107 = vadd.xlane.f32.xlu0 %v1106
    %v1108 = vpop.xlane.xlu0 %1107
    %v1109 = vrcp.pop 32.0
    %v1110 = vmul.f32 %v1105, %v1109
    %v1111 = vmul.f32 %v1108, %v1109
    %v1112 = vsub.f32 %v1099, %v1110
    %v1113 = vsub.f32 %v1100, %v1111
    %v1114 = vmul.f32 %v1112, %v1112
    %v1115 = vmul.f32 %v1113, %v1113
    %v1116 = vsel %vm193, %v1114, 0.0
    %1117 = vadd.xlane.f32.xlu0 %v1116
    %v1118 = vpop.xlane.xlu0 %1117
    %v1119 = vsel %vm193, %v1115, 0.0
    %1120 = vadd.xlane.f32.xlu0 %v1119
    %v1121 = vpop.xlane.xlu0 %1120
    %v1122 = vmul.f32 %v1118, %v1109
    %v1123 = vmul.f32 %v1121, %v1109
    %v1124 = vadd.f32 %v1122, 1e-05
    %v1125 = vadd.f32 %v1123, 1e-05
    %v1126 = vrsqrt.pop %v1124
    %v1127 = vrsqrt.pop %v1125
    %v1128 = vmul.f32 %v1112, %v1126
    %v1129 = vmul.f32 %v1113, %v1127
    %v1131 = vlaneseq
    %v1132 = vshrl.u32 %v1131, 7
    %v1133 = vsub.s32 0, %v1132
    %v1134 = vrot.slane %v1101, %v1133
    %v1136 = vmul.f32 %v1128, %v1134
    %v1137 = vmul.f32 %v1129, %v1134
    %v1139 = vlaneseq
    %v1140 = vshrl.u32 %v1139, 7
    %v1141 = vsub.s32 0, %v1140
    %v1142 = vrot.slane %v1102, %v1141
    %v1144 = vadd.f32 %v1136, %v1142
    %v1145 = vadd.f32 %v1137, %v1142
    %v1146 = vpack.c.bf16 %v1145, %v1144
    %v1147 = vld [vmem:[%s9] sm:$0xf]
    %v1148 = vld [vmem:[%s9 + $0x4] sm:$0xf]
    %v1149 = vld [vmem:[%s9 + $0x8] sm:$0xf]
    %v1150 = vld [vmem:[%s9 + $0xc] sm:$0xf]
    %v1151 = vld [vmem:[%s10] sm:$0x1]
    %v1153 = vlaneseq
    %v1154 = vshrl.u32 %v1153, 7
    %v1155 = vsub.s32 0, %v1154
    %v1156 = vrot.slane %v1151, %v1155
    %v1162 = vunpack.c.l.b16 %v1147
    %v1163 = vunpack.c.l.b16 %v1148
    %v1164 = vunpack.c.l.b16 %v1149
    %v1165 = vunpack.c.l.b16 %v1150
    %v1166 = vpack.c.b16 %v1163, %v1162
    %v1167 = vpack.c.b16 %v1165, %v1164
    %v1171 = vsel %vm193, %v1146, 0
    %1173 = vmatprep.subr.bf16.mxu0 0
    %1174 = vmatpush1.bf16.msra.mxu0 0
    %1175 = vmatprep.subr.bf16.mxu0 0
    %1176 = vmatpush1.bf16.msra.mxu0 0
    %1177 = vmatprep.subr.bf16.mxu0 0
    %1178 = vmatpush1.bf16.msra.mxu0 0
    %1179 = vmatprep.subr.bf16.mxu0 0
    %1180 = vmatpush1.bf16.msra.mxu0 0
    %1181 = vmatprep.subr.bf16.mxu0 0
    %1182 = vmatpush1.bf16.msra.mxu0 0
    %1183 = vmatprep.subr.bf16.mxu0 0
    %1184 = vmatpush1.bf16.msra.mxu0 0
    %1185 = vmatprep.subr.bf16.mxu0 0
    %1186 = vmatpush1.bf16.msra.mxu0 %v1167
    %1187 = vmatprep.subr.bf16.mxu0 0
    %1188 = vmatpush1.bf16.msra.mxu0 %v1166
    %1189 = vmatprep.subr.bf16.mxu0 0
    %1190 = vmatpush2.bf16.msra.mxu0 0
    %1191 = vmatprep.subr.bf16.mxu0 0
    %1192 = vmatpush2.bf16.msra.mxu0 0
    %1193 = vmatprep.subr.bf16.mxu0 0
    %1194 = vmatpush2.bf16.msra.mxu0 0
    %1195 = vmatprep.subr.bf16.mxu0 0
    %1196 = vmatpush2.bf16.msra.mxu0 0
    %1197 = vmatprep.subr.bf16.mxu0 0
    %1198 = vmatpush2.bf16.msra.mxu0 0
    %1199 = vmatprep.subr.bf16.mxu0 0
    %1200 = vmatpush2.bf16.msra.mxu0 0
    %1201 = vmatprep.subr.bf16.mxu0 0
    %1202 = vmatpush2.bf16.msra.mxu0 0
    %1203 = vmatprep.subr.bf16.mxu0 0
    %1204 = vmatpush2.bf16.msra.mxu0 0
    %1205 = vmatprep.mubr.bf16.mxu0 0
    %1206 = vmatmul.mubr.bf16.gmra.mxu0 %v1171
    %v1207 = vpop.f32.mrf.mxu0
    %v1208 = vadd.f32 %v1156, %v1207
    %v1209 = vpop.f32.mrf.mxu0
    %v1210 = vpop.f32.mrf.mxu0
    %v1211 = vadd.f32 %v1156, %v1210
    %v1212 = vpop.f32.mrf.mxu0
    %1213 = vdwg.mxu0
    %v1214 = vmax.f32 %v1208, 0.0
    %v1215 = vmax.f32 %v1211, 0.0
    %v1216 = vpack.c.bf16 %v1215, %v1214
    %v1217 = vld [vmem:[%s11] sm:$0xf]
    %v1218 = vld [vmem:[%s11 + $0x4] sm:$0xf]
    %v1219 = vld [vmem:[%s11 + $0x8] sm:$0xf]
    %v1220 = vld [vmem:[%s11 + $0xc] sm:$0xf]
    %v1221 = vld [vmem:[%s12] sm:$0x1]
    %v1223 = vlaneseq
    %v1224 = vshrl.u32 %v1223, 7
    %v1225 = vsub.s32 0, %v1224
    %v1226 = vrot.slane %v1221, %v1225
    %v1232 = vunpack.c.l.b16 %v1217
    %v1233 = vunpack.c.l.b16 %v1218
    %v1234 = vunpack.c.l.b16 %v1219
    %v1235 = vunpack.c.l.b16 %v1220
    %v1236 = vpack.c.b16 %v1233, %v1232
    %v1237 = vpack.c.b16 %v1235, %v1234
    %v1241 = vsel %vm193, %v1216, 0
    %1243 = vmatprep.subr.bf16.mxu0 0
    %1244 = vmatpush1.bf16.msra.mxu0 0
    %1245 = vmatprep.subr.bf16.mxu0 0
    %1246 = vmatpush1.bf16.msra.mxu0 0
    %1247 = vmatprep.subr.bf16.mxu0 0
    %1248 = vmatpush1.bf16.msra.mxu0 0
    %1249 = vmatprep.subr.bf16.mxu0 0
    %1250 = vmatpush1.bf16.msra.mxu0 0
    %1251 = vmatprep.subr.bf16.mxu0 0
    %1252 = vmatpush1.bf16.msra.mxu0 0
    %1253 = vmatprep.subr.bf16.mxu0 0
    %1254 = vmatpush1.bf16.msra.mxu0 0
    %1255 = vmatprep.subr.bf16.mxu0 0
    %1256 = vmatpush1.bf16.msra.mxu0 %v1237
    %1257 = vmatprep.subr.bf16.mxu0 0
    %1258 = vmatpush1.bf16.msra.mxu0 %v1236
    %1259 = vmatprep.subr.bf16.mxu0 0
    %1260 = vmatpush2.bf16.msra.mxu0 0
    %1261 = vmatprep.subr.bf16.mxu0 0
    %1262 = vmatpush2.bf16.msra.mxu0 0
    %1263 = vmatprep.subr.bf16.mxu0 0
    %1264 = vmatpush2.bf16.msra.mxu0 0
    %1265 = vmatprep.subr.bf16.mxu0 0
    %1266 = vmatpush2.bf16.msra.mxu0 0
    %1267 = vmatprep.subr.bf16.mxu0 0
    %1268 = vmatpush2.bf16.msra.mxu0 0
    %1269 = vmatprep.subr.bf16.mxu0 0
    %1270 = vmatpush2.bf16.msra.mxu0 0
    %1271 = vmatprep.subr.bf16.mxu0 0
    %1272 = vmatpush2.bf16.msra.mxu0 0
    %1273 = vmatprep.subr.bf16.mxu0 0
    %1274 = vmatpush2.bf16.msra.mxu0 0
    %1275 = vmatprep.mubr.bf16.mxu0 0
    %1276 = vmatmul.mubr.bf16.gmra.mxu0 %v1241
    %v1277 = vpop.f32.mrf.mxu0
    %v1278 = vadd.f32 %v1226, %v1277
    %v1279 = vpop.f32.mrf.mxu0
    %v1280 = vpop.f32.mrf.mxu0
    %v1281 = vadd.f32 %v1226, %v1280
    %v1282 = vpop.f32.mrf.mxu0
    %1283 = vdwg.mxu0
    %v1284 = vadd.f32 %v1099, %v1278
    %v1285 = vadd.f32 %v1100, %v1281
    %1286 = vst.msk [vmem:[%s13] sm:$0xff] %vm193, %v1284
    %1287 = vst.msk [vmem:[%s13 + $0x8] sm:$0xff] %vm193, %v1285
  $region61: #{transformer_forward.8} parent=0 // pred_fallthru
    _
  // Predicated region
  $region62: #{transformer_forward.8} parent=0 // pred_check
    _
  $region63: #{transformer_forward.8} parent=0 // pred_check_branch
    %1289 = sbr.rel (0) target = $region65
  $region64: #{transformer_forward.8} parent=0 // pred_region
    _
  $region65: #{transformer_forward.8} parent=0 // pred_fallthru
    _
  // Predicated region
  $region66: #{transformer_forward.8} parent=0 // pred_check
    _
  $region67: #{transformer_forward.8} parent=0 // pred_check_branch
    %1291 = sbr.rel (0) target = $region69
  $region68: #{transformer_forward.8} parent=0 // pred_region
    _
  $region69: #{transformer_forward.8} parent=0 // pred_fallthru
    _

// kernel: transformer_forward.11
$region0: #{transformer_forward.11}
  #allocation0 [shape = 'u32[]', space=smem, size = 0x4, offset = 0x4, fixed_abs, tag = 'smem constant byte address 0x4 - core index']
  #allocation1 [shape = 'u32[144,128]{1,0:T(1,128)}', space=vmem, size = 0x12000, scoped, tag = 'internal scratch']
  #allocation2 [shape = 'bf16[16,96]{1,0:T(8,128)(2,1)}', space=vmem, size = 0x1000, scoped, tag = 'scratch operand']
  %s0 = inlined_call_operand.vmem [shape: f32[16,32], index: 0, kind: input, shape index: {}]
  %s1 = inlined_call_operand.vmem [shape: f32[16,32], index: 1, kind: input, shape index: {}]
  %s2 = inlined_call_operand.vmem [shape: f32[16,32], index: 2, kind: input, shape index: {}]
  %s3 = inlined_call_operand.vmem [shape: bf16[96,16], index: 3, kind: input, shape index: {}]
  %s4 = inlined_call_operand.vmem [shape: bf16[16,256], index: 4, kind: input, shape index: {}]
  %s5 = inlined_call_operand.vmem [shape: f32[1,256], index: 5, kind: input, shape index: {}]
  %s6 = inlined_call_operand.vmem [shape: f32[1,256], index: 6, kind: input, shape index: {}]
  %s7 = inlined_call_operand.vmem [shape: f32[1,256], index: 7, kind: input, shape index: {}]
  %s8 = inlined_call_operand.vmem [shape: bf16[256,256], index: 8, kind: input, shape index: {}]
  %s9 = inlined_call_operand.vmem [shape: f32[1,256], index: 9, kind: input, shape index: {}]
  %s10 = inlined_call_operand.vmem [shape: f32[1,256], index: 10, kind: input, shape index: {}]
  %s11 = inlined_call_operand.vmem [shape: f32[1,256], index: 11, kind: input, shape index: {}]
  %s12 = inlined_call_operand.vmem [shape: bf16[256,256], index: 12, kind: input, shape index: {}]
  %s13 = inlined_call_operand.vmem [shape: f32[1,256], index: 13, kind: input, shape index: {}]
  %s14 = inlined_call_operand.vmem [shape: f32[1,256], index: 14, kind: input, shape index: {}]
  %s15 = inlined_call_operand.vmem [shape: f32[1,256], index: 15, kind: input, shape index: {}]
  %s16 = inlined_call_operand.vmem [shape: bf16[256,256], index: 16, kind: input, shape index: {}]
  %s17 = inlined_call_operand.vmem [shape: f32[1,256], index: 17, kind: input, shape index: {}]
  %s18 = inlined_call_operand.vmem [shape: f32[1,256], index: 18, kind: input, shape index: {}]
  %s19 = inlined_call_operand.vmem [shape: f32[1,256], index: 19, kind: input, shape index: {}]
  %s20 = inlined_call_operand.vmem [shape: bf16[256,16], index: 20, kind: input, shape index: {}]
  %s21 = inlined_call_operand.vmem [shape: f32[1,16], index: 21, kind: input, shape index: {}]
  %s22 = inlined_call_operand.hbm [shape: f32[16,16], index: 22, kind: output, shape index: {}]
  %s23 = sld [smem:[#allocation0]]
  $region98: #{transformer_forward.11} parent=0
    _
  %s25 = ssub.s32 1, %s23
  %s26 = scalar_select 0, %s25, %s23
  $region1: #{transformer_forward.11} parent=0
    #allocation3 [shape = 'u8[8192]{0}', space=vmem, size = 0x2000, scoped, tag = 'output window, operand 0, single buffered']
    #allocation4 [shape = 's32[1]{0}', space=sflag, size = 0x4, scoped, tag = 'scoped memory for transformer_forward.11']
    %27 = vsyncpa [#allocation4], 0
    // Predicated region
    $region2: #{transformer_forward.11} parent=1 // pred_check
      _
    $region3: #{transformer_forward.11} parent=1 // pred_check_branch
      %29 = sbr.rel (0) target = $region5
    $region4: #{transformer_forward.11} parent=1 // pred_region
      _
    $region5: #{transformer_forward.11} parent=1 // pred_fallthru
      _
    // Predicated region
    $region6: #{transformer_forward.11} parent=1 // pred_check
      _
    $region7: #{transformer_forward.11} parent=1 // pred_check_branch
      %31 = sbr.rel (0) target = $region9
    $region8: #{transformer_forward.11} parent=1 // pred_region
      _
    $region9: #{transformer_forward.11} parent=1 // pred_fallthru
      _
    // Predicated region
    $region10: #{transformer_forward.11} parent=1 // pred_check
      _
    $region11: #{transformer_forward.11} parent=1 // pred_check_branch
      %33 = sbr.rel (0) target = $region13
    $region12: #{transformer_forward.11} parent=1 // pred_region
      _
    $region13: #{transformer_forward.11} parent=1 // pred_fallthru
      _
    // Predicated region
    $region14: #{transformer_forward.11} parent=1 // pred_check
      _
    $region15: #{transformer_forward.11} parent=1 // pred_check_branch
      %35 = sbr.rel (0) target = $region17
    $region16: #{transformer_forward.11} parent=1 // pred_region
      _
    $region17: #{transformer_forward.11} parent=1 // pred_fallthru
      _
    // Predicated region
    $region18: #{transformer_forward.11} parent=1 // pred_check
      _
    $region19: #{transformer_forward.11} parent=1 // pred_check_branch
      %37 = sbr.rel (0) target = $region21
    $region20: #{transformer_forward.11} parent=1 // pred_region
      _
    $region21: #{transformer_forward.11} parent=1 // pred_fallthru
      _
    // Predicated region
    $region22: #{transformer_forward.11} parent=1 // pred_check
      _
    $region23: #{transformer_forward.11} parent=1 // pred_check_branch
      %39 = sbr.rel (0) target = $region25
    $region24: #{transformer_forward.11} parent=1 // pred_region
      _
    $region25: #{transformer_forward.11} parent=1 // pred_fallthru
      _
    // Predicated region
    $region26: #{transformer_forward.11} parent=1 // pred_check
      _
    $region27: #{transformer_forward.11} parent=1 // pred_check_branch
      %41 = sbr.rel (0) target = $region29
    $region28: #{transformer_forward.11} parent=1 // pred_region
      _
    $region29: #{transformer_forward.11} parent=1 // pred_fallthru
      _
    // Predicated region
    $region30: #{transformer_forward.11} parent=1 // pred_check
      _
    $region31: #{transformer_forward.11} parent=1 // pred_check_branch
      %43 = sbr.rel (0) target = $region33
    $region32: #{transformer_forward.11} parent=1 // pred_region
      _
    $region33: #{transformer_forward.11} parent=1 // pred_fallthru
      _
    // Predicated region
    $region34: #{transformer_forward.11} parent=1 // pred_check
      _
    $region35: #{transformer_forward.11} parent=1 // pred_check_branch
      %45 = sbr.rel (0) target = $region37
    $region36: #{transformer_forward.11} parent=1 // pred_region
      _
    $region37: #{transformer_forward.11} parent=1 // pred_fallthru
      _
    // Predicated region
    $region38: #{transformer_forward.11} parent=1 // pred_check
      _
    $region39: #{transformer_forward.11} parent=1 // pred_check_branch
      %47 = sbr.rel (0) target = $region41
    $region40: #{transformer_forward.11} parent=1 // pred_region
      _
    $region41: #{transformer_forward.11} parent=1 // pred_fallthru
      _
    // Predicated region
    $region42: #{transformer_forward.11} parent=1 // pred_check
      _
    $region43: #{transformer_forward.11} parent=1 // pred_check_branch
      %49 = sbr.rel (0) target = $region45
    $region44: #{transformer_forward.11} parent=1 // pred_region
      _
    $region45: #{transformer_forward.11} parent=1 // pred_fallthru
      _
    // Predicated region
    $region46: #{transformer_forward.11} parent=1 // pred_check
      _
    $region47: #{transformer_forward.11} parent=1 // pred_check_branch
      %51 = sbr.rel (0) target = $region49
    $region48: #{transformer_forward.11} parent=1 // pred_region
      _
    $region49: #{transformer_forward.11} parent=1 // pred_fallthru
      _
    // Predicated region
    $region50: #{transformer_forward.11} parent=1 // pred_check
      _
    $region51: #{transformer_forward.11} parent=1 // pred_check_branch
      %53 = sbr.rel (0) target = $region53
    $region52: #{transformer_forward.11} parent=1 // pred_region
      _
    $region53: #{transformer_forward.11} parent=1 // pred_fallthru
      _
    // Predicated region
    $region54: #{transformer_forward.11} parent=1 // pred_check
      _
    $region55: #{transformer_forward.11} parent=1 // pred_check_branch
      %55 = sbr.rel (0) target = $region57
    $region56: #{transformer_forward.11} parent=1 // pred_region
      _
    $region57: #{transformer_forward.11} parent=1 // pred_fallthru
      _
    // Predicated region
    $region58: #{transformer_forward.11} parent=1 // pred_check
      _
    $region59: #{transformer_forward.11} parent=1 // pred_check_branch
      %57 = sbr.rel (0) target = $region61
    $region60: #{transformer_forward.11} parent=1 // pred_region
      _
    $region61: #{transformer_forward.11} parent=1 // pred_fallthru
      _
    // Predicated region
    $region62: #{transformer_forward.11} parent=1 // pred_check
      _
    $region63: #{transformer_forward.11} parent=1 // pred_check_branch
      %59 = sbr.rel (0) target = $region65
    $region64: #{transformer_forward.11} parent=1 // pred_region
      _
    $region65: #{transformer_forward.11} parent=1 // pred_fallthru
      _
    // Predicated region
    $region66: #{transformer_forward.11} parent=1 // pred_check
      _
    $region67: #{transformer_forward.11} parent=1 // pred_check_branch
      %61 = sbr.rel (0) target = $region69
    $region68: #{transformer_forward.11} parent=1 // pred_region
      _
    $region69: #{transformer_forward.11} parent=1 // pred_fallthru
      _
    // Predicated region
    $region70: #{transformer_forward.11} parent=1 // pred_check
      _
    $region71: #{transformer_forward.11} parent=1 // pred_check_branch
      %63 = sbr.rel (0) target = $region73
    $region72: #{transformer_forward.11} parent=1 // pred_region
      _
    $region73: #{transformer_forward.11} parent=1 // pred_fallthru
      _
    // Predicated region
    $region74: #{transformer_forward.11} parent=1 // pred_check
      _
    $region75: #{transformer_forward.11} parent=1 // pred_check_branch
      %65 = sbr.rel (0) target = $region77
    $region76: #{transformer_forward.11} parent=1 // pred_region
      _
    $region77: #{transformer_forward.11} parent=1 // pred_fallthru
      _
    // Predicated region
    $region78: #{transformer_forward.11} parent=1 // pred_check
      _
    $region79: #{transformer_forward.11} parent=1 // pred_check_branch
      %67 = sbr.rel (0) target = $region81
    $region80: #{transformer_forward.11} parent=1 // pred_region
      _
    $region81: #{transformer_forward.11} parent=1 // pred_fallthru
      _
    // Predicated region
    $region82: #{transformer_forward.11} parent=1 // pred_check
      _
    $region83: #{transformer_forward.11} parent=1 // pred_check_branch
      %69 = sbr.rel (0) target = $region85
    $region84: #{transformer_forward.11} parent=1 // pred_region
      _
    $region85: #{transformer_forward.11} parent=1 // pred_fallthru
      _
    // Predicated region
    $region86: #{transformer_forward.11} parent=1 // pred_check
      _
    $region87: #{transformer_forward.11} parent=1 // pred_check_branch
      %71 = sbr.rel (0) target = $region89
    $region88: #{transformer_forward.11} parent=1 // pred_region
      _
    $region89: #{transformer_forward.11} parent=1 // pred_fallthru
      _
    %v73 = vld [vmem:[%s0] sm:$0xff]
    %v74 = vld [vmem:[%s0 + $0x8] sm:$0xff]
    %v75 = vpack.c.bf16 %v74, %v73
    %v77 = vunpack.c.l.b16 %v75
    %v78 = vunpack.c.h.b16 %v75
    %v79 = vpack.c.b16 %v77, %v77
    %v80 = vpack.c.b16 %v78, %v78
    %vm83 = vcmask 257024
    %84 = vst.msk [vmem:[#allocation2] sm:$0xf] %vm83, %v79
    %85 = vst.msk [vmem:[#allocation2 + $0x4] sm:$0xf] %vm83, %v80
    %v86 = vld [vmem:[%s1] sm:$0xff]
    %v87 = vld [vmem:[%s1 + $0x8] sm:$0xff]
    %v88 = vpack.c.bf16 %v87, %v86
    %v90 = vunpack.c.l.b16 %v88
    %v91 = vunpack.c.h.b16 %v88
    %v92 = vpack.c.b16 %v90, %v90
    %v93 = vpack.c.b16 %v91, %v91
    %94 = vrot.lane.b32.xlu0 %v92, 32
    %v95 = vpop.permute.xlu0 %94
    %96 = vrot.lane.b32.xlu0 %v93, 32
    %v97 = vpop.permute.xlu0 %96
    %vm100 = vcmask 519424
    %101 = vst.msk [vmem:[#allocation2] sm:$0xf] %vm100, %v95
    %102 = vst.msk [vmem:[#allocation2 + $0x4] sm:$0xf] %vm100, %v97
    %v103 = vld [vmem:[%s2] sm:$0xff]
    %v104 = vld [vmem:[%s2 + $0x8] sm:$0xff]
    %v105 = vpack.c.bf16 %v104, %v103
    %v107 = vunpack.c.l.b16 %v105
    %v108 = vunpack.c.h.b16 %v105
    %v109 = vpack.c.b16 %v107, %v107
    %v110 = vpack.c.b16 %v108, %v108
    %111 = vrot.lane.b32.xlu0 %v109, 64
    %v112 = vpop.permute.xlu0 %111
    %113 = vrot.lane.b32.xlu0 %v110, 64
    %v114 = vpop.permute.xlu0 %113
    %vm117 = vcmask 781824
    %118 = vst.msk [vmem:[#allocation2] sm:$0xf] %vm117, %v112
    %119 = vst.msk [vmem:[#allocation2 + $0x4] sm:$0xf] %vm117, %v114
    %v120 = vld [vmem:[#allocation2] sm:$0xf]
    %v121 = vld [vmem:[#allocation2 + $0x4] sm:$0xf]
    %v122 = vld [vmem:[%s3] sm:$0xf]
    %v123 = vld [vmem:[%s3 + $0x4] sm:$0xf]
    %v124 = vld [vmem:[%s3 + $0x8] sm:$0xf]
    %v125 = vld [vmem:[%s3 + $0xc] sm:$0xf]
    %v126 = vld [vmem:[%s3 + $0x10] sm:$0xf]
    %v127 = vld [vmem:[%s3 + $0x14] sm:$0xf]
    %v128 = vld [vmem:[%s3 + $0x18] sm:$0xf]
    %v129 = vld [vmem:[%s3 + $0x1c] sm:$0xf]
    %v130 = vld [vmem:[%s3 + $0x20] sm:$0xf]
    %v131 = vld [vmem:[%s3 + $0x24] sm:$0xf]
    %v132 = vld [vmem:[%s3 + $0x28] sm:$0xf]
    %v133 = vld [vmem:[%s3 + $0x2c] sm:$0xf]
    %v136 = vunpack.c.l.b16 %v120
    %v137 = vunpack.c.l.b16 %v121
    %v138 = vpack.c.b16 %v137, %v136
    %v151 = vunpack.c.l.b16 %v122
    %v152 = vunpack.c.l.b16 %v123
    %v153 = vunpack.c.l.b16 %v124
    %v154 = vunpack.c.l.b16 %v125
    %v155 = vunpack.c.l.b16 %v126
    %v156 = vunpack.c.l.b16 %v127
    %v157 = vunpack.c.l.b16 %v128
    %v158 = vunpack.c.l.b16 %v129
    %v159 = vunpack.c.l.b16 %v130
    %v160 = vunpack.c.l.b16 %v131
    %v161 = vunpack.c.l.b16 %v132
    %v162 = vunpack.c.l.b16 %v133
    %v163 = vpack.c.b16 %v152, %v151
    %v164 = vpack.c.b16 %v154, %v153
    %v165 = vpack.c.b16 %v156, %v155
    %v166 = vpack.c.b16 %v158, %v157
    %v167 = vpack.c.b16 %v160, %v159
    %v168 = vpack.c.b16 %v162, %v161
    %vm175 = vcmask 785408
    %v177 = vsel %vm175, %v138, 0
    %179 = vmatprep.subr.bf16.mxu0 0
    %180 = vmatpush1.bf16.msra.mxu0 0
    %181 = vmatprep.subr.bf16.mxu0 0
    %182 = vmatpush1.bf16.msra.mxu0 0
    %183 = vmatprep.subr.bf16.mxu0 0
    %184 = vmatpush1.bf16.msra.mxu0 %v168
    %185 = vmatprep.subr.bf16.mxu0 0
    %186 = vmatpush1.bf16.msra.mxu0 %v167
    %187 = vmatprep.subr.bf16.mxu0 0
    %188 = vmatpush1.bf16.msra.mxu0 %v166
    %189 = vmatprep.subr.bf16.mxu0 0
    %190 = vmatpush1.bf16.msra.mxu0 %v165
    %191 = vmatprep.subr.bf16.mxu0 0
    %192 = vmatpush1.bf16.msra.mxu0 %v164
    %193 = vmatprep.subr.bf16.mxu0 0
    %194 = vmatpush1.bf16.msra.mxu0 %v163
    %195 = vmatprep.subr.bf16.mxu0 0
    %196 = vmatpush2.bf16.msra.mxu0 0
    %197 = vmatprep.subr.bf16.mxu0 0
    %198 = vmatpush2.bf16.msra.mxu0 0
    %199 = vmatprep.subr.bf16.mxu0 0
    %200 = vmatpush2.bf16.msra.mxu0 0
    %201 = vmatprep.subr.bf16.mxu0 0
    %202 = vmatpush2.bf16.msra.mxu0 0
    %203 = vmatprep.subr.bf16.mxu0 0
    %204 = vmatpush2.bf16.msra.mxu0 0
    %205 = vmatprep.subr.bf16.mxu0 0
    %206 = vmatpush2.bf16.msra.mxu0 0
    %207 = vmatprep.subr.bf16.mxu0 0
    %208 = vmatpush2.bf16.msra.mxu0 0
    %209 = vmatprep.subr.bf16.mxu0 0
    %210 = vmatpush2.bf16.msra.mxu0 0
    %211 = vmatprep.mubr.bf16.mxu0 0
    %212 = vmatmul.mubr.bf16.gmra.mxu0 %v177
    %v213 = vpop.f32.mrf.mxu0
    %v214 = vadd.f32 0.0, %v213
    %v215 = vpop.f32.mrf.mxu0
    %v216 = vpop.f32.mrf.mxu0
    %v217 = vadd.f32 0.0, %v216
    %v218 = vpop.f32.mrf.mxu0
    %219 = vdwg.mxu0
    %v220 = vpack.c.bf16 %v217, %v214
    %v221 = vld [vmem:[%s4] sm:$0xff]
    %v222 = vld [vmem:[%s4 + $0x8] sm:$0xff]
    %v223 = vld [vmem:[%s5] sm:$0x3]
    %v225 = vlaneseq
    %v226 = vshrl.u32 %v225, 7
    %v227 = vsub.s32 0, %v226
    %v228 = vrot.slane %v223, %v227
    %v229 = vlaneseq
    %v230 = vshrl.u32 %v229, 7
    %v231 = vsub.s32 1, %v230
    %v232 = vrot.slane %v223, %v231
    %v237 = vunpack.c.l.b16 %v221
    %v238 = vunpack.c.h.b16 %v221
    %v239 = vunpack.c.l.b16 %v222
    %v240 = vunpack.c.h.b16 %v222
    %v241 = vpack.c.b16 %v239, %v237
    %v242 = vpack.c.b16 %v240, %v238
    %vm245 = vcmask 130048
    %v247 = vsel %vm245, %v220, 0
    %249 = vmatprep.subr.bf16.mxu0 0
    %250 = vmatpush1.bf16.msra.mxu0 0
    %251 = vmatprep.subr.bf16.mxu0 0
    %252 = vmatpush1.bf16.msra.mxu0 0
    %253 = vmatprep.subr.bf16.mxu0 0
    %254 = vmatpush1.bf16.msra.mxu0 0
    %255 = vmatprep.subr.bf16.mxu0 0
    %256 = vmatpush1.bf16.msra.mxu0 0
    %257 = vmatprep.subr.bf16.mxu0 0
    %258 = vmatpush1.bf16.msra.mxu0 0
    %259 = vmatprep.subr.bf16.mxu0 0
    %260 = vmatpush1.bf16.msra.mxu0 0
    %261 = vmatprep.subr.bf16.mxu0 0
    %262 = vmatpush1.bf16.msra.mxu0 0
    %263 = vmatprep.subr.bf16.mxu0 %v242
    %264 = vmatpush1.bf16.msra.mxu0 %v241
    %265 = vmatprep.subr.bf16.mxu0 0
    %266 = vmatpush2.bf16.msra.mxu0 0
    %267 = vmatprep.subr.bf16.mxu0 0
    %268 = vmatpush2.bf16.msra.mxu0 0
    %269 = vmatprep.subr.bf16.mxu0 0
    %270 = vmatpush2.bf16.msra.mxu0 0
    %271 = vmatprep.subr.bf16.mxu0 0
    %272 = vmatpush2.bf16.msra.mxu0 0
    %273 = vmatprep.subr.bf16.mxu0 0
    %274 = vmatpush2.bf16.msra.mxu0 0
    %275 = vmatprep.subr.bf16.mxu0 0
    %276 = vmatpush2.bf16.msra.mxu0 0
    %277 = vmatprep.subr.bf16.mxu0 0
    %278 = vmatpush2.bf16.msra.mxu0 0
    %279 = vmatprep.subr.bf16.mxu0 0
    %280 = vmatpush2.bf16.msra.mxu0 0
    %281 = vmatprep.mubr.bf16.mxu0 0
    %282 = vmatmul.mubr.bf16.gmra.mxu0 %v247
    %v283 = vpop.f32.mrf.mxu0
    %v284 = vadd.f32 %v228, %v283
    %v285 = vpop.f32.mrf.mxu0
    %v286 = vadd.f32 %v232, %v285
    %v287 = vpop.f32.mrf.mxu0
    %v288 = vadd.f32 %v228, %v287
    %v289 = vpop.f32.mrf.mxu0
    %v290 = vadd.f32 %v232, %v289
    %291 = vdwg.mxu0
    %v292 = vld [vmem:[%s6] sm:$0x3]
    %v293 = vld [vmem:[%s7] sm:$0x3]
    %v294 = vadd.f32 %v284, %v286
    %295 = vadd.xlane.f32.xlu0 %v294
    %v296 = vpop.xlane.xlu0 %295
    %v297 = vadd.f32 %v288, %v290
    %298 = vadd.xlane.f32.xlu0 %v297
    %v299 = vpop.xlane.xlu0 %298
    %v300 = vrcp.pop 256.0
    %v301 = vmul.f32 %v296, %v300
    %v302 = vmul.f32 %v299, %v300
    %v303 = vsub.f32 %v284, %v301
    %v304 = vsub.f32 %v286, %v301
    %v305 = vsub.f32 %v288, %v302
    %v306 = vsub.f32 %v290, %v302
    %v307 = vmul.f32 %v303, %v303
    %v308 = vmul.f32 %v304, %v304
    %v309 = vmul.f32 %v305, %v305
    %v310 = vmul.f32 %v306, %v306
    %v311 = vadd.f32 %v307, %v308
    %312 = vadd.xlane.f32.xlu0 %v311
    %v313 = vpop.xlane.xlu0 %312
    %v314 = vadd.f32 %v309, %v310
    %315 = vadd.xlane.f32.xlu0 %v314
    %v316 = vpop.xlane.xlu0 %315
    %v317 = vmul.f32 %v313, %v300
    %v318 = vmul.f32 %v316, %v300
    %v319 = vadd.f32 %v317, 1e-05
    %v320 = vadd.f32 %v318, 1e-05
    %v321 = vrsqrt.pop %v319
    %v322 = vrsqrt.pop %v320
    %v323 = vmul.f32 %v303, %v321
    %v324 = vmul.f32 %v304, %v321
    %v325 = vmul.f32 %v305, %v322
    %v326 = vmul.f32 %v306, %v322
    %v328 = vlaneseq
    %v329 = vshrl.u32 %v328, 7
    %v330 = vsub.s32 0, %v329
    %v331 = vrot.slane %v292, %v330
    %v332 = vlaneseq
    %v333 = vshrl.u32 %v332, 7
    %v334 = vsub.s32 1, %v333
    %v335 = vrot.slane %v292, %v334
    %v338 = vmul.f32 %v323, %v331
    %v339 = vmul.f32 %v324, %v335
    %v340 = vmul.f32 %v325, %v331
    %v341 = vmul.f32 %v326, %v335
    %v343 = vlaneseq
    %v344 = vshrl.u32 %v343, 7
    %v345 = vsub.s32 0, %v344
    %v346 = vrot.slane %v293, %v345
    %v347 = vlaneseq
    %v348 = vshrl.u32 %v347, 7
    %v349 = vsub.s32 1, %v348
    %v350 = vrot.slane %v293, %v349
    %v353 = vadd.f32 %v338, %v346
    %v354 = vadd.f32 %v339, %v350
    %v355 = vadd.f32 %v340, %v346
    %v356 = vadd.f32 %v341, %v350
    %v357 = vtanh.pop %v353
    %v358 = vtanh.pop %v354
    %v359 = vtanh.pop %v355
    %v360 = vtanh.pop %v356
    %v361 = vpack.c.bf16 %v359, %v357
    %v362 = vpack.c.bf16 %v360, %v358
    %v363 = vld [vmem:[%s8] sm:$0xff]
    %v364 = vld [vmem:[%s8 + $0x8] sm:$0xff]
    %v365 = vld [vmem:[%s8 + $0x10] sm:$0xff]
    %v366 = vld [vmem:[%s8 + $0x18] sm:$0xff]
    %v367 = vld [vmem:[%s8 + $0x20] sm:$0xff]
    %v368 = vld [vmem:[%s8 + $0x28] sm:$0xff]
    %v369 = vld [vmem:[%s8 + $0x30] sm:$0xff]
    %v370 = vld [vmem:[%s8 + $0x38] sm:$0xff]
    %v371 = vld [vmem:[%s8 + $0x40] sm:$0xff]
    %v372 = vld [vmem:[%s8 + $0x48] sm:$0xff]
    %v373 = vld [vmem:[%s8 + $0x50] sm:$0xff]
    %v374 = vld [vmem:[%s8 + $0x58] sm:$0xff]
    %v375 = vld [vmem:[%s8 + $0x60] sm:$0xff]
    %v376 = vld [vmem:[%s8 + $0x68] sm:$0xff]
    %v377 = vld [vmem:[%s8 + $0x70] sm:$0xff]
    %v378 = vld [vmem:[%s8 + $0x78] sm:$0xff]
    %v379 = vld [vmem:[%s8 + $0x80] sm:$0xff]
    %v380 = vld [vmem:[%s8 + $0x88] sm:$0xff]
    %v381 = vld [vmem:[%s8 + $0x90] sm:$0xff]
    %v382 = vld [vmem:[%s8 + $0x98] sm:$0xff]
    %v383 = vld [vmem:[%s8 + $0xa0] sm:$0xff]
    %v384 = vld [vmem:[%s8 + $0xa8] sm:$0xff]
    %v385 = vld [vmem:[%s8 + $0xb0] sm:$0xff]
    %v386 = vld [vmem:[%s8 + $0xb8] sm:$0xff]
    %v387 = vld [vmem:[%s8 + $0xc0] sm:$0xff]
    %v388 = vld [vmem:[%s8 + $0xc8] sm:$0xff]
    %v389 = vld [vmem:[%s8 + $0xd0] sm:$0xff]
    %v390 = vld [vmem:[%s8 + $0xd8] sm:$0xff]
    %v391 = vld [vmem:[%s8 + $0xe0] sm:$0xff]
    %v392 = vld [vmem:[%s8 + $0xe8] sm:$0xff]
    %v393 = vld [vmem:[%s8 + $0xf0] sm:$0xff]
    %v394 = vld [vmem:[%s8 + $0xf8] sm:$0xff]
    %v395 = vld [vmem:[%s9] sm:$0x3]
    %v397 = vlaneseq
    %v398 = vshrl.u32 %v397, 7
    %v399 = vsub.s32 0, %v398
    %v400 = vrot.slane %v395, %v399
    %v401 = vlaneseq
    %v402 = vshrl.u32 %v401, 7
    %v403 = vsub.s32 1, %v402
    %v404 = vrot.slane %v395, %v403
    %v439 = vunpack.c.l.b16 %v363
    %v440 = vunpack.c.h.b16 %v363
    %v441 = vunpack.c.l.b16 %v364
    %v442 = vunpack.c.h.b16 %v364
    %v443 = vunpack.c.l.b16 %v365
    %v444 = vunpack.c.h.b16 %v365
    %v445 = vunpack.c.l.b16 %v366
    %v446 = vunpack.c.h.b16 %v366
    %v447 = vunpack.c.l.b16 %v367
    %v448 = vunpack.c.h.b16 %v367
    %v449 = vunpack.c.l.b16 %v368
    %v450 = vunpack.c.h.b16 %v368
    %v451 = vunpack.c.l.b16 %v369
    %v452 = vunpack.c.h.b16 %v369
    %v453 = vunpack.c.l.b16 %v370
    %v454 = vunpack.c.h.b16 %v370
    %v455 = vunpack.c.l.b16 %v371
    %v456 = vunpack.c.h.b16 %v371
    %v457 = vunpack.c.l.b16 %v372
    %v458 = vunpack.c.h.b16 %v372
    %v459 = vunpack.c.l.b16 %v373
    %v460 = vunpack.c.h.b16 %v373
    %v461 = vunpack.c.l.b16 %v374
    %v462 = vunpack.c.h.b16 %v374
    %v463 = vunpack.c.l.b16 %v375
    %v464 = vunpack.c.h.b16 %v375
    %v465 = vunpack.c.l.b16 %v376
    %v466 = vunpack.c.h.b16 %v376
    %v467 = vunpack.c.l.b16 %v377
    %v468 = vunpack.c.h.b16 %v377
    %v469 = vunpack.c.l.b16 %v378
    %v470 = vunpack.c.h.b16 %v378
    %v471 = vunpack.c.l.b16 %v379
    %v472 = vunpack.c.h.b16 %v379
    %v473 = vunpack.c.l.b16 %v380
    %v474 = vunpack.c.h.b16 %v380
    %v475 = vunpack.c.l.b16 %v381
    %v476 = vunpack.c.h.b16 %v381
    %v477 = vunpack.c.l.b16 %v382
    %v478 = vunpack.c.h.b16 %v382
    %v479 = vunpack.c.l.b16 %v383
    %v480 = vunpack.c.h.b16 %v383
    %v481 = vunpack.c.l.b16 %v384
    %v482 = vunpack.c.h.b16 %v384
    %v483 = vunpack.c.l.b16 %v385
    %v484 = vunpack.c.h.b16 %v385
    %v485 = vunpack.c.l.b16 %v386
    %v486 = vunpack.c.h.b16 %v386
    %v487 = vunpack.c.l.b16 %v387
    %v488 = vunpack.c.h.b16 %v387
    %v489 = vunpack.c.l.b16 %v388
    %v490 = vunpack.c.h.b16 %v388
    %v491 = vunpack.c.l.b16 %v389
    %v492 = vunpack.c.h.b16 %v389
    %v493 = vunpack.c.l.b16 %v390
    %v494 = vunpack.c.h.b16 %v390
    %v495 = vunpack.c.l.b16 %v391
    %v496 = vunpack.c.h.b16 %v391
    %v497 = vunpack.c.l.b16 %v392
    %v498 = vunpack.c.h.b16 %v392
    %v499 = vunpack.c.l.b16 %v393
    %v500 = vunpack.c.h.b16 %v393
    %v501 = vunpack.c.l.b16 %v394
    %v502 = vunpack.c.h.b16 %v394
    %v503 = vpack.c.b16 %v441, %v439
    %v504 = vpack.c.b16 %v442, %v440
    %v505 = vpack.c.b16 %v445, %v443
    %v506 = vpack.c.b16 %v446, %v444
    %v507 = vpack.c.b16 %v449, %v447
    %v508 = vpack.c.b16 %v450, %v448
    %v509 = vpack.c.b16 %v453, %v451
    %v510 = vpack.c.b16 %v454, %v452
    %v511 = vpack.c.b16 %v457, %v455
    %v512 = vpack.c.b16 %v458, %v456
    %v513 = vpack.c.b16 %v461, %v459
    %v514 = vpack.c.b16 %v462, %v460
    %v515 = vpack.c.b16 %v465, %v463
    %v516 = vpack.c.b16 %v466, %v464
    %v517 = vpack.c.b16 %v469, %v467
    %v518 = vpack.c.b16 %v470, %v468
    %v519 = vpack.c.b16 %v473, %v471
    %v520 = vpack.c.b16 %v474, %v472
    %v521 = vpack.c.b16 %v477, %v475
    %v522 = vpack.c.b16 %v478, %v476
    %v523 = vpack.c.b16 %v481, %v479
    %v524 = vpack.c.b16 %v482, %v480
    %v525 = vpack.c.b16 %v485, %v483
    %v526 = vpack.c.b16 %v486, %v484
    %v527 = vpack.c.b16 %v489, %v487
    %v528 = vpack.c.b16 %v490, %v488
    %v529 = vpack.c.b16 %v493, %v491
    %v530 = vpack.c.b16 %v494, %v492
    %v531 = vpack.c.b16 %v497, %v495
    %v532 = vpack.c.b16 %v498, %v496
    %v533 = vpack.c.b16 %v501, %v499
    %v534 = vpack.c.b16 %v502, %v500
    %567 = vmatprep.subr.bf16.mxu0 %v518
    %568 = vmatpush1.bf16.msra.mxu0 %v517
    %569 = vmatprep.subr.bf16.mxu0 %v516
    %570 = vmatpush1.bf16.msra.mxu0 %v515
    %571 = vmatprep.subr.bf16.mxu0 %v514
    %572 = vmatpush1.bf16.msra.mxu0 %v513
    %573 = vmatprep.subr.bf16.mxu0 %v512
    %574 = vmatpush1.bf16.msra.mxu0 %v511
    %575 = vmatprep.subr.bf16.mxu0 %v510
    %576 = vmatpush1.bf16.msra.mxu0 %v509
    %577 = vmatprep.subr.bf16.mxu0 %v508
    %578 = vmatpush1.bf16.msra.mxu0 %v507
    %579 = vmatprep.subr.bf16.mxu0 %v506
    %580 = vmatpush1.bf16.msra.mxu0 %v505
    %581 = vmatprep.subr.bf16.mxu0 %v504
    %582 = vmatpush1.bf16.msra.mxu0 %v503
    %583 = vmatprep.subr.bf16.mxu0 %v534
    %584 = vmatpush2.bf16.msra.mxu0 %v533
    %585 = vmatprep.subr.bf16.mxu0 %v532
    %586 = vmatpush2.bf16.msra.mxu0 %v531
    %587 = vmatprep.subr.bf16.mxu0 %v530
    %588 = vmatpush2.bf16.msra.mxu0 %v529
    %589 = vmatprep.subr.bf16.mxu0 %v528
    %590 = vmatpush2.bf16.msra.mxu0 %v527
    %591 = vmatprep.subr.bf16.mxu0 %v526
    %592 = vmatpush2.bf16.msra.mxu0 %v525
    %593 = vmatprep.subr.bf16.mxu0 %v524
    %594 = vmatpush2.bf16.msra.mxu0 %v523
    %595 = vmatprep.subr.bf16.mxu0 %v522
    %596 = vmatpush2.bf16.msra.mxu0 %v521
    %597 = vmatprep.subr.bf16.mxu0 %v520
    %598 = vmatpush2.bf16.msra.mxu0 %v519
    %599 = vmatprep.mubr.bf16.mxu0 %v362
    %600 = vmatmul.mubr.bf16.gmra.mxu0 %v361
    %v601 = vpop.f32.mrf.mxu0
    %v602 = vadd.f32 %v400, %v601
    %v603 = vpop.f32.mrf.mxu0
    %v604 = vadd.f32 %v404, %v603
    %v605 = vpop.f32.mrf.mxu0
    %v606 = vadd.f32 %v400, %v605
    %v607 = vpop.f32.mrf.mxu0
    %v608 = vadd.f32 %v404, %v607
    %609 = vdwg.mxu0
    %v610 = vld [vmem:[%s10] sm:$0x3]
    %v611 = vld [vmem:[%s11] sm:$0x3]
    %v612 = vadd.f32 %v602, %v604
    %613 = vadd.xlane.f32.xlu0 %v612
    %v614 = vpop.xlane.xlu0 %613
    %v615 = vadd.f32 %v606, %v608
    %616 = vadd.xlane.f32.xlu0 %v615
    %v617 = vpop.xlane.xlu0 %616
    %v618 = vmul.f32 %v614, %v300
    %v619 = vmul.f32 %v617, %v300
    %v620 = vsub.f32 %v602, %v618
    %v621 = vsub.f32 %v604, %v618
    %v622 = vsub.f32 %v606, %v619
    %v623 = vsub.f32 %v608, %v619
    %v624 = vmul.f32 %v620, %v620
    %v625 = vmul.f32 %v621, %v621
    %v626 = vmul.f32 %v622, %v622
    %v627 = vmul.f32 %v623, %v623
    %v628 = vadd.f32 %v624, %v625
    %629 = vadd.xlane.f32.xlu0 %v628
    %v630 = vpop.xlane.xlu0 %629
    %v631 = vadd.f32 %v626, %v627
    %632 = vadd.xlane.f32.xlu0 %v631
    %v633 = vpop.xlane.xlu0 %632
    %v634 = vmul.f32 %v630, %v300
    %v635 = vmul.f32 %v633, %v300
    %v636 = vadd.f32 %v634, 1e-05
    %v637 = vadd.f32 %v635, 1e-05
    %v638 = vrsqrt.pop %v636
    %v639 = vrsqrt.pop %v637
    %v640 = vmul.f32 %v620, %v638
    %v641 = vmul.f32 %v621, %v638
    %v642 = vmul.f32 %v622, %v639
    %v643 = vmul.f32 %v623, %v639
    %v645 = vlaneseq
    %v646 = vshrl.u32 %v645, 7
    %v647 = vsub.s32 0, %v646
    %v648 = vrot.slane %v610, %v647
    %v649 = vlaneseq
    %v650 = vshrl.u32 %v649, 7
    %v651 = vsub.s32 1, %v650
    %v652 = vrot.slane %v610, %v651
    %v655 = vmul.f32 %v640, %v648
    %v656 = vmul.f32 %v641, %v652
    %v657 = vmul.f32 %v642, %v648
    %v658 = vmul.f32 %v643, %v652
    %v660 = vlaneseq
    %v661 = vshrl.u32 %v660, 7
    %v662 = vsub.s32 0, %v661
    %v663 = vrot.slane %v611, %v662
    %v664 = vlaneseq
    %v665 = vshrl.u32 %v664, 7
    %v666 = vsub.s32 1, %v665
    %v667 = vrot.slane %v611, %v666
    %v670 = vadd.f32 %v655, %v663
    %v671 = vadd.f32 %v656, %v667
    %v672 = vadd.f32 %v657, %v663
    %v673 = vadd.f32 %v658, %v667
    %v674 = vtanh.pop %v670
    %v675 = vtanh.pop %v671
    %v676 = vtanh.pop %v672
    %v677 = vtanh.pop %v673
    %v678 = vpack.c.bf16 %v676, %v674
    %v679 = vpack.c.bf16 %v677, %v675
    %v680 = vld [vmem:[%s12] sm:$0xff]
    %v681 = vld [vmem:[%s12 + $0x8] sm:$0xff]
    %v682 = vld [vmem:[%s12 + $0x10] sm:$0xff]
    %v683 = vld [vmem:[%s12 + $0x18] sm:$0xff]
    %v684 = vld [vmem:[%s12 + $0x20] sm:$0xff]
    %v685 = vld [vmem:[%s12 + $0x28] sm:$0xff]
    %v686 = vld [vmem:[%s12 + $0x30] sm:$0xff]
    %v687 = vld [vmem:[%s12 + $0x38] sm:$0xff]
    %v688 = vld [vmem:[%s12 + $0x40] sm:$0xff]
    %v689 = vld [vmem:[%s12 + $0x48] sm:$0xff]
    %v690 = vld [vmem:[%s12 + $0x50] sm:$0xff]
    %v691 = vld [vmem:[%s12 + $0x58] sm:$0xff]
    %v692 = vld [vmem:[%s12 + $0x60] sm:$0xff]
    %v693 = vld [vmem:[%s12 + $0x68] sm:$0xff]
    %v694 = vld [vmem:[%s12 + $0x70] sm:$0xff]
    %v695 = vld [vmem:[%s12 + $0x78] sm:$0xff]
    %v696 = vld [vmem:[%s12 + $0x80] sm:$0xff]
    %v697 = vld [vmem:[%s12 + $0x88] sm:$0xff]
    %v698 = vld [vmem:[%s12 + $0x90] sm:$0xff]
    %v699 = vld [vmem:[%s12 + $0x98] sm:$0xff]
    %v700 = vld [vmem:[%s12 + $0xa0] sm:$0xff]
    %v701 = vld [vmem:[%s12 + $0xa8] sm:$0xff]
    %v702 = vld [vmem:[%s12 + $0xb0] sm:$0xff]
    %v703 = vld [vmem:[%s12 + $0xb8] sm:$0xff]
    %v704 = vld [vmem:[%s12 + $0xc0] sm:$0xff]
    %v705 = vld [vmem:[%s12 + $0xc8] sm:$0xff]
    %v706 = vld [vmem:[%s12 + $0xd0] sm:$0xff]
    %v707 = vld [vmem:[%s12 + $0xd8] sm:$0xff]
    %v708 = vld [vmem:[%s12 + $0xe0] sm:$0xff]
    %v709 = vld [vmem:[%s12 + $0xe8] sm:$0xff]
    %v710 = vld [vmem:[%s12 + $0xf0] sm:$0xff]
    %v711 = vld [vmem:[%s12 + $0xf8] sm:$0xff]
    %v712 = vld [vmem:[%s13] sm:$0x3]
    %v714 = vlaneseq
    %v715 = vshrl.u32 %v714, 7
    %v716 = vsub.s32 0, %v715
    %v717 = vrot.slane %v712, %v716
    %v718 = vlaneseq
    %v719 = vshrl.u32 %v718, 7
    %v720 = vsub.s32 1, %v719
    %v721 = vrot.slane %v712, %v720
    %v756 = vunpack.c.l.b16 %v680
    %v757 = vunpack.c.h.b16 %v680
    %v758 = vunpack.c.l.b16 %v681
    %v759 = vunpack.c.h.b16 %v681
    %v760 = vunpack.c.l.b16 %v682
    %v761 = vunpack.c.h.b16 %v682
    %v762 = vunpack.c.l.b16 %v683
    %v763 = vunpack.c.h.b16 %v683
    %v764 = vunpack.c.l.b16 %v684
    %v765 = vunpack.c.h.b16 %v684
    %v766 = vunpack.c.l.b16 %v685
    %v767 = vunpack.c.h.b16 %v685
    %v768 = vunpack.c.l.b16 %v686
    %v769 = vunpack.c.h.b16 %v686
    %v770 = vunpack.c.l.b16 %v687
    %v771 = vunpack.c.h.b16 %v687
    %v772 = vunpack.c.l.b16 %v688
    %v773 = vunpack.c.h.b16 %v688
    %v774 = vunpack.c.l.b16 %v689
    %v775 = vunpack.c.h.b16 %v689
    %v776 = vunpack.c.l.b16 %v690
    %v777 = vunpack.c.h.b16 %v690
    %v778 = vunpack.c.l.b16 %v691
    %v779 = vunpack.c.h.b16 %v691
    %v780 = vunpack.c.l.b16 %v692
    %v781 = vunpack.c.h.b16 %v692
    %v782 = vunpack.c.l.b16 %v693
    %v783 = vunpack.c.h.b16 %v693
    %v784 = vunpack.c.l.b16 %v694
    %v785 = vunpack.c.h.b16 %v694
    %v786 = vunpack.c.l.b16 %v695
    %v787 = vunpack.c.h.b16 %v695
    %v788 = vunpack.c.l.b16 %v696
    %v789 = vunpack.c.h.b16 %v696
    %v790 = vunpack.c.l.b16 %v697
    %v791 = vunpack.c.h.b16 %v697
    %v792 = vunpack.c.l.b16 %v698
    %v793 = vunpack.c.h.b16 %v698
    %v794 = vunpack.c.l.b16 %v699
    %v795 = vunpack.c.h.b16 %v699
    %v796 = vunpack.c.l.b16 %v700
    %v797 = vunpack.c.h.b16 %v700
    %v798 = vunpack.c.l.b16 %v701
    %v799 = vunpack.c.h.b16 %v701
    %v800 = vunpack.c.l.b16 %v702
    %v801 = vunpack.c.h.b16 %v702
    %v802 = vunpack.c.l.b16 %v703
    %v803 = vunpack.c.h.b16 %v703
    %v804 = vunpack.c.l.b16 %v704
    %v805 = vunpack.c.h.b16 %v704
    %v806 = vunpack.c.l.b16 %v705
    %v807 = vunpack.c.h.b16 %v705
    %v808 = vunpack.c.l.b16 %v706
    %v809 = vunpack.c.h.b16 %v706
    %v810 = vunpack.c.l.b16 %v707
    %v811 = vunpack.c.h.b16 %v707
    %v812 = vunpack.c.l.b16 %v708
    %v813 = vunpack.c.h.b16 %v708
    %v814 = vunpack.c.l.b16 %v709
    %v815 = vunpack.c.h.b16 %v709
    %v816 = vunpack.c.l.b16 %v710
    %v817 = vunpack.c.h.b16 %v710
    %v818 = vunpack.c.l.b16 %v711
    %v819 = vunpack.c.h.b16 %v711
    %v820 = vpack.c.b16 %v758, %v756
    %v821 = vpack.c.b16 %v759, %v757
    %v822 = vpack.c.b16 %v762, %v760
    %v823 = vpack.c.b16 %v763, %v761
    %v824 = vpack.c.b16 %v766, %v764
    %v825 = vpack.c.b16 %v767, %v765
    %v826 = vpack.c.b16 %v770, %v768
    %v827 = vpack.c.b16 %v771, %v769
    %v828 = vpack.c.b16 %v774, %v772
    %v829 = vpack.c.b16 %v775, %v773
    %v830 = vpack.c.b16 %v778, %v776
    %v831 = vpack.c.b16 %v779, %v777
    %v832 = vpack.c.b16 %v782, %v780
    %v833 = vpack.c.b16 %v783, %v781
    %v834 = vpack.c.b16 %v786, %v784
    %v835 = vpack.c.b16 %v787, %v785
    %v836 = vpack.c.b16 %v790, %v788
    %v837 = vpack.c.b16 %v791, %v789
    %v838 = vpack.c.b16 %v794, %v792
    %v839 = vpack.c.b16 %v795, %v793
    %v840 = vpack.c.b16 %v798, %v796
    %v841 = vpack.c.b16 %v799, %v797
    %v842 = vpack.c.b16 %v802, %v800
    %v843 = vpack.c.b16 %v803, %v801
    %v844 = vpack.c.b16 %v806, %v804
    %v845 = vpack.c.b16 %v807, %v805
    %v846 = vpack.c.b16 %v810, %v808
    %v847 = vpack.c.b16 %v811, %v809
    %v848 = vpack.c.b16 %v814, %v812
    %v849 = vpack.c.b16 %v815, %v813
    %v850 = vpack.c.b16 %v818, %v816
    %v851 = vpack.c.b16 %v819, %v817
    %884 = vmatprep.subr.bf16.mxu0 %v835
    %885 = vmatpush1.bf16.msra.mxu0 %v834
    %886 = vmatprep.subr.bf16.mxu0 %v833
    %887 = vmatpush1.bf16.msra.mxu0 %v832
    %888 = vmatprep.subr.bf16.mxu0 %v831
    %889 = vmatpush1.bf16.msra.mxu0 %v830
    %890 = vmatprep.subr.bf16.mxu0 %v829
    %891 = vmatpush1.bf16.msra.mxu0 %v828
    %892 = vmatprep.subr.bf16.mxu0 %v827
    %893 = vmatpush1.bf16.msra.mxu0 %v826
    %894 = vmatprep.subr.bf16.mxu0 %v825
    %895 = vmatpush1.bf16.msra.mxu0 %v824
    %896 = vmatprep.subr.bf16.mxu0 %v823
    %897 = vmatpush1.bf16.msra.mxu0 %v822
    %898 = vmatprep.subr.bf16.mxu0 %v821
    %899 = vmatpush1.bf16.msra.mxu0 %v820
    %900 = vmatprep.subr.bf16.mxu0 %v851
    %901 = vmatpush2.bf16.msra.mxu0 %v850
    %902 = vmatprep.subr.bf16.mxu0 %v849
    %903 = vmatpush2.bf16.msra.mxu0 %v848
    %904 = vmatprep.subr.bf16.mxu0 %v847
    %905 = vmatpush2.bf16.msra.mxu0 %v846
    %906 = vmatprep.subr.bf16.mxu0 %v845
    %907 = vmatpush2.bf16.msra.mxu0 %v844
    %908 = vmatprep.subr.bf16.mxu0 %v843
    %909 = vmatpush2.bf16.msra.mxu0 %v842
    %910 = vmatprep.subr.bf16.mxu0 %v841
    %911 = vmatpush2.bf16.msra.mxu0 %v840
    %912 = vmatprep.subr.bf16.mxu0 %v839
    %913 = vmatpush2.bf16.msra.mxu0 %v838
    %914 = vmatprep.subr.bf16.mxu0 %v837
    %915 = vmatpush2.bf16.msra.mxu0 %v836
    %916 = vmatprep.mubr.bf16.mxu0 %v679
    %917 = vmatmul.mubr.bf16.gmra.mxu0 %v678
    %v918 = vpop.f32.mrf.mxu0
    %v919 = vadd.f32 %v717, %v918
    %v920 = vpop.f32.mrf.mxu0
    %v921 = vadd.f32 %v721, %v920
    %v922 = vpop.f32.mrf.mxu0
    %v923 = vadd.f32 %v717, %v922
    %v924 = vpop.f32.mrf.mxu0
    %v925 = vadd.f32 %v721, %v924
    %926 = vdwg.mxu0
    %v927 = vld [vmem:[%s14] sm:$0x3]
    %v928 = vld [vmem:[%s15] sm:$0x3]
    %v929 = vadd.f32 %v919, %v921
    %930 = vadd.xlane.f32.xlu0 %v929
    %v931 = vpop.xlane.xlu0 %930
    %v932 = vadd.f32 %v923, %v925
    %933 = vadd.xlane.f32.xlu0 %v932
    %v934 = vpop.xlane.xlu0 %933
    %v935 = vmul.f32 %v931, %v300
    %v936 = vmul.f32 %v934, %v300
    %v937 = vsub.f32 %v919, %v935
    %v938 = vsub.f32 %v921, %v935
    %v939 = vsub.f32 %v923, %v936
    %v940 = vsub.f32 %v925, %v936
    %v941 = vmul.f32 %v937, %v937
    %v942 = vmul.f32 %v938, %v938
    %v943 = vmul.f32 %v939, %v939
    %v944 = vmul.f32 %v940, %v940
    %v945 = vadd.f32 %v941, %v942
    %946 = vadd.xlane.f32.xlu0 %v945
    %v947 = vpop.xlane.xlu0 %946
    %v948 = vadd.f32 %v943, %v944
    %949 = vadd.xlane.f32.xlu0 %v948
    %v950 = vpop.xlane.xlu0 %949
    %v951 = vmul.f32 %v947, %v300
    %v952 = vmul.f32 %v950, %v300
    %v953 = vadd.f32 %v951, 1e-05
    %v954 = vadd.f32 %v952, 1e-05
    %v955 = vrsqrt.pop %v953
    %v956 = vrsqrt.pop %v954
    %v957 = vmul.f32 %v937, %v955
    %v958 = vmul.f32 %v938, %v955
    %v959 = vmul.f32 %v939, %v956
    %v960 = vmul.f32 %v940, %v956
    %v962 = vlaneseq
    %v963 = vshrl.u32 %v962, 7
    %v964 = vsub.s32 0, %v963
    %v965 = vrot.slane %v927, %v964
    %v966 = vlaneseq
    %v967 = vshrl.u32 %v966, 7
    %v968 = vsub.s32 1, %v967
    %v969 = vrot.slane %v927, %v968
    %v972 = vmul.f32 %v957, %v965
    %v973 = vmul.f32 %v958, %v969
    %v974 = vmul.f32 %v959, %v965
    %v975 = vmul.f32 %v960, %v969
    %v977 = vlaneseq
    %v978 = vshrl.u32 %v977, 7
    %v979 = vsub.s32 0, %v978
    %v980 = vrot.slane %v928, %v979
    %v981 = vlaneseq
    %v982 = vshrl.u32 %v981, 7
    %v983 = vsub.s32 1, %v982
    %v984 = vrot.slane %v928, %v983
    %v987 = vadd.f32 %v972, %v980
    %v988 = vadd.f32 %v973, %v984
    %v989 = vadd.f32 %v974, %v980
    %v990 = vadd.f32 %v975, %v984
    %v991 = vtanh.pop %v987
    %v992 = vtanh.pop %v988
    %v993 = vtanh.pop %v989
    %v994 = vtanh.pop %v990
    %v995 = vpack.c.bf16 %v993, %v991
    %v996 = vpack.c.bf16 %v994, %v992
    %v997 = vld [vmem:[%s16] sm:$0xff]
    %v998 = vld [vmem:[%s16 + $0x8] sm:$0xff]
    %v999 = vld [vmem:[%s16 + $0x10] sm:$0xff]
    %v1000 = vld [vmem:[%s16 + $0x18] sm:$0xff]
    %v1001 = vld [vmem:[%s16 + $0x20] sm:$0xff]
    %v1002 = vld [vmem:[%s16 + $0x28] sm:$0xff]
    %v1003 = vld [vmem:[%s16 + $0x30] sm:$0xff]
    %v1004 = vld [vmem:[%s16 + $0x38] sm:$0xff]
    %v1005 = vld [vmem:[%s16 + $0x40] sm:$0xff]
    %v1006 = vld [vmem:[%s16 + $0x48] sm:$0xff]
    %v1007 = vld [vmem:[%s16 + $0x50] sm:$0xff]
    %v1008 = vld [vmem:[%s16 + $0x58] sm:$0xff]
    %v1009 = vld [vmem:[%s16 + $0x60] sm:$0xff]
    %v1010 = vld [vmem:[%s16 + $0x68] sm:$0xff]
    %v1011 = vld [vmem:[%s16 + $0x70] sm:$0xff]
    %v1012 = vld [vmem:[%s16 + $0x78] sm:$0xff]
    %v1013 = vld [vmem:[%s16 + $0x80] sm:$0xff]
    %v1014 = vld [vmem:[%s16 + $0x88] sm:$0xff]
    %v1015 = vld [vmem:[%s16 + $0x90] sm:$0xff]
    %v1016 = vld [vmem:[%s16 + $0x98] sm:$0xff]
    %v1017 = vld [vmem:[%s16 + $0xa0] sm:$0xff]
    %v1018 = vld [vmem:[%s16 + $0xa8] sm:$0xff]
    %v1019 = vld [vmem:[%s16 + $0xb0] sm:$0xff]
    %v1020 = vld [vmem:[%s16 + $0xb8] sm:$0xff]
    %v1021 = vld [vmem:[%s16 + $0xc0] sm:$0xff]
    %v1022 = vld [vmem:[%s16 + $0xc8] sm:$0xff]
    %v1023 = vld [vmem:[%s16 + $0xd0] sm:$0xff]
    %v1024 = vld [vmem:[%s16 + $0xd8] sm:$0xff]
    %v1025 = vld [vmem:[%s16 + $0xe0] sm:$0xff]
    %v1026 = vld [vmem:[%s16 + $0xe8] sm:$0xff]
    %v1027 = vld [vmem:[%s16 + $0xf0] sm:$0xff]
    %v1028 = vld [vmem:[%s16 + $0xf8] sm:$0xff]
    %v1029 = vld [vmem:[%s17] sm:$0x3]
    %v1031 = vlaneseq
    %v1032 = vshrl.u32 %v1031, 7
    %v1033 = vsub.s32 0, %v1032
    %v1034 = vrot.slane %v1029, %v1033
    %v1035 = vlaneseq
    %v1036 = vshrl.u32 %v1035, 7
    %v1037 = vsub.s32 1, %v1036
    %v1038 = vrot.slane %v1029, %v1037
    %v1073 = vunpack.c.l.b16 %v997
    %v1074 = vunpack.c.h.b16 %v997
    %v1075 = vunpack.c.l.b16 %v998
    %v1076 = vunpack.c.h.b16 %v998
    %v1077 = vunpack.c.l.b16 %v999
    %v1078 = vunpack.c.h.b16 %v999
    %v1079 = vunpack.c.l.b16 %v1000
    %v1080 = vunpack.c.h.b16 %v1000
    %v1081 = vunpack.c.l.b16 %v1001
    %v1082 = vunpack.c.h.b16 %v1001
    %v1083 = vunpack.c.l.b16 %v1002
    %v1084 = vunpack.c.h.b16 %v1002
    %v1085 = vunpack.c.l.b16 %v1003
    %v1086 = vunpack.c.h.b16 %v1003
    %v1087 = vunpack.c.l.b16 %v1004
    %v1088 = vunpack.c.h.b16 %v1004
    %v1089 = vunpack.c.l.b16 %v1005
    %v1090 = vunpack.c.h.b16 %v1005
    %v1091 = vunpack.c.l.b16 %v1006
    %v1092 = vunpack.c.h.b16 %v1006
    %v1093 = vunpack.c.l.b16 %v1007
    %v1094 = vunpack.c.h.b16 %v1007
    %v1095 = vunpack.c.l.b16 %v1008
    %v1096 = vunpack.c.h.b16 %v1008
    %v1097 = vunpack.c.l.b16 %v1009
    %v1098 = vunpack.c.h.b16 %v1009
    %v1099 = vunpack.c.l.b16 %v1010
    %v1100 = vunpack.c.h.b16 %v1010
    %v1101 = vunpack.c.l.b16 %v1011
    %v1102 = vunpack.c.h.b16 %v1011
    %v1103 = vunpack.c.l.b16 %v1012
    %v1104 = vunpack.c.h.b16 %v1012
    %v1105 = vunpack.c.l.b16 %v1013
    %v1106 = vunpack.c.h.b16 %v1013
    %v1107 = vunpack.c.l.b16 %v1014
    %v1108 = vunpack.c.h.b16 %v1014
    %v1109 = vunpack.c.l.b16 %v1015
    %v1110 = vunpack.c.h.b16 %v1015
    %v1111 = vunpack.c.l.b16 %v1016
    %v1112 = vunpack.c.h.b16 %v1016
    %v1113 = vunpack.c.l.b16 %v1017
    %v1114 = vunpack.c.h.b16 %v1017
    %v1115 = vunpack.c.l.b16 %v1018
    %v1116 = vunpack.c.h.b16 %v1018
    %v1117 = vunpack.c.l.b16 %v1019
    %v1118 = vunpack.c.h.b16 %v1019
    %v1119 = vunpack.c.l.b16 %v1020
    %v1120 = vunpack.c.h.b16 %v1020
    %v1121 = vunpack.c.l.b16 %v1021
    %v1122 = vunpack.c.h.b16 %v1021
    %v1123 = vunpack.c.l.b16 %v1022
    %v1124 = vunpack.c.h.b16 %v1022
    %v1125 = vunpack.c.l.b16 %v1023
    %v1126 = vunpack.c.h.b16 %v1023
    %v1127 = vunpack.c.l.b16 %v1024
    %v1128 = vunpack.c.h.b16 %v1024
    %v1129 = vunpack.c.l.b16 %v1025
    %v1130 = vunpack.c.h.b16 %v1025
    %v1131 = vunpack.c.l.b16 %v1026
    %v1132 = vunpack.c.h.b16 %v1026
    %v1133 = vunpack.c.l.b16 %v1027
    %v1134 = vunpack.c.h.b16 %v1027
    %v1135 = vunpack.c.l.b16 %v1028
    %v1136 = vunpack.c.h.b16 %v1028
    %v1137 = vpack.c.b16 %v1075, %v1073
    %v1138 = vpack.c.b16 %v1076, %v1074
    %v1139 = vpack.c.b16 %v1079, %v1077
    %v1140 = vpack.c.b16 %v1080, %v1078
    %v1141 = vpack.c.b16 %v1083, %v1081
    %v1142 = vpack.c.b16 %v1084, %v1082
    %v1143 = vpack.c.b16 %v1087, %v1085
    %v1144 = vpack.c.b16 %v1088, %v1086
    %v1145 = vpack.c.b16 %v1091, %v1089
    %v1146 = vpack.c.b16 %v1092, %v1090
    %v1147 = vpack.c.b16 %v1095, %v1093
    %v1148 = vpack.c.b16 %v1096, %v1094
    %v1149 = vpack.c.b16 %v1099, %v1097
    %v1150 = vpack.c.b16 %v1100, %v1098
    %v1151 = vpack.c.b16 %v1103, %v1101
    %v1152 = vpack.c.b16 %v1104, %v1102
    %v1153 = vpack.c.b16 %v1107, %v1105
    %v1154 = vpack.c.b16 %v1108, %v1106
    %v1155 = vpack.c.b16 %v1111, %v1109
    %v1156 = vpack.c.b16 %v1112, %v1110
    %v1157 = vpack.c.b16 %v1115, %v1113
    %v1158 = vpack.c.b16 %v1116, %v1114
    %v1159 = vpack.c.b16 %v1119, %v1117
    %v1160 = vpack.c.b16 %v1120, %v1118
    %v1161 = vpack.c.b16 %v1123, %v1121
    %v1162 = vpack.c.b16 %v1124, %v1122
    %v1163 = vpack.c.b16 %v1127, %v1125
    %v1164 = vpack.c.b16 %v1128, %v1126
    %v1165 = vpack.c.b16 %v1131, %v1129
    %v1166 = vpack.c.b16 %v1132, %v1130
    %v1167 = vpack.c.b16 %v1135, %v1133
    %v1168 = vpack.c.b16 %v1136, %v1134
    %1201 = vmatprep.subr.bf16.mxu0 %v1152
    %1202 = vmatpush1.bf16.msra.mxu0 %v1151
    %1203 = vmatprep.subr.bf16.mxu0 %v1150
    %1204 = vmatpush1.bf16.msra.mxu0 %v1149
    %1205 = vmatprep.subr.bf16.mxu0 %v1148
    %1206 = vmatpush1.bf16.msra.mxu0 %v1147
    %1207 = vmatprep.subr.bf16.mxu0 %v1146
    %1208 = vmatpush1.bf16.msra.mxu0 %v1145
    %1209 = vmatprep.subr.bf16.mxu0 %v1144
    %1210 = vmatpush1.bf16.msra.mxu0 %v1143
    %1211 = vmatprep.subr.bf16.mxu0 %v1142
    %1212 = vmatpush1.bf16.msra.mxu0 %v1141
    %1213 = vmatprep.subr.bf16.mxu0 %v1140
    %1214 = vmatpush1.bf16.msra.mxu0 %v1139
    %1215 = vmatprep.subr.bf16.mxu0 %v1138
    %1216 = vmatpush1.bf16.msra.mxu0 %v1137
    %1217 = vmatprep.subr.bf16.mxu0 %v1168
    %1218 = vmatpush2.bf16.msra.mxu0 %v1167
    %1219 = vmatprep.subr.bf16.mxu0 %v1166
    %1220 = vmatpush2.bf16.msra.mxu0 %v1165
    %1221 = vmatprep.subr.bf16.mxu0 %v1164
    %1222 = vmatpush2.bf16.msra.mxu0 %v1163
    %1223 = vmatprep.subr.bf16.mxu0 %v1162
    %1224 = vmatpush2.bf16.msra.mxu0 %v1161
    %1225 = vmatprep.subr.bf16.mxu0 %v1160
    %1226 = vmatpush2.bf16.msra.mxu0 %v1159
    %1227 = vmatprep.subr.bf16.mxu0 %v1158
    %1228 = vmatpush2.bf16.msra.mxu0 %v1157
    %1229 = vmatprep.subr.bf16.mxu0 %v1156
    %1230 = vmatpush2.bf16.msra.mxu0 %v1155
    %1231 = vmatprep.subr.bf16.mxu0 %v1154
    %1232 = vmatpush2.bf16.msra.mxu0 %v1153
    %1233 = vmatprep.mubr.bf16.mxu0 %v996
    %1234 = vmatmul.mubr.bf16.gmra.mxu0 %v995
    %v1235 = vpop.f32.mrf.mxu0
    %v1236 = vadd.f32 %v1034, %v1235
    %v1237 = vpop.f32.mrf.mxu0
    %v1238 = vadd.f32 %v1038, %v1237
    %v1239 = vpop.f32.mrf.mxu0
    %v1240 = vadd.f32 %v1034, %v1239
    %v1241 = vpop.f32.mrf.mxu0
    %v1242 = vadd.f32 %v1038, %v1241
    %1243 = vdwg.mxu0
    %v1244 = vld [vmem:[%s18] sm:$0x3]
    %v1245 = vld [vmem:[%s19] sm:$0x3]
    %v1246 = vadd.f32 %v1236, %v1238
    %1247 = vadd.xlane.f32.xlu0 %v1246
    %v1248 = vpop.xlane.xlu0 %1247
    %v1249 = vadd.f32 %v1240, %v1242
    %1250 = vadd.xlane.f32.xlu0 %v1249
    %v1251 = vpop.xlane.xlu0 %1250
    %v1252 = vmul.f32 %v1248, %v300
    %v1253 = vmul.f32 %v1251, %v300
    %v1254 = vsub.f32 %v1236, %v1252
    %v1255 = vsub.f32 %v1238, %v1252
    %v1256 = vsub.f32 %v1240, %v1253
    %v1257 = vsub.f32 %v1242, %v1253
    %v1258 = vmul.f32 %v1254, %v1254
    %v1259 = vmul.f32 %v1255, %v1255
    %v1260 = vmul.f32 %v1256, %v1256
    %v1261 = vmul.f32 %v1257, %v1257
    %v1262 = vadd.f32 %v1258, %v1259
    %1263 = vadd.xlane.f32.xlu0 %v1262
    %v1264 = vpop.xlane.xlu0 %1263
    %v1265 = vadd.f32 %v1260, %v1261
    %1266 = vadd.xlane.f32.xlu0 %v1265
    %v1267 = vpop.xlane.xlu0 %1266
    %v1268 = vmul.f32 %v1264, %v300
    %v1269 = vmul.f32 %v1267, %v300
    %v1270 = vadd.f32 %v1268, 1e-05
    %v1271 = vadd.f32 %v1269, 1e-05
    %v1272 = vrsqrt.pop %v1270
    %v1273 = vrsqrt.pop %v1271
    %v1274 = vmul.f32 %v1254, %v1272
    %v1275 = vmul.f32 %v1255, %v1272
    %v1276 = vmul.f32 %v1256, %v1273
    %v1277 = vmul.f32 %v1257, %v1273
    %v1279 = vlaneseq
    %v1280 = vshrl.u32 %v1279, 7
    %v1281 = vsub.s32 0, %v1280
    %v1282 = vrot.slane %v1244, %v1281
    %v1283 = vlaneseq
    %v1284 = vshrl.u32 %v1283, 7
    %v1285 = vsub.s32 1, %v1284
    %v1286 = vrot.slane %v1244, %v1285
    %v1289 = vmul.f32 %v1274, %v1282
    %v1290 = vmul.f32 %v1275, %v1286
    %v1291 = vmul.f32 %v1276, %v1282
    %v1292 = vmul.f32 %v1277, %v1286
    %v1294 = vlaneseq
    %v1295 = vshrl.u32 %v1294, 7
    %v1296 = vsub.s32 0, %v1295
    %v1297 = vrot.slane %v1245, %v1296
    %v1298 = vlaneseq
    %v1299 = vshrl.u32 %v1298, 7
    %v1300 = vsub.s32 1, %v1299
    %v1301 = vrot.slane %v1245, %v1300
    %v1304 = vadd.f32 %v1289, %v1297
    %v1305 = vadd.f32 %v1290, %v1301
    %v1306 = vadd.f32 %v1291, %v1297
    %v1307 = vadd.f32 %v1292, %v1301
    %v1308 = vtanh.pop %v1304
    %v1309 = vtanh.pop %v1305
    %v1310 = vtanh.pop %v1306
    %v1311 = vtanh.pop %v1307
    %v1312 = vpack.c.bf16 %v1310, %v1308
    %v1313 = vpack.c.bf16 %v1311, %v1309
    %v1314 = vld [vmem:[%s20] sm:$0xf]
    %v1315 = vld [vmem:[%s20 + $0x4] sm:$0xf]
    %v1316 = vld [vmem:[%s20 + $0x8] sm:$0xf]
    %v1317 = vld [vmem:[%s20 + $0xc] sm:$0xf]
    %v1318 = vld [vmem:[%s20 + $0x10] sm:$0xf]
    %v1319 = vld [vmem:[%s20 + $0x14] sm:$0xf]
    %v1320 = vld [vmem:[%s20 + $0x18] sm:$0xf]
    %v1321 = vld [vmem:[%s20 + $0x1c] sm:$0xf]
    %v1322 = vld [vmem:[%s20 + $0x20] sm:$0xf]
    %v1323 = vld [vmem:[%s20 + $0x24] sm:$0xf]
    %v1324 = vld [vmem:[%s20 + $0x28] sm:$0xf]
    %v1325 = vld [vmem:[%s20 + $0x2c] sm:$0xf]
    %v1326 = vld [vmem:[%s20 + $0x30] sm:$0xf]
    %v1327 = vld [vmem:[%s20 + $0x34] sm:$0xf]
    %v1328 = vld [vmem:[%s20 + $0x38] sm:$0xf]
    %v1329 = vld [vmem:[%s20 + $0x3c] sm:$0xf]
    %v1330 = vld [vmem:[%s20 + $0x40] sm:$0xf]
    %v1331 = vld [vmem:[%s20 + $0x44] sm:$0xf]
    %v1332 = vld [vmem:[%s20 + $0x48] sm:$0xf]
    %v1333 = vld [vmem:[%s20 + $0x4c] sm:$0xf]
    %v1334 = vld [vmem:[%s20 + $0x50] sm:$0xf]
    %v1335 = vld [vmem:[%s20 + $0x54] sm:$0xf]
    %v1336 = vld [vmem:[%s20 + $0x58] sm:$0xf]
    %v1337 = vld [vmem:[%s20 + $0x5c] sm:$0xf]
    %v1338 = vld [vmem:[%s20 + $0x60] sm:$0xf]
    %v1339 = vld [vmem:[%s20 + $0x64] sm:$0xf]
    %v1340 = vld [vmem:[%s20 + $0x68] sm:$0xf]
    %v1341 = vld [vmem:[%s20 + $0x6c] sm:$0xf]
    %v1342 = vld [vmem:[%s20 + $0x70] sm:$0xf]
    %v1343 = vld [vmem:[%s20 + $0x74] sm:$0xf]
    %v1344 = vld [vmem:[%s20 + $0x78] sm:$0xf]
    %v1345 = vld [vmem:[%s20 + $0x7c] sm:$0xf]
    %v1346 = vld [vmem:[%s21] sm:$0x1]
    %v1348 = vlaneseq
    %v1349 = vshrl.u32 %v1348, 7
    %v1350 = vsub.s32 0, %v1349
    %v1351 = vrot.slane %v1346, %v1350
    %v1385 = vunpack.c.l.b16 %v1314
    %v1386 = vunpack.c.l.b16 %v1315
    %v1387 = vunpack.c.l.b16 %v1316
    %v1388 = vunpack.c.l.b16 %v1317
    %v1389 = vunpack.c.l.b16 %v1318
    %v1390 = vunpack.c.l.b16 %v1319
    %v1391 = vunpack.c.l.b16 %v1320
    %v1392 = vunpack.c.l.b16 %v1321
    %v1393 = vunpack.c.l.b16 %v1322
    %v1394 = vunpack.c.l.b16 %v1323
    %v1395 = vunpack.c.l.b16 %v1324
    %v1396 = vunpack.c.l.b16 %v1325
    %v1397 = vunpack.c.l.b16 %v1326
    %v1398 = vunpack.c.l.b16 %v1327
    %v1399 = vunpack.c.l.b16 %v1328
    %v1400 = vunpack.c.l.b16 %v1329
    %v1401 = vunpack.c.l.b16 %v1330
    %v1402 = vunpack.c.l.b16 %v1331
    %v1403 = vunpack.c.l.b16 %v1332
    %v1404 = vunpack.c.l.b16 %v1333
    %v1405 = vunpack.c.l.b16 %v1334
    %v1406 = vunpack.c.l.b16 %v1335
    %v1407 = vunpack.c.l.b16 %v1336
    %v1408 = vunpack.c.l.b16 %v1337
    %v1409 = vunpack.c.l.b16 %v1338
    %v1410 = vunpack.c.l.b16 %v1339
    %v1411 = vunpack.c.l.b16 %v1340
    %v1412 = vunpack.c.l.b16 %v1341
    %v1413 = vunpack.c.l.b16 %v1342
    %v1414 = vunpack.c.l.b16 %v1343
    %v1415 = vunpack.c.l.b16 %v1344
    %v1416 = vunpack.c.l.b16 %v1345
    %v1417 = vpack.c.b16 %v1386, %v1385
    %v1418 = vpack.c.b16 %v1388, %v1387
    %v1419 = vpack.c.b16 %v1390, %v1389
    %v1420 = vpack.c.b16 %v1392, %v1391
    %v1421 = vpack.c.b16 %v1394, %v1393
    %v1422 = vpack.c.b16 %v1396, %v1395
    %v1423 = vpack.c.b16 %v1398, %v1397
    %v1424 = vpack.c.b16 %v1400, %v1399
    %v1425 = vpack.c.b16 %v1402, %v1401
    %v1426 = vpack.c.b16 %v1404, %v1403
    %v1427 = vpack.c.b16 %v1406, %v1405
    %v1428 = vpack.c.b16 %v1408, %v1407
    %v1429 = vpack.c.b16 %v1410, %v1409
    %v1430 = vpack.c.b16 %v1412, %v1411
    %v1431 = vpack.c.b16 %v1414, %v1413
    %v1432 = vpack.c.b16 %v1416, %v1415
    %1449 = vmatprep.subr.bf16.mxu0 0
    %1450 = vmatpush1.bf16.msra.mxu0 %v1424
    %1451 = vmatprep.subr.bf16.mxu0 0
    %1452 = vmatpush1.bf16.msra.mxu0 %v1423
    %1453 = vmatprep.subr.bf16.mxu0 0
    %1454 = vmatpush1.bf16.msra.mxu0 %v1422
    %1455 = vmatprep.subr.bf16.mxu0 0
    %1456 = vmatpush1.bf16.msra.mxu0 %v1421
    %1457 = vmatprep.subr.bf16.mxu0 0
    %1458 = vmatpush1.bf16.msra.mxu0 %v1420
    %1459 = vmatprep.subr.bf16.mxu0 0
    %1460 = vmatpush1.bf16.msra.mxu0 %v1419
    %1461 = vmatprep.subr.bf16.mxu0 0
    %1462 = vmatpush1.bf16.msra.mxu0 %v1418
    %1463 = vmatprep.subr.bf16.mxu0 0
    %1464 = vmatpush1.bf16.msra.mxu0 %v1417
    %1465 = vmatprep.subr.bf16.mxu0 0
    %1466 = vmatpush2.bf16.msra.mxu0 %v1432
    %1467 = vmatprep.subr.bf16.mxu0 0
    %1468 = vmatpush2.bf16.msra.mxu0 %v1431
    %1469 = vmatprep.subr.bf16.mxu0 0
    %1470 = vmatpush2.bf16.msra.mxu0 %v1430
    %1471 = vmatprep.subr.bf16.mxu0 0
    %1472 = vmatpush2.bf16.msra.mxu0 %v1429
    %1473 = vmatprep.subr.bf16.mxu0 0
    %1474 = vmatpush2.bf16.msra.mxu0 %v1428
    %1475 = vmatprep.subr.bf16.mxu0 0
    %1476 = vmatpush2.bf16.msra.mxu0 %v1427
    %1477 = vmatprep.subr.bf16.mxu0 0
    %1478 = vmatpush2.bf16.msra.mxu0 %v1426
    %1479 = vmatprep.subr.bf16.mxu0 0
    %1480 = vmatpush2.bf16.msra.mxu0 %v1425
    %1481 = vmatprep.mubr.bf16.mxu0 %v1313
    %1482 = vmatmul.mubr.bf16.gmra.mxu0 %v1312
    %v1483 = vpop.f32.mrf.mxu0
    %v1484 = vadd.f32 %v1351, %v1483
    %v1485 = vpop.f32.mrf.mxu0
    %v1486 = vpop.f32.mrf.mxu0
    %v1487 = vadd.f32 %v1351, %v1486
    %v1488 = vpop.f32.mrf.mxu0
    %1489 = vdwg.mxu0
    %v1490 = vadd.f32 %v214, %v1484
    %v1491 = vadd.f32 %v217, %v1487
    %1492 = vst.msk [vmem:[#allocation3] sm:$0xff] %vm245, %v1490
    %1493 = vst.msk [vmem:[#allocation3 + $0x8] sm:$0xff] %vm245, %v1491
    // Predicated region
    $region90: #{transformer_forward.11} parent=1 // pred_check
      _
    $region91: #{transformer_forward.11} parent=1 // pred_check_branch
      %1495 = sbr.rel (0) target = $region93
    $region92: #{transformer_forward.11} parent=1 // pred_region
      %s1497 = ssub.s32 256, 256
      %1498 = vsyncadd [#allocation4], %s1497
      %s1499 = sshll.u32 [#allocation3], 4
      %s1500 = int_to_ptr.vmem [resolvable:$true] %s1499
      %1505 = dma.vmem_to_hbm [thread:$0]  %s1500, 256, %s22, [#allocation4], 128, 128, 8
    $region93: #{transformer_forward.11} parent=1 // pred_fallthru
      _
    // Predicated region
    $region94: #{transformer_forward.11} parent=1 // pred_check
      _
    $region95: #{transformer_forward.11} parent=1 // pred_check_branch
      %1507 = sbr.rel (0) target = $region97
    $region96: #{transformer_forward.11} parent=1 // pred_region
      %1508 = dma.done [#allocation4], 256
    $region97: #{transformer_forward.11} parent=1 // pred_fallthru
      _
    %1509 = vsyncpa [#allocation4], 1

</llo_original>
